<compile_context>
chip_gen: v7x
topology: tpu7x:2x2x1
jax: 0.10.0
libtpu: 0.0.40
codegen_flags: <defaults>
</compile_context>

<pallas_src>
import functools
import math

import jax
import jax.numpy as jnp
from jax.experimental import pallas as pl
from jax.experimental.pallas import tpu as pltpu


# ----------------------------- shared math helpers -----------------------------

def _layer_norm(x, w, b, eps=1e-5):
    mu = jnp.mean(x, axis=-1, keepdims=True)
    xc = x - mu
    var = jnp.mean(xc * xc, axis=-1, keepdims=True)
    return xc * jax.lax.rsqrt(var + eps) * w + b


def _softmax(x, axis):
    m = jnp.max(x, axis=axis, keepdims=True)
    e = jnp.exp(x - m)
    return e / jnp.sum(e, axis=axis, keepdims=True)


def _gelu(x):
    # tanh formulation (identical to lucidrains' GELU_ fallback; ~1e-3 of erf GELU).
    c = 0.7978845608028654  # sqrt(2/pi)
    return 0.5 * x * (1.0 + jnp.tanh(c * (x + 0.044715 * x * x * x)))


# --------------------------------- the kernel ----------------------------------

def _linear_transformer_kernel(
    x_ref,
    ln1_w_ref, ln1_b_ref,
    wq_ref, wk_ref, wv_ref, wo_ref, bo_ref,
    ln2_w_ref, ln2_b_ref,
    w1_ref, b1_ref, w2_ref, b2_ref,
    o_ref,
    x_sc,
    *, n_heads: int,
):
    layer = pl.program_id(1)
    depth = pl.num_programs(1)

    # Load the input sequence into the resident VMEM residual stream once per batch row.
    @pl.when(layer == 0)
    def _():
        x_sc[...] = x_ref[...].astype(jnp.float32)

    x = x_sc[...]                      # (S, D) running residual stream
    d = x.shape[-1]
    dh = d // n_heads
    scale = float(dh) ** -0.25

    # ----- attention block: x = x + Wo(linear_attn(LN1(x))) + bo -----
    h = _layer_norm(x, ln1_w_ref[...], ln1_b_ref[...])
    q = jnp.dot(h, wq_ref[...], preferred_element_type=jnp.float32)
    k = jnp.dot(h, wk_ref[...], preferred_element_type=jnp.float32)
    v = jnp.dot(h, wv_ref[...], preferred_element_type=jnp.float32)
    wo = wo_ref[...]

    attn_out = jnp.zeros_like(x)       # (S, D)
    for hi in range(n_heads):          # static unroll over heads
        sl = slice(hi * dh, (hi + 1) * dh)
        qh = _softmax(q[:, sl] * scale, axis=-1)   # softmax over feature dim
        kh = _softmax(k[:, sl] * scale, axis=0)    # softmax over sequence dim
        vh = v[:, sl]
        # ctx[d, e] = sum_s kh[s, d] * vh[s, e]   (k^T v, shape (dh, dh))
        ctx = jax.lax.dot_general(
            kh, vh, (((0,), (0,)), ((), ())),
            preferred_element_type=jnp.float32)
        ah = jnp.dot(qh, ctx, preferred_element_type=jnp.float32)   # (S, dh)
        # concat(heads) @ Wo == sum over heads of  head_out @ Wo[head_block, :]
        attn_out = attn_out + jnp.dot(ah, wo[sl, :],
                                      preferred_element_type=jnp.float32)
    x = x + attn_out + bo_ref[...]

    # ----- feedforward block: x = x + W2(gelu(W1(LN2(x)) + b1)) + b2 -----
    h2 = _layer_norm(x, ln2_w_ref[...], ln2_b_ref[...])
    f = jnp.dot(h2, w1_ref[...], preferred_element_type=jnp.float32) + b1_ref[...]
    f = _gelu(f)
    x = x + jnp.dot(f, w2_ref[...], preferred_element_type=jnp.float32) + b2_ref[...]

    x_sc[...] = x

    # Output block is revisited across the depth axis; write only at the last layer.
    @pl.when(layer == depth - 1)
    def _():
        o_ref[...] = x.astype(o_ref.dtype)


# --------------------------------- the wrapper ----------------------------------

def linear_transformer_forward(x: jax.Array, params: dict, n_heads: int) -> jax.Array:
    """x: (B, S, dim) -> (B, S, dim)."""
    B, S, D = x.shape
    depth = params["wq"].shape[0]
    Dff = params["w1"].shape[-1]
    dh = D // n_heads

    x_map = lambda b, l: (b, 0, 0)     # per-batch-row block, constant over layers
    w_map = lambda b, l: (l, 0, 0)     # per-layer weight block

    def wspec(r, c):
        return pl.BlockSpec((None, r, c), w_map)

    grid_spec = pltpu.PrefetchScalarGridSpec(
        num_scalar_prefetch=0,
        grid=(B, depth),
        in_specs=[
            pl.BlockSpec((None, S, D), x_map),   # x
            wspec(1, D), wspec(1, D),            # ln1 weight / bias
            wspec(D, D), wspec(D, D), wspec(D, D),  # Wq, Wk, Wv (no bias)
            wspec(D, D), wspec(1, D),            # Wo, bo
            wspec(1, D), wspec(1, D),            # ln2 weight / bias
            wspec(D, Dff), wspec(1, Dff),        # W1, b1
            wspec(Dff, D), wspec(1, D),          # W2, b2
        ],
        out_specs=pl.BlockSpec((None, S, D), x_map),
        scratch_shapes=[pltpu.VMEM((S, D), jnp.float32)],
    )

    param_bytes = sum(int(v.size) * v.dtype.itemsize for v in params.values())
    cost = pl.CostEstimate(
        flops=int(B * depth * (8 * S * D * D + 4 * S * D * Dff + 4 * S * dh * D)),
        transcendentals=int(B * depth * S * (2 * D + Dff)),
        bytes_accessed=int(2 * x.size * x.dtype.itemsize + B * param_bytes),
    )

    kernel = functools.partial(_linear_transformer_kernel, n_heads=n_heads)

    return pl.pallas_call(
        kernel,
        out_shape=jax.ShapeDtypeStruct((B, S, D), x.dtype),
        grid_spec=grid_spec,
        compiler_params=pltpu.CompilerParams(
            dimension_semantics=("parallel", "arbitrary"),
        ),
        cost_estimate=cost,
    )(
        x,
        params["ln1_w"], params["ln1_b"],
        params["wq"], params["wk"], params["wv"], params["wo"], params["bo"],
        params["ln2_w"], params["ln2_b"],
        params["w1"], params["b1"], params["w2"], params["b2"],
    )


class LinearTransformer:
    """JAX/Pallas port of gfn.utils.modules.LinearTransformer (non-causal)."""

    def __init__(self, dim: int, depth: int, max_seq_len: int, n_heads: int = 8,
                 causal: bool = False, *, key=None):
        assert isinstance(dim, int) and dim > 0, "dim must be a positive integer"
        assert isinstance(depth, int) and depth > 0, "depth must be a positive integer"
        assert isinstance(max_seq_len, int) and max_seq_len > 0
        assert dim % n_heads == 0, "dim must be divisible by n_heads (dim_head=None)"
        if causal:
            # TODO(synk): causal bucketed linear attention (causal_linear_attn) not implemented.
            raise NotImplementedError("causal=True is not supported in this port")

        self.dim = dim
        self.depth = depth
        self.max_seq_len = max_seq_len
        self.n_heads = n_heads
        self.output_dim = dim

        if key is None:
            key = jax.random.PRNGKey(0)
        dff = 4 * dim
        ks = jax.random.split(key, 9)

        def uinit(k, shape, fan_in):
            bound = 1.0 / math.sqrt(fan_in)
            return jax.random.uniform(k, shape, jnp.float32, -bound, bound)

        # Weights stored as (in, out) so the kernel computes x @ W; stacked over depth.
        self.params = {
            "ln1_w": jnp.ones((depth, 1, dim), jnp.float32),
            "ln1_b": jnp.zeros((depth, 1, dim), jnp.float32),
            "wq": uinit(ks[0], (depth, dim, dim), dim),
            "wk": uinit(ks[1], (depth, dim, dim), dim),
            "wv": uinit(ks[2], (depth, dim, dim), dim),
            "wo": uinit(ks[3], (depth, dim, dim), dim),
            "bo": uinit(ks[4], (depth, 1, dim), dim),
            "ln2_w": jnp.ones((depth, 1, dim), jnp.float32),
            "ln2_b": jnp.zeros((depth, 1, dim), jnp.float32),
            "w1": uinit(ks[5], (depth, dim, dff), dim),
            "b1": uinit(ks[6], (depth, 1, dff), dim),
            "w2": uinit(ks[7], (depth, dff, dim), dff),
            "b2": uinit(ks[8], (depth, 1, dim), dff),
        }

    def __call__(self, x: jax.Array) -> jax.Array:
        assert x.ndim == 3 and x.shape[-1] == self.dim, "expected (batch, seq, dim)"
        assert x.shape[1] <= self.max_seq_len
        return linear_transformer_forward(x, self.params, self.n_heads)


# ------------------------------ pure-JAX reference ------------------------------

def _reference_forward(x, params, n_heads):
    depth = params["wq"].shape[0]
    B, S, D = x.shape
    dh = D // n_heads
    h_out = x.astype(jnp.float32)
    for l in range(depth):
        ln = _layer_norm(h_out, params["ln1_w"][l], params["ln1_b"][l])
        q = ln @ params["wq"][l]
        k = ln @ params["wk"][l]
        v = ln @ params["wv"][l]
        split = lambda t: t.reshape(B, S, n_heads, dh).transpose(0, 2, 1, 3)
        q, k, v = map(split, (q, k, v))
        scale = dh ** -0.25
        q = _softmax(q * scale, axis=-1)
        k = _softmax(k * scale, axis=-2)
        ctx = jnp.einsum("bhnd,bhne->bhde", k, v)
        att = jnp.einsum("bhnd,bhde->bhne", q, ctx)
        att = att.transpose(0, 2, 1, 3).reshape(B, S, D)
        h_out = h_out + att @ params["wo"][l] + params["bo"][l]
        ln2 = _layer_norm(h_out, params["ln2_w"][l], params["ln2_b"][l])
        f = _gelu(ln2 @ params["w1"][l] + params["b1"][l])
        h_out = h_out + f @ params["w2"][l] + params["b2"][l]
    return h_out.astype(x.dtype)


# ------------------------------------ main ---------------------------------------

if __name__ == "__main__":
    key = jax.random.PRNGKey(0)
    k_x, k_params = jax.random.split(key)

    B, S, D, H, DEPTH = 2, 8, 64, 8, 2
    x = jax.random.normal(k_x, (B, S, D), dtype=jnp.float32)

    model = LinearTransformer(dim=D, depth=DEPTH, max_seq_len=S, n_heads=H, key=k_params)

    out = model(x)
    out = jax.block_until_ready(out)

    assert out.shape == (B, S, D), out.shape
    assert out.dtype == jnp.float32, out.dtype
    assert bool(jnp.all(jnp.isfinite(out)))

    with jax.default_matmul_precision("highest"):
        ref = _reference_forward(x, model.params, H)
    max_err = float(jnp.max(jnp.abs(out - ref)))
    assert max_err < 1e-3, f"mismatch vs reference: {max_err}"

    print("KERNEL_OK")
</pallas_src>

<mosaic_0001>
module attributes {stable_mosaic.version = 11 : i64} {
  func.func @_linear_transformer_kernel(%arg0: i32, %arg1: i32, %arg2: memref<1x8x64xf32, #tpu.memory_space<vmem>>, %arg3: memref<1x1x64xf32, #tpu.memory_space<vmem>>, %arg4: memref<1x1x64xf32, #tpu.memory_space<vmem>>, %arg5: memref<1x64x64xf32, #tpu.memory_space<vmem>>, %arg6: memref<1x64x64xf32, #tpu.memory_space<vmem>>, %arg7: memref<1x64x64xf32, #tpu.memory_space<vmem>>, %arg8: memref<1x64x64xf32, #tpu.memory_space<vmem>>, %arg9: memref<1x1x64xf32, #tpu.memory_space<vmem>>, %arg10: memref<1x1x64xf32, #tpu.memory_space<vmem>>, %arg11: memref<1x1x64xf32, #tpu.memory_space<vmem>>, %arg12: memref<1x64x256xf32, #tpu.memory_space<vmem>>, %arg13: memref<1x1x256xf32, #tpu.memory_space<vmem>>, %arg14: memref<1x256x64xf32, #tpu.memory_space<vmem>>, %arg15: memref<1x1x64xf32, #tpu.memory_space<vmem>>, %arg16: memref<1x8x64xf32, #tpu.memory_space<vmem>>, %arg17: memref<8x64xf32, #tpu.memory_space<vmem>>) attributes {dimension_semantics = [#tpu.dimension_semantics<parallel>, #tpu.dimension_semantics<arbitrary>], iteration_bounds = array<i64: 2, 2>, scalar_prefetch = 0 : i64, scratch_operands = 1 : i64, tpu.core_type = #tpu.core_type<tc>, window_params = [{transform_indices = @transform_0, window_bounds = array<i64: 1, 8, 64>}, {transform_indices = @transform_1, window_bounds = array<i64: 1, 1, 64>}, {transform_indices = @transform_2, window_bounds = array<i64: 1, 1, 64>}, {transform_indices = @transform_3, window_bounds = array<i64: 1, 64, 64>}, {transform_indices = @transform_4, window_bounds = array<i64: 1, 64, 64>}, {transform_indices = @transform_5, window_bounds = array<i64: 1, 64, 64>}, {transform_indices = @transform_6, window_bounds = array<i64: 1, 64, 64>}, {transform_indices = @transform_7, window_bounds = array<i64: 1, 1, 64>}, {transform_indices = @transform_8, window_bounds = array<i64: 1, 1, 64>}, {transform_indices = @transform_9, window_bounds = array<i64: 1, 1, 64>}, {transform_indices = @transform_10, window_bounds = array<i64: 1, 64, 256>}, {transform_indices = @transform_11, window_bounds = array<i64: 1, 1, 256>}, {transform_indices = @transform_12, window_bounds = array<i64: 1, 256, 64>}, {transform_indices = @transform_13, window_bounds = array<i64: 1, 1, 64>}, {transform_indices = @transform_14, window_bounds = array<i64: 1, 8, 64>}]} {
    %c0_i32 = arith.constant 0 : i32
    %0 = arith.cmpi eq, %arg1, %c0_i32 : i32
    %1 = arith.extui %0 : i1 to i32
    %c0_i32_0 = arith.constant 0 : i32
    %2 = arith.cmpi ne, %1, %c0_i32_0 : i32
    scf.if %2 {
      %c0_135 = arith.constant 0 : index
      %c0_136 = arith.constant 0 : index
      %c0_137 = arith.constant 0 : index
      %341 = vector.load %arg2[%c0_135, %c0_136, %c0_137] : memref<1x8x64xf32, #tpu.memory_space<vmem>>, vector<1x8x64xf32>
      %342 = vector.shape_cast %341 : vector<1x8x64xf32> to vector<8x64xf32>
      %c0_138 = arith.constant 0 : index
      %c0_139 = arith.constant 0 : index
      %343 = vector.load %arg17[%c0_138, %c0_139] : memref<8x64xf32, #tpu.memory_space<vmem>>, vector<8x64xf32>
      tpu.vector_store %arg17[%c0_138, %c0_139], %342 {strides = array<i32>} : memref<8x64xf32, #tpu.memory_space<vmem>>, vector<8x64xf32>,
    } else {
    }
    %c0 = arith.constant 0 : index
    %c0_1 = arith.constant 0 : index
    %3 = vector.load %arg17[%c0, %c0_1] : memref<8x64xf32, #tpu.memory_space<vmem>>, vector<8x64xf32>
    %c0_2 = arith.constant 0 : index
    %c0_3 = arith.constant 0 : index
    %c0_4 = arith.constant 0 : index
    %4 = vector.load %arg3[%c0_2, %c0_3, %c0_4] : memref<1x1x64xf32, #tpu.memory_space<vmem>>, vector<1x1x64xf32>
    %5 = vector.shape_cast %4 : vector<1x1x64xf32> to vector<1x64xf32>
    %c0_5 = arith.constant 0 : index
    %c0_6 = arith.constant 0 : index
    %c0_7 = arith.constant 0 : index
    %6 = vector.load %arg4[%c0_5, %c0_6, %c0_7] : memref<1x1x64xf32, #tpu.memory_space<vmem>>, vector<1x1x64xf32>
    %7 = vector.shape_cast %6 : vector<1x1x64xf32> to vector<1x64xf32>
    %cst = arith.constant dense<0.000000e+00> : vector<8xf32>
    %8 = vector.multi_reduction <add>, %3, %cst [1] : vector<8x64xf32> to vector<8xf32>
    %9 = vector.shape_cast %8 : vector<8xf32> to vector<8x1xf32>
    %cst_8 = arith.constant 6.400000e+01 : f32
    %10 = vector.broadcast %cst_8 : f32 to vector<8x1xf32>
    %11 = arith.divf %9, %10 : vector<8x1xf32>
    %12 = vector.broadcast %11 : vector<8x1xf32> to vector<8x64xf32>
    %13 = arith.subf %3, %12 : vector<8x64xf32>
    %14 = arith.mulf %13, %13 : vector<8x64xf32>
    %cst_9 = arith.constant dense<0.000000e+00> : vector<8xf32>
    %15 = vector.multi_reduction <add>, %14, %cst_9 [1] : vector<8x64xf32> to vector<8xf32>
    %16 = vector.shape_cast %15 : vector<8xf32> to vector<8x1xf32>
    %cst_10 = arith.constant 6.400000e+01 : f32
    %17 = vector.broadcast %cst_10 : f32 to vector<8x1xf32>
    %18 = arith.divf %16, %17 : vector<8x1xf32>
    %cst_11 = arith.constant 9.99999974E-6 : f32
    %19 = vector.broadcast %cst_11 : f32 to vector<8x1xf32>
    %20 = arith.addf %18, %19 : vector<8x1xf32>
    %21 = math.rsqrt %20 : vector<8x1xf32>
    %22 = vector.broadcast %21 : vector<8x1xf32> to vector<8x64xf32>
    %23 = arith.mulf %13, %22 : vector<8x64xf32>
    %24 = vector.broadcast %5 : vector<1x64xf32> to vector<8x64xf32>
    %25 = arith.mulf %23, %24 : vector<8x64xf32>
    %26 = vector.broadcast %7 : vector<1x64xf32> to vector<8x64xf32>
    %27 = arith.addf %25, %26 : vector<8x64xf32>
    %c0_12 = arith.constant 0 : index
    %c0_13 = arith.constant 0 : index
    %c0_14 = arith.constant 0 : index
    %28 = vector.load %arg5[%c0_12, %c0_13, %c0_14] : memref<1x64x64xf32, #tpu.memory_space<vmem>>, vector<1x64x64xf32>
    %29 = vector.shape_cast %28 : vector<1x64x64xf32> to vector<64x64xf32>
    %cst_15 = arith.constant dense<0.000000e+00> : vector<8x64xf32>
    %30 = tpu.matmul %27, %29, %cst_15 {dimension_numbers = #tpu.dot_dimension_numbers<[1], [0], [0], [1], [0, 0, 1, 1], [], []>} : vector<8x64xf32>, vector<64x64xf32>, vector<8x64xf32> -> vector<8x64xf32>
    %c0_16 = arith.constant 0 : index
    %c0_17 = arith.constant 0 : index
    %c0_18 = arith.constant 0 : index
    %31 = vector.load %arg6[%c0_16, %c0_17, %c0_18] : memref<1x64x64xf32, #tpu.memory_space<vmem>>, vector<1x64x64xf32>
    %32 = vector.shape_cast %31 : vector<1x64x64xf32> to vector<64x64xf32>
    %cst_19 = arith.constant dense<0.000000e+00> : vector<8x64xf32>
    %33 = tpu.matmul %27, %32, %cst_19 {dimension_numbers = #tpu.dot_dimension_numbers<[1], [0], [0], [1], [0, 0, 1, 1], [], []>} : vector<8x64xf32>, vector<64x64xf32>, vector<8x64xf32> -> vector<8x64xf32>
    %c0_20 = arith.constant 0 : index
    %c0_21 = arith.constant 0 : index
    %c0_22 = arith.constant 0 : index
    %34 = vector.load %arg7[%c0_20, %c0_21, %c0_22] : memref<1x64x64xf32, #tpu.memory_space<vmem>>, vector<1x64x64xf32>
    %35 = vector.shape_cast %34 : vector<1x64x64xf32> to vector<64x64xf32>
    %cst_23 = arith.constant dense<0.000000e+00> : vector<8x64xf32>
    %36 = tpu.matmul %27, %35, %cst_23 {dimension_numbers = #tpu.dot_dimension_numbers<[1], [0], [0], [1], [0, 0, 1, 1], [], []>} : vector<8x64xf32>, vector<64x64xf32>, vector<8x64xf32> -> vector<8x64xf32>
    %c0_24 = arith.constant 0 : index
    %c0_25 = arith.constant 0 : index
    %c0_26 = arith.constant 0 : index
    %37 = vector.load %arg8[%c0_24, %c0_25, %c0_26] : memref<1x64x64xf32, #tpu.memory_space<vmem>>, vector<1x64x64xf32>
    %38 = vector.shape_cast %37 : vector<1x64x64xf32> to vector<64x64xf32>
    %cst_27 = arith.constant 0.000000e+00 : f32
    %39 = vector.broadcast %cst_27 : f32 to vector<8x64xf32>
    %40 = vector.extract_strided_slice %30 {offsets = [0, 0], sizes = [8, 8], strides = [1, 1]} : vector<8x64xf32> to vector<8x8xf32>
    %cst_28 = arith.constant 0.594603539 : f32
    %41 = vector.broadcast %cst_28 : f32 to vector<8x8xf32>
    %42 = arith.mulf %40, %41 : vector<8x8xf32>
    %cst_29 = arith.constant dense<0xFF800000> : vector<8xf32>
    %43 = vector.multi_reduction <maximumf>, %42, %cst_29 [1] : vector<8x8xf32> to vector<8xf32>
    %44 = vector.shape_cast %43 : vector<8xf32> to vector<8x1xf32>
    %45 = vector.broadcast %44 : vector<8x1xf32> to vector<8x8xf32>
    %46 = arith.subf %42, %45 : vector<8x8xf32>
    %47 = math.exp %46 : vector<8x8xf32>
    %cst_30 = arith.constant dense<0.000000e+00> : vector<8xf32>
    %48 = vector.multi_reduction <add>, %47, %cst_30 [1] : vector<8x8xf32> to vector<8xf32>
    %49 = vector.shape_cast %48 : vector<8xf32> to vector<8x1xf32>
    %50 = vector.broadcast %49 : vector<8x1xf32> to vector<8x8xf32>
    %51 = arith.divf %47, %50 : vector<8x8xf32>
    %52 = vector.extract_strided_slice %33 {offsets = [0, 0], sizes = [8, 8], strides = [1, 1]} : vector<8x64xf32> to vector<8x8xf32>
    %cst_31 = arith.constant 0.594603539 : f32
    %53 = vector.broadcast %cst_31 : f32 to vector<8x8xf32>
    %54 = arith.mulf %52, %53 : vector<8x8xf32>
    %cst_32 = arith.constant dense<0xFF800000> : vector<8xf32>
    %55 = vector.multi_reduction <maximumf>, %54, %cst_32 [0] : vector<8x8xf32> to vector<8xf32>
    %56 = vector.shape_cast %55 : vector<8xf32> to vector<1x8xf32>
    %57 = vector.broadcast %56 : vector<1x8xf32> to vector<8x8xf32>
    %58 = arith.subf %54, %57 : vector<8x8xf32>
    %59 = math.exp %58 : vector<8x8xf32>
    %cst_33 = arith.constant dense<0.000000e+00> : vector<8xf32>
    %60 = vector.multi_reduction <add>, %59, %cst_33 [0] : vector<8x8xf32> to vector<8xf32>
    %61 = vector.shape_cast %60 : vector<8xf32> to vector<1x8xf32>
    %62 = vector.broadcast %61 : vector<1x8xf32> to vector<8x8xf32>
    %63 = arith.divf %59, %62 : vector<8x8xf32>
    %64 = vector.extract_strided_slice %36 {offsets = [0, 0], sizes = [8, 8], strides = [1, 1]} : vector<8x64xf32> to vector<8x8xf32>
    %cst_34 = arith.constant dense<0.000000e+00> : vector<8x8xf32>
    %65 = tpu.matmul %63, %64, %cst_34 {dimension_numbers = #tpu.dot_dimension_numbers<[0], [0], [1], [1], [0, 1, 1, 1], [], []>} : vector<8x8xf32>, vector<8x8xf32>, vector<8x8xf32> -> vector<8x8xf32>
    %cst_35 = arith.constant dense<0.000000e+00> : vector<8x8xf32>
    %66 = tpu.matmul %51, %65, %cst_35 {dimension_numbers = #tpu.dot_dimension_numbers<[1], [0], [0], [1], [0, 0, 1, 1], [], []>} : vector<8x8xf32>, vector<8x8xf32>, vector<8x8xf32> -> vector<8x8xf32>
    %67 = vector.extract_strided_slice %38 {offsets = [0, 0], sizes = [8, 64], strides = [1, 1]} : vector<64x64xf32> to vector<8x64xf32>
    %cst_36 = arith.constant dense<0.000000e+00> : vector<8x64xf32>
    %68 = tpu.matmul %66, %67, %cst_36 {dimension_numbers = #tpu.dot_dimension_numbers<[1], [0], [0], [1], [0, 0, 1, 1], [], []>} : vector<8x8xf32>, vector<8x64xf32>, vector<8x64xf32> -> vector<8x64xf32>
    %69 = arith.addf %39, %68 : vector<8x64xf32>
    %70 = vector.extract_strided_slice %30 {offsets = [0, 8], sizes = [8, 8], strides = [1, 1]} : vector<8x64xf32> to vector<8x8xf32>
    %cst_37 = arith.constant 0.594603539 : f32
    %71 = vector.broadcast %cst_37 : f32 to vector<8x8xf32>
    %72 = arith.mulf %70, %71 : vector<8x8xf32>
    %cst_38 = arith.constant dense<0xFF800000> : vector<8xf32>
    %73 = vector.multi_reduction <maximumf>, %72, %cst_38 [1] : vector<8x8xf32> to vector<8xf32>
    %74 = vector.shape_cast %73 : vector<8xf32> to vector<8x1xf32>
    %75 = vector.broadcast %74 : vector<8x1xf32> to vector<8x8xf32>
    %76 = arith.subf %72, %75 : vector<8x8xf32>
    %77 = math.exp %76 : vector<8x8xf32>
    %cst_39 = arith.constant dense<0.000000e+00> : vector<8xf32>
    %78 = vector.multi_reduction <add>, %77, %cst_39 [1] : vector<8x8xf32> to vector<8xf32>
    %79 = vector.shape_cast %78 : vector<8xf32> to vector<8x1xf32>
    %80 = vector.broadcast %79 : vector<8x1xf32> to vector<8x8xf32>
    %81 = arith.divf %77, %80 : vector<8x8xf32>
    %82 = vector.extract_strided_slice %33 {offsets = [0, 8], sizes = [8, 8], strides = [1, 1]} : vector<8x64xf32> to vector<8x8xf32>
    %cst_40 = arith.constant 0.594603539 : f32
    %83 = vector.broadcast %cst_40 : f32 to vector<8x8xf32>
    %84 = arith.mulf %82, %83 : vector<8x8xf32>
    %cst_41 = arith.constant dense<0xFF800000> : vector<8xf32>
    %85 = vector.multi_reduction <maximumf>, %84, %cst_41 [0] : vector<8x8xf32> to vector<8xf32>
    %86 = vector.shape_cast %85 : vector<8xf32> to vector<1x8xf32>
    %87 = vector.broadcast %86 : vector<1x8xf32> to vector<8x8xf32>
    %88 = arith.subf %84, %87 : vector<8x8xf32>
    %89 = math.exp %88 : vector<8x8xf32>
    %cst_42 = arith.constant dense<0.000000e+00> : vector<8xf32>
    %90 = vector.multi_reduction <add>, %89, %cst_42 [0] : vector<8x8xf32> to vector<8xf32>
    %91 = vector.shape_cast %90 : vector<8xf32> to vector<1x8xf32>
    %92 = vector.broadcast %91 : vector<1x8xf32> to vector<8x8xf32>
    %93 = arith.divf %89, %92 : vector<8x8xf32>
    %94 = vector.extract_strided_slice %36 {offsets = [0, 8], sizes = [8, 8], strides = [1, 1]} : vector<8x64xf32> to vector<8x8xf32>
    %cst_43 = arith.constant dense<0.000000e+00> : vector<8x8xf32>
    %95 = tpu.matmul %93, %94, %cst_43 {dimension_numbers = #tpu.dot_dimension_numbers<[0], [0], [1], [1], [0, 1, 1, 1], [], []>} : vector<8x8xf32>, vector<8x8xf32>, vector<8x8xf32> -> vector<8x8xf32>
    %cst_44 = arith.constant dense<0.000000e+00> : vector<8x8xf32>
    %96 = tpu.matmul %81, %95, %cst_44 {dimension_numbers = #tpu.dot_dimension_numbers<[1], [0], [0], [1], [0, 0, 1, 1], [], []>} : vector<8x8xf32>, vector<8x8xf32>, vector<8x8xf32> -> vector<8x8xf32>
    %97 = vector.extract_strided_slice %38 {offsets = [8, 0], sizes = [8, 64], strides = [1, 1]} : vector<64x64xf32> to vector<8x64xf32>
    %cst_45 = arith.constant dense<0.000000e+00> : vector<8x64xf32>
    %98 = tpu.matmul %96, %97, %cst_45 {dimension_numbers = #tpu.dot_dimension_numbers<[1], [0], [0], [1], [0, 0, 1, 1], [], []>} : vector<8x8xf32>, vector<8x64xf32>, vector<8x64xf32> -> vector<8x64xf32>
    %99 = arith.addf %69, %98 : vector<8x64xf32>
    %100 = vector.extract_strided_slice %30 {offsets = [0, 16], sizes = [8, 8], strides = [1, 1]} : vector<8x64xf32> to vector<8x8xf32>
    %cst_46 = arith.constant 0.594603539 : f32
    %101 = vector.broadcast %cst_46 : f32 to vector<8x8xf32>
    %102 = arith.mulf %100, %101 : vector<8x8xf32>
    %cst_47 = arith.constant dense<0xFF800000> : vector<8xf32>
    %103 = vector.multi_reduction <maximumf>, %102, %cst_47 [1] : vector<8x8xf32> to vector<8xf32>
    %104 = vector.shape_cast %103 : vector<8xf32> to vector<8x1xf32>
    %105 = vector.broadcast %104 : vector<8x1xf32> to vector<8x8xf32>
    %106 = arith.subf %102, %105 : vector<8x8xf32>
    %107 = math.exp %106 : vector<8x8xf32>
    %cst_48 = arith.constant dense<0.000000e+00> : vector<8xf32>
    %108 = vector.multi_reduction <add>, %107, %cst_48 [1] : vector<8x8xf32> to vector<8xf32>
    %109 = vector.shape_cast %108 : vector<8xf32> to vector<8x1xf32>
    %110 = vector.broadcast %109 : vector<8x1xf32> to vector<8x8xf32>
    %111 = arith.divf %107, %110 : vector<8x8xf32>
    %112 = vector.extract_strided_slice %33 {offsets = [0, 16], sizes = [8, 8], strides = [1, 1]} : vector<8x64xf32> to vector<8x8xf32>
    %cst_49 = arith.constant 0.594603539 : f32
    %113 = vector.broadcast %cst_49 : f32 to vector<8x8xf32>
    %114 = arith.mulf %112, %113 : vector<8x8xf32>
    %cst_50 = arith.constant dense<0xFF800000> : vector<8xf32>
    %115 = vector.multi_reduction <maximumf>, %114, %cst_50 [0] : vector<8x8xf32> to vector<8xf32>
    %116 = vector.shape_cast %115 : vector<8xf32> to vector<1x8xf32>
    %117 = vector.broadcast %116 : vector<1x8xf32> to vector<8x8xf32>
    %118 = arith.subf %114, %117 : vector<8x8xf32>
    %119 = math.exp %118 : vector<8x8xf32>
    %cst_51 = arith.constant dense<0.000000e+00> : vector<8xf32>
    %120 = vector.multi_reduction <add>, %119, %cst_51 [0] : vector<8x8xf32> to vector<8xf32>
    %121 = vector.shape_cast %120 : vector<8xf32> to vector<1x8xf32>
    %122 = vector.broadcast %121 : vector<1x8xf32> to vector<8x8xf32>
    %123 = arith.divf %119, %122 : vector<8x8xf32>
    %124 = vector.extract_strided_slice %36 {offsets = [0, 16], sizes = [8, 8], strides = [1, 1]} : vector<8x64xf32> to vector<8x8xf32>
    %cst_52 = arith.constant dense<0.000000e+00> : vector<8x8xf32>
    %125 = tpu.matmul %123, %124, %cst_52 {dimension_numbers = #tpu.dot_dimension_numbers<[0], [0], [1], [1], [0, 1, 1, 1], [], []>} : vector<8x8xf32>, vector<8x8xf32>, vector<8x8xf32> -> vector<8x8xf32>
    %cst_53 = arith.constant dense<0.000000e+00> : vector<8x8xf32>
    %126 = tpu.matmul %111, %125, %cst_53 {dimension_numbers = #tpu.dot_dimension_numbers<[1], [0], [0], [1], [0, 0, 1, 1], [], []>} : vector<8x8xf32>, vector<8x8xf32>, vector<8x8xf32> -> vector<8x8xf32>
    %127 = vector.extract_strided_slice %38 {offsets = [16, 0], sizes = [8, 64], strides = [1, 1]} : vector<64x64xf32> to vector<8x64xf32>
    %cst_54 = arith.constant dense<0.000000e+00> : vector<8x64xf32>
    %128 = tpu.matmul %126, %127, %cst_54 {dimension_numbers = #tpu.dot_dimension_numbers<[1], [0], [0], [1], [0, 0, 1, 1], [], []>} : vector<8x8xf32>, vector<8x64xf32>, vector<8x64xf32> -> vector<8x64xf32>
    %129 = arith.addf %99, %128 : vector<8x64xf32>
    %130 = vector.extract_strided_slice %30 {offsets = [0, 24], sizes = [8, 8], strides = [1, 1]} : vector<8x64xf32> to vector<8x8xf32>
    %cst_55 = arith.constant 0.594603539 : f32
    %131 = vector.broadcast %cst_55 : f32 to vector<8x8xf32>
    %132 = arith.mulf %130, %131 : vector<8x8xf32>
    %cst_56 = arith.constant dense<0xFF800000> : vector<8xf32>
    %133 = vector.multi_reduction <maximumf>, %132, %cst_56 [1] : vector<8x8xf32> to vector<8xf32>
    %134 = vector.shape_cast %133 : vector<8xf32> to vector<8x1xf32>
    %135 = vector.broadcast %134 : vector<8x1xf32> to vector<8x8xf32>
    %136 = arith.subf %132, %135 : vector<8x8xf32>
    %137 = math.exp %136 : vector<8x8xf32>
    %cst_57 = arith.constant dense<0.000000e+00> : vector<8xf32>
    %138 = vector.multi_reduction <add>, %137, %cst_57 [1] : vector<8x8xf32> to vector<8xf32>
    %139 = vector.shape_cast %138 : vector<8xf32> to vector<8x1xf32>
    %140 = vector.broadcast %139 : vector<8x1xf32> to vector<8x8xf32>
    %141 = arith.divf %137, %140 : vector<8x8xf32>
    %142 = vector.extract_strided_slice %33 {offsets = [0, 24], sizes = [8, 8], strides = [1, 1]} : vector<8x64xf32> to vector<8x8xf32>
    %cst_58 = arith.constant 0.594603539 : f32
    %143 = vector.broadcast %cst_58 : f32 to vector<8x8xf32>
    %144 = arith.mulf %142, %143 : vector<8x8xf32>
    %cst_59 = arith.constant dense<0xFF800000> : vector<8xf32>
    %145 = vector.multi_reduction <maximumf>, %144, %cst_59 [0] : vector<8x8xf32> to vector<8xf32>
    %146 = vector.shape_cast %145 : vector<8xf32> to vector<1x8xf32>
    %147 = vector.broadcast %146 : vector<1x8xf32> to vector<8x8xf32>
    %148 = arith.subf %144, %147 : vector<8x8xf32>
    %149 = math.exp %148 : vector<8x8xf32>
    %cst_60 = arith.constant dense<0.000000e+00> : vector<8xf32>
    %150 = vector.multi_reduction <add>, %149, %cst_60 [0] : vector<8x8xf32> to vector<8xf32>
    %151 = vector.shape_cast %150 : vector<8xf32> to vector<1x8xf32>
    %152 = vector.broadcast %151 : vector<1x8xf32> to vector<8x8xf32>
    %153 = arith.divf %149, %152 : vector<8x8xf32>
    %154 = vector.extract_strided_slice %36 {offsets = [0, 24], sizes = [8, 8], strides = [1, 1]} : vector<8x64xf32> to vector<8x8xf32>
    %cst_61 = arith.constant dense<0.000000e+00> : vector<8x8xf32>
    %155 = tpu.matmul %153, %154, %cst_61 {dimension_numbers = #tpu.dot_dimension_numbers<[0], [0], [1], [1], [0, 1, 1, 1], [], []>} : vector<8x8xf32>, vector<8x8xf32>, vector<8x8xf32> -> vector<8x8xf32>
    %cst_62 = arith.constant dense<0.000000e+00> : vector<8x8xf32>
    %156 = tpu.matmul %141, %155, %cst_62 {dimension_numbers = #tpu.dot_dimension_numbers<[1], [0], [0], [1], [0, 0, 1, 1], [], []>} : vector<8x8xf32>, vector<8x8xf32>, vector<8x8xf32> -> vector<8x8xf32>
    %157 = vector.extract_strided_slice %38 {offsets = [24, 0], sizes = [8, 64], strides = [1, 1]} : vector<64x64xf32> to vector<8x64xf32>
    %cst_63 = arith.constant dense<0.000000e+00> : vector<8x64xf32>
    %158 = tpu.matmul %156, %157, %cst_63 {dimension_numbers = #tpu.dot_dimension_numbers<[1], [0], [0], [1], [0, 0, 1, 1], [], []>} : vector<8x8xf32>, vector<8x64xf32>, vector<8x64xf32> -> vector<8x64xf32>
    %159 = arith.addf %129, %158 : vector<8x64xf32>
    %160 = vector.extract_strided_slice %30 {offsets = [0, 32], sizes = [8, 8], strides = [1, 1]} : vector<8x64xf32> to vector<8x8xf32>
    %cst_64 = arith.constant 0.594603539 : f32
    %161 = vector.broadcast %cst_64 : f32 to vector<8x8xf32>
    %162 = arith.mulf %160, %161 : vector<8x8xf32>
    %cst_65 = arith.constant dense<0xFF800000> : vector<8xf32>
    %163 = vector.multi_reduction <maximumf>, %162, %cst_65 [1] : vector<8x8xf32> to vector<8xf32>
    %164 = vector.shape_cast %163 : vector<8xf32> to vector<8x1xf32>
    %165 = vector.broadcast %164 : vector<8x1xf32> to vector<8x8xf32>
    %166 = arith.subf %162, %165 : vector<8x8xf32>
    %167 = math.exp %166 : vector<8x8xf32>
    %cst_66 = arith.constant dense<0.000000e+00> : vector<8xf32>
    %168 = vector.multi_reduction <add>, %167, %cst_66 [1] : vector<8x8xf32> to vector<8xf32>
    %169 = vector.shape_cast %168 : vector<8xf32> to vector<8x1xf32>
    %170 = vector.broadcast %169 : vector<8x1xf32> to vector<8x8xf32>
    %171 = arith.divf %167, %170 : vector<8x8xf32>
    %172 = vector.extract_strided_slice %33 {offsets = [0, 32], sizes = [8, 8], strides = [1, 1]} : vector<8x64xf32> to vector<8x8xf32>
    %cst_67 = arith.constant 0.594603539 : f32
    %173 = vector.broadcast %cst_67 : f32 to vector<8x8xf32>
    %174 = arith.mulf %172, %173 : vector<8x8xf32>
    %cst_68 = arith.constant dense<0xFF800000> : vector<8xf32>
    %175 = vector.multi_reduction <maximumf>, %174, %cst_68 [0] : vector<8x8xf32> to vector<8xf32>
    %176 = vector.shape_cast %175 : vector<8xf32> to vector<1x8xf32>
    %177 = vector.broadcast %176 : vector<1x8xf32> to vector<8x8xf32>
    %178 = arith.subf %174, %177 : vector<8x8xf32>
    %179 = math.exp %178 : vector<8x8xf32>
    %cst_69 = arith.constant dense<0.000000e+00> : vector<8xf32>
    %180 = vector.multi_reduction <add>, %179, %cst_69 [0] : vector<8x8xf32> to vector<8xf32>
    %181 = vector.shape_cast %180 : vector<8xf32> to vector<1x8xf32>
    %182 = vector.broadcast %181 : vector<1x8xf32> to vector<8x8xf32>
    %183 = arith.divf %179, %182 : vector<8x8xf32>
    %184 = vector.extract_strided_slice %36 {offsets = [0, 32], sizes = [8, 8], strides = [1, 1]} : vector<8x64xf32> to vector<8x8xf32>
    %cst_70 = arith.constant dense<0.000000e+00> : vector<8x8xf32>
    %185 = tpu.matmul %183, %184, %cst_70 {dimension_numbers = #tpu.dot_dimension_numbers<[0], [0], [1], [1], [0, 1, 1, 1], [], []>} : vector<8x8xf32>, vector<8x8xf32>, vector<8x8xf32> -> vector<8x8xf32>
    %cst_71 = arith.constant dense<0.000000e+00> : vector<8x8xf32>
    %186 = tpu.matmul %171, %185, %cst_71 {dimension_numbers = #tpu.dot_dimension_numbers<[1], [0], [0], [1], [0, 0, 1, 1], [], []>} : vector<8x8xf32>, vector<8x8xf32>, vector<8x8xf32> -> vector<8x8xf32>
    %187 = vector.extract_strided_slice %38 {offsets = [32, 0], sizes = [8, 64], strides = [1, 1]} : vector<64x64xf32> to vector<8x64xf32>
    %cst_72 = arith.constant dense<0.000000e+00> : vector<8x64xf32>
    %188 = tpu.matmul %186, %187, %cst_72 {dimension_numbers = #tpu.dot_dimension_numbers<[1], [0], [0], [1], [0, 0, 1, 1], [], []>} : vector<8x8xf32>, vector<8x64xf32>, vector<8x64xf32> -> vector<8x64xf32>
    %189 = arith.addf %159, %188 : vector<8x64xf32>
    %190 = vector.extract_strided_slice %30 {offsets = [0, 40], sizes = [8, 8], strides = [1, 1]} : vector<8x64xf32> to vector<8x8xf32>
    %cst_73 = arith.constant 0.594603539 : f32
    %191 = vector.broadcast %cst_73 : f32 to vector<8x8xf32>
    %192 = arith.mulf %190, %191 : vector<8x8xf32>
    %cst_74 = arith.constant dense<0xFF800000> : vector<8xf32>
    %193 = vector.multi_reduction <maximumf>, %192, %cst_74 [1] : vector<8x8xf32> to vector<8xf32>
    %194 = vector.shape_cast %193 : vector<8xf32> to vector<8x1xf32>
    %195 = vector.broadcast %194 : vector<8x1xf32> to vector<8x8xf32>
    %196 = arith.subf %192, %195 : vector<8x8xf32>
    %197 = math.exp %196 : vector<8x8xf32>
    %cst_75 = arith.constant dense<0.000000e+00> : vector<8xf32>
    %198 = vector.multi_reduction <add>, %197, %cst_75 [1] : vector<8x8xf32> to vector<8xf32>
    %199 = vector.shape_cast %198 : vector<8xf32> to vector<8x1xf32>
    %200 = vector.broadcast %199 : vector<8x1xf32> to vector<8x8xf32>
    %201 = arith.divf %197, %200 : vector<8x8xf32>
    %202 = vector.extract_strided_slice %33 {offsets = [0, 40], sizes = [8, 8], strides = [1, 1]} : vector<8x64xf32> to vector<8x8xf32>
    %cst_76 = arith.constant 0.594603539 : f32
    %203 = vector.broadcast %cst_76 : f32 to vector<8x8xf32>
    %204 = arith.mulf %202, %203 : vector<8x8xf32>
    %cst_77 = arith.constant dense<0xFF800000> : vector<8xf32>
    %205 = vector.multi_reduction <maximumf>, %204, %cst_77 [0] : vector<8x8xf32> to vector<8xf32>
    %206 = vector.shape_cast %205 : vector<8xf32> to vector<1x8xf32>
    %207 = vector.broadcast %206 : vector<1x8xf32> to vector<8x8xf32>
    %208 = arith.subf %204, %207 : vector<8x8xf32>
    %209 = math.exp %208 : vector<8x8xf32>
    %cst_78 = arith.constant dense<0.000000e+00> : vector<8xf32>
    %210 = vector.multi_reduction <add>, %209, %cst_78 [0] : vector<8x8xf32> to vector<8xf32>
    %211 = vector.shape_cast %210 : vector<8xf32> to vector<1x8xf32>
    %212 = vector.broadcast %211 : vector<1x8xf32> to vector<8x8xf32>
    %213 = arith.divf %209, %212 : vector<8x8xf32>
    %214 = vector.extract_strided_slice %36 {offsets = [0, 40], sizes = [8, 8], strides = [1, 1]} : vector<8x64xf32> to vector<8x8xf32>
    %cst_79 = arith.constant dense<0.000000e+00> : vector<8x8xf32>
    %215 = tpu.matmul %213, %214, %cst_79 {dimension_numbers = #tpu.dot_dimension_numbers<[0], [0], [1], [1], [0, 1, 1, 1], [], []>} : vector<8x8xf32>, vector<8x8xf32>, vector<8x8xf32> -> vector<8x8xf32>
    %cst_80 = arith.constant dense<0.000000e+00> : vector<8x8xf32>
    %216 = tpu.matmul %201, %215, %cst_80 {dimension_numbers = #tpu.dot_dimension_numbers<[1], [0], [0], [1], [0, 0, 1, 1], [], []>} : vector<8x8xf32>, vector<8x8xf32>, vector<8x8xf32> -> vector<8x8xf32>
    %217 = vector.extract_strided_slice %38 {offsets = [40, 0], sizes = [8, 64], strides = [1, 1]} : vector<64x64xf32> to vector<8x64xf32>
    %cst_81 = arith.constant dense<0.000000e+00> : vector<8x64xf32>
    %218 = tpu.matmul %216, %217, %cst_81 {dimension_numbers = #tpu.dot_dimension_numbers<[1], [0], [0], [1], [0, 0, 1, 1], [], []>} : vector<8x8xf32>, vector<8x64xf32>, vector<8x64xf32> -> vector<8x64xf32>
    %219 = arith.addf %189, %218 : vector<8x64xf32>
    %220 = vector.extract_strided_slice %30 {offsets = [0, 48], sizes = [8, 8], strides = [1, 1]} : vector<8x64xf32> to vector<8x8xf32>
    %cst_82 = arith.constant 0.594603539 : f32
    %221 = vector.broadcast %cst_82 : f32 to vector<8x8xf32>
    %222 = arith.mulf %220, %221 : vector<8x8xf32>
    %cst_83 = arith.constant dense<0xFF800000> : vector<8xf32>
    %223 = vector.multi_reduction <maximumf>, %222, %cst_83 [1] : vector<8x8xf32> to vector<8xf32>
    %224 = vector.shape_cast %223 : vector<8xf32> to vector<8x1xf32>
    %225 = vector.broadcast %224 : vector<8x1xf32> to vector<8x8xf32>
    %226 = arith.subf %222, %225 : vector<8x8xf32>
    %227 = math.exp %226 : vector<8x8xf32>
    %cst_84 = arith.constant dense<0.000000e+00> : vector<8xf32>
    %228 = vector.multi_reduction <add>, %227, %cst_84 [1] : vector<8x8xf32> to vector<8xf32>
    %229 = vector.shape_cast %228 : vector<8xf32> to vector<8x1xf32>
    %230 = vector.broadcast %229 : vector<8x1xf32> to vector<8x8xf32>
    %231 = arith.divf %227, %230 : vector<8x8xf32>
    %232 = vector.extract_strided_slice %33 {offsets = [0, 48], sizes = [8, 8], strides = [1, 1]} : vector<8x64xf32> to vector<8x8xf32>
    %cst_85 = arith.constant 0.594603539 : f32
    %233 = vector.broadcast %cst_85 : f32 to vector<8x8xf32>
    %234 = arith.mulf %232, %233 : vector<8x8xf32>
    %cst_86 = arith.constant dense<0xFF800000> : vector<8xf32>
    %235 = vector.multi_reduction <maximumf>, %234, %cst_86 [0] : vector<8x8xf32> to vector<8xf32>
    %236 = vector.shape_cast %235 : vector<8xf32> to vector<1x8xf32>
    %237 = vector.broadcast %236 : vector<1x8xf32> to vector<8x8xf32>
    %238 = arith.subf %234, %237 : vector<8x8xf32>
    %239 = math.exp %238 : vector<8x8xf32>
    %cst_87 = arith.constant dense<0.000000e+00> : vector<8xf32>
    %240 = vector.multi_reduction <add>, %239, %cst_87 [0] : vector<8x8xf32> to vector<8xf32>
    %241 = vector.shape_cast %240 : vector<8xf32> to vector<1x8xf32>
    %242 = vector.broadcast %241 : vector<1x8xf32> to vector<8x8xf32>
    %243 = arith.divf %239, %242 : vector<8x8xf32>
    %244 = vector.extract_strided_slice %36 {offsets = [0, 48], sizes = [8, 8], strides = [1, 1]} : vector<8x64xf32> to vector<8x8xf32>
    %cst_88 = arith.constant dense<0.000000e+00> : vector<8x8xf32>
    %245 = tpu.matmul %243, %244, %cst_88 {dimension_numbers = #tpu.dot_dimension_numbers<[0], [0], [1], [1], [0, 1, 1, 1], [], []>} : vector<8x8xf32>, vector<8x8xf32>, vector<8x8xf32> -> vector<8x8xf32>
    %cst_89 = arith.constant dense<0.000000e+00> : vector<8x8xf32>
    %246 = tpu.matmul %231, %245, %cst_89 {dimension_numbers = #tpu.dot_dimension_numbers<[1], [0], [0], [1], [0, 0, 1, 1], [], []>} : vector<8x8xf32>, vector<8x8xf32>, vector<8x8xf32> -> vector<8x8xf32>
    %247 = vector.extract_strided_slice %38 {offsets = [48, 0], sizes = [8, 64], strides = [1, 1]} : vector<64x64xf32> to vector<8x64xf32>
    %cst_90 = arith.constant dense<0.000000e+00> : vector<8x64xf32>
    %248 = tpu.matmul %246, %247, %cst_90 {dimension_numbers = #tpu.dot_dimension_numbers<[1], [0], [0], [1], [0, 0, 1, 1], [], []>} : vector<8x8xf32>, vector<8x64xf32>, vector<8x64xf32> -> vector<8x64xf32>
    %249 = arith.addf %219, %248 : vector<8x64xf32>
    %250 = vector.extract_strided_slice %30 {offsets = [0, 56], sizes = [8, 8], strides = [1, 1]} : vector<8x64xf32> to vector<8x8xf32>
    %cst_91 = arith.constant 0.594603539 : f32
    %251 = vector.broadcast %cst_91 : f32 to vector<8x8xf32>
    %252 = arith.mulf %250, %251 : vector<8x8xf32>
    %cst_92 = arith.constant dense<0xFF800000> : vector<8xf32>
    %253 = vector.multi_reduction <maximumf>, %252, %cst_92 [1] : vector<8x8xf32> to vector<8xf32>
    %254 = vector.shape_cast %253 : vector<8xf32> to vector<8x1xf32>
    %255 = vector.broadcast %254 : vector<8x1xf32> to vector<8x8xf32>
    %256 = arith.subf %252, %255 : vector<8x8xf32>
    %257 = math.exp %256 : vector<8x8xf32>
    %cst_93 = arith.constant dense<0.000000e+00> : vector<8xf32>
    %258 = vector.multi_reduction <add>, %257, %cst_93 [1] : vector<8x8xf32> to vector<8xf32>
    %259 = vector.shape_cast %258 : vector<8xf32> to vector<8x1xf32>
    %260 = vector.broadcast %259 : vector<8x1xf32> to vector<8x8xf32>
    %261 = arith.divf %257, %260 : vector<8x8xf32>
    %262 = vector.extract_strided_slice %33 {offsets = [0, 56], sizes = [8, 8], strides = [1, 1]} : vector<8x64xf32> to vector<8x8xf32>
    %cst_94 = arith.constant 0.594603539 : f32
    %263 = vector.broadcast %cst_94 : f32 to vector<8x8xf32>
    %264 = arith.mulf %262, %263 : vector<8x8xf32>
    %cst_95 = arith.constant dense<0xFF800000> : vector<8xf32>
    %265 = vector.multi_reduction <maximumf>, %264, %cst_95 [0] : vector<8x8xf32> to vector<8xf32>
    %266 = vector.shape_cast %265 : vector<8xf32> to vector<1x8xf32>
    %267 = vector.broadcast %266 : vector<1x8xf32> to vector<8x8xf32>
    %268 = arith.subf %264, %267 : vector<8x8xf32>
    %269 = math.exp %268 : vector<8x8xf32>
    %cst_96 = arith.constant dense<0.000000e+00> : vector<8xf32>
    %270 = vector.multi_reduction <add>, %269, %cst_96 [0] : vector<8x8xf32> to vector<8xf32>
    %271 = vector.shape_cast %270 : vector<8xf32> to vector<1x8xf32>
    %272 = vector.broadcast %271 : vector<1x8xf32> to vector<8x8xf32>
    %273 = arith.divf %269, %272 : vector<8x8xf32>
    %274 = vector.extract_strided_slice %36 {offsets = [0, 56], sizes = [8, 8], strides = [1, 1]} : vector<8x64xf32> to vector<8x8xf32>
    %cst_97 = arith.constant dense<0.000000e+00> : vector<8x8xf32>
    %275 = tpu.matmul %273, %274, %cst_97 {dimension_numbers = #tpu.dot_dimension_numbers<[0], [0], [1], [1], [0, 1, 1, 1], [], []>} : vector<8x8xf32>, vector<8x8xf32>, vector<8x8xf32> -> vector<8x8xf32>
    %cst_98 = arith.constant dense<0.000000e+00> : vector<8x8xf32>
    %276 = tpu.matmul %261, %275, %cst_98 {dimension_numbers = #tpu.dot_dimension_numbers<[1], [0], [0], [1], [0, 0, 1, 1], [], []>} : vector<8x8xf32>, vector<8x8xf32>, vector<8x8xf32> -> vector<8x8xf32>
    %277 = vector.extract_strided_slice %38 {offsets = [56, 0], sizes = [8, 64], strides = [1, 1]} : vector<64x64xf32> to vector<8x64xf32>
    %cst_99 = arith.constant dense<0.000000e+00> : vector<8x64xf32>
    %278 = tpu.matmul %276, %277, %cst_99 {dimension_numbers = #tpu.dot_dimension_numbers<[1], [0], [0], [1], [0, 0, 1, 1], [], []>} : vector<8x8xf32>, vector<8x64xf32>, vector<8x64xf32> -> vector<8x64xf32>
    %279 = arith.addf %249, %278 : vector<8x64xf32>
    %280 = arith.addf %3, %279 : vector<8x64xf32>
    %c0_100 = arith.constant 0 : index
    %c0_101 = arith.constant 0 : index
    %c0_102 = arith.constant 0 : index
    %281 = vector.load %arg9[%c0_100, %c0_101, %c0_102] : memref<1x1x64xf32, #tpu.memory_space<vmem>>, vector<1x1x64xf32>
    %282 = vector.shape_cast %281 : vector<1x1x64xf32> to vector<1x64xf32>
    %283 = vector.broadcast %282 : vector<1x64xf32> to vector<8x64xf32>
    %284 = arith.addf %280, %283 : vector<8x64xf32>
    %c0_103 = arith.constant 0 : index
    %c0_104 = arith.constant 0 : index
    %c0_105 = arith.constant 0 : index
    %285 = vector.load %arg10[%c0_103, %c0_104, %c0_105] : memref<1x1x64xf32, #tpu.memory_space<vmem>>, vector<1x1x64xf32>
    %286 = vector.shape_cast %285 : vector<1x1x64xf32> to vector<1x64xf32>
    %c0_106 = arith.constant 0 : index
    %c0_107 = arith.constant 0 : index
    %c0_108 = arith.constant 0 : index
    %287 = vector.load %arg11[%c0_106, %c0_107, %c0_108] : memref<1x1x64xf32, #tpu.memory_space<vmem>>, vector<1x1x64xf32>
    %288 = vector.shape_cast %287 : vector<1x1x64xf32> to vector<1x64xf32>
    %cst_109 = arith.constant dense<0.000000e+00> : vector<8xf32>
    %289 = vector.multi_reduction <add>, %284, %cst_109 [1] : vector<8x64xf32> to vector<8xf32>
    %290 = vector.shape_cast %289 : vector<8xf32> to vector<8x1xf32>
    %cst_110 = arith.constant 6.400000e+01 : f32
    %291 = vector.broadcast %cst_110 : f32 to vector<8x1xf32>
    %292 = arith.divf %290, %291 : vector<8x1xf32>
    %293 = vector.broadcast %292 : vector<8x1xf32> to vector<8x64xf32>
    %294 = arith.subf %284, %293 : vector<8x64xf32>
    %295 = arith.mulf %294, %294 : vector<8x64xf32>
    %cst_111 = arith.constant dense<0.000000e+00> : vector<8xf32>
    %296 = vector.multi_reduction <add>, %295, %cst_111 [1] : vector<8x64xf32> to vector<8xf32>
    %297 = vector.shape_cast %296 : vector<8xf32> to vector<8x1xf32>
    %cst_112 = arith.constant 6.400000e+01 : f32
    %298 = vector.broadcast %cst_112 : f32 to vector<8x1xf32>
    %299 = arith.divf %297, %298 : vector<8x1xf32>
    %cst_113 = arith.constant 9.99999974E-6 : f32
    %300 = vector.broadcast %cst_113 : f32 to vector<8x1xf32>
    %301 = arith.addf %299, %300 : vector<8x1xf32>
    %302 = math.rsqrt %301 : vector<8x1xf32>
    %303 = vector.broadcast %302 : vector<8x1xf32> to vector<8x64xf32>
    %304 = arith.mulf %294, %303 : vector<8x64xf32>
    %305 = vector.broadcast %286 : vector<1x64xf32> to vector<8x64xf32>
    %306 = arith.mulf %304, %305 : vector<8x64xf32>
    %307 = vector.broadcast %288 : vector<1x64xf32> to vector<8x64xf32>
    %308 = arith.addf %306, %307 : vector<8x64xf32>
    %c0_114 = arith.constant 0 : index
    %c0_115 = arith.constant 0 : index
    %c0_116 = arith.constant 0 : index
    %309 = vector.load %arg12[%c0_114, %c0_115, %c0_116] : memref<1x64x256xf32, #tpu.memory_space<vmem>>, vector<1x64x256xf32>
    %310 = vector.shape_cast %309 : vector<1x64x256xf32> to vector<64x256xf32>
    %cst_117 = arith.constant dense<0.000000e+00> : vector<8x256xf32>
    %311 = tpu.matmul %308, %310, %cst_117 {dimension_numbers = #tpu.dot_dimension_numbers<[1], [0], [0], [1], [0, 0, 1, 1], [], []>} : vector<8x64xf32>, vector<64x256xf32>, vector<8x256xf32> -> vector<8x256xf32>
    %c0_118 = arith.constant 0 : index
    %c0_119 = arith.constant 0 : index
    %c0_120 = arith.constant 0 : index
    %312 = vector.load %arg13[%c0_118, %c0_119, %c0_120] : memref<1x1x256xf32, #tpu.memory_space<vmem>>, vector<1x1x256xf32>
    %313 = vector.shape_cast %312 : vector<1x1x256xf32> to vector<1x256xf32>
    %314 = vector.broadcast %313 : vector<1x256xf32> to vector<8x256xf32>
    %315 = arith.addf %311, %314 : vector<8x256xf32>
    %cst_121 = arith.constant 5.000000e-01 : f32
    %316 = vector.broadcast %cst_121 : f32 to vector<8x256xf32>
    %317 = arith.mulf %316, %315 : vector<8x256xf32>
    %cst_122 = arith.constant 4.471500e-02 : f32
    %318 = vector.broadcast %cst_122 : f32 to vector<8x256xf32>
    %319 = arith.mulf %318, %315 : vector<8x256xf32>
    %320 = arith.mulf %319, %315 : vector<8x256xf32>
    %321 = arith.mulf %320, %315 : vector<8x256xf32>
    %322 = arith.addf %315, %321 : vector<8x256xf32>
    %cst_123 = arith.constant 0.797884583 : f32
    %323 = vector.broadcast %cst_123 : f32 to vector<8x256xf32>
    %324 = arith.mulf %323, %322 : vector<8x256xf32>
    %325 = math.tanh %324 : vector<8x256xf32>
    %cst_124 = arith.constant 1.000000e+00 : f32
    %326 = vector.broadcast %cst_124 : f32 to vector<8x256xf32>
    %327 = arith.addf %326, %325 : vector<8x256xf32>
    %328 = arith.mulf %317, %327 : vector<8x256xf32>
    %c0_125 = arith.constant 0 : index
    %c0_126 = arith.constant 0 : index
    %c0_127 = arith.constant 0 : index
    %329 = vector.load %arg14[%c0_125, %c0_126, %c0_127] : memref<1x256x64xf32, #tpu.memory_space<vmem>>, vector<1x256x64xf32>
    %330 = vector.shape_cast %329 : vector<1x256x64xf32> to vector<256x64xf32>
    %cst_128 = arith.constant dense<0.000000e+00> : vector<8x64xf32>
    %331 = tpu.matmul %328, %330, %cst_128 {dimension_numbers = #tpu.dot_dimension_numbers<[1], [0], [0], [1], [0, 0, 1, 1], [], []>} : vector<8x256xf32>, vector<256x64xf32>, vector<8x64xf32> -> vector<8x64xf32>
    %332 = arith.addf %284, %331 : vector<8x64xf32>
    %c0_129 = arith.constant 0 : index
    %c0_130 = arith.constant 0 : index
    %c0_131 = arith.constant 0 : index
    %333 = vector.load %arg15[%c0_129, %c0_130, %c0_131] : memref<1x1x64xf32, #tpu.memory_space<vmem>>, vector<1x1x64xf32>
    %334 = vector.shape_cast %333 : vector<1x1x64xf32> to vector<1x64xf32>
    %335 = vector.broadcast %334 : vector<1x64xf32> to vector<8x64xf32>
    %336 = arith.addf %332, %335 : vector<8x64xf32>
    %c0_132 = arith.constant 0 : index
    %c0_133 = arith.constant 0 : index
    %337 = vector.load %arg17[%c0_132, %c0_133] : memref<8x64xf32, #tpu.memory_space<vmem>>, vector<8x64xf32>
    tpu.vector_store %arg17[%c0_132, %c0_133], %336 {strides = array<i32>} : memref<8x64xf32, #tpu.memory_space<vmem>>, vector<8x64xf32>,
    %c1_i32 = arith.constant 1 : i32
    %338 = arith.cmpi eq, %arg1, %c1_i32 : i32
    %339 = arith.extui %338 : i1 to i32
    %c0_i32_134 = arith.constant 0 : i32
    %340 = arith.cmpi ne, %339, %c0_i32_134 : i32
    scf.if %340 {
      %c0_135 = arith.constant 0 : index
      %c0_136 = arith.constant 0 : index
      %c0_137 = arith.constant 0 : index
      %341 = vector.load %arg16[%c0_135, %c0_136, %c0_137] : memref<1x8x64xf32, #tpu.memory_space<vmem>>, vector<1x8x64xf32>
      %342 = vector.shape_cast %341 : vector<1x8x64xf32> to vector<8x64xf32>
      %343 = vector.shape_cast %336 : vector<8x64xf32> to vector<1x8x64xf32>
      tpu.vector_store %arg16[%c0_135, %c0_136, %c0_137], %343 {strides = array<i32>} : memref<1x8x64xf32, #tpu.memory_space<vmem>>, vector<1x8x64xf32>,
    } else {
    }
    return
  }
  func.func @transform_0(%arg0: i32, %arg1: i32) -> (i32, i32, i32) {
    %c0_i32 = arith.constant 0 : i32
    %c0_i32_0 = arith.constant 0 : i32
    %c0_i32_1 = arith.constant 0 : i32
    return %arg0, %c0_i32, %c0_i32_0 : i32, i32, i32
  }
  func.func @transform_1(%arg0: i32, %arg1: i32) -> (i32, i32, i32) {
    %c0_i32 = arith.constant 0 : i32
    %c0_i32_0 = arith.constant 0 : i32
    %c0_i32_1 = arith.constant 0 : i32
    return %arg1, %c0_i32, %c0_i32_0 : i32, i32, i32
  }
  func.func @transform_2(%arg0: i32, %arg1: i32) -> (i32, i32, i32) {
    %c0_i32 = arith.constant 0 : i32
    %c0_i32_0 = arith.constant 0 : i32
    %c0_i32_1 = arith.constant 0 : i32
    return %arg1, %c0_i32, %c0_i32_0 : i32, i32, i32
  }
  func.func @transform_3(%arg0: i32, %arg1: i32) -> (i32, i32, i32) {
    %c0_i32 = arith.constant 0 : i32
    %c0_i32_0 = arith.constant 0 : i32
    %c0_i32_1 = arith.constant 0 : i32
    return %arg1, %c0_i32, %c0_i32_0 : i32, i32, i32
  }
  func.func @transform_4(%arg0: i32, %arg1: i32) -> (i32, i32, i32) {
    %c0_i32 = arith.constant 0 : i32
    %c0_i32_0 = arith.constant 0 : i32
    %c0_i32_1 = arith.constant 0 : i32
    return %arg1, %c0_i32, %c0_i32_0 : i32, i32, i32
  }
  func.func @transform_5(%arg0: i32, %arg1: i32) -> (i32, i32, i32) {
    %c0_i32 = arith.constant 0 : i32
    %c0_i32_0 = arith.constant 0 : i32
    %c0_i32_1 = arith.constant 0 : i32
    return %arg1, %c0_i32, %c0_i32_0 : i32, i32, i32
  }
  func.func @transform_6(%arg0: i32, %arg1: i32) -> (i32, i32, i32) {
    %c0_i32 = arith.constant 0 : i32
    %c0_i32_0 = arith.constant 0 : i32
    %c0_i32_1 = arith.constant 0 : i32
    return %arg1, %c0_i32, %c0_i32_0 : i32, i32, i32
  }
  func.func @transform_7(%arg0: i32, %arg1: i32) -> (i32, i32, i32) {
    %c0_i32 = arith.constant 0 : i32
    %c0_i32_0 = arith.constant 0 : i32
    %c0_i32_1 = arith.constant 0 : i32
    return %arg1, %c0_i32, %c0_i32_0 : i32, i32, i32
  }
  func.func @transform_8(%arg0: i32, %arg1: i32) -> (i32, i32, i32) {
    %c0_i32 = arith.constant 0 : i32
    %c0_i32_0 = arith.constant 0 : i32
    %c0_i32_1 = arith.constant 0 : i32
    return %arg1, %c0_i32, %c0_i32_0 : i32, i32, i32
  }
  func.func @transform_9(%arg0: i32, %arg1: i32) -> (i32, i32, i32) {
    %c0_i32 = arith.constant 0 : i32
    %c0_i32_0 = arith.constant 0 : i32
    %c0_i32_1 = arith.constant 0 : i32
    return %arg1, %c0_i32, %c0_i32_0 : i32, i32, i32
  }
  func.func @transform_10(%arg0: i32, %arg1: i32) -> (i32, i32, i32) {
    %c0_i32 = arith.constant 0 : i32
    %c0_i32_0 = arith.constant 0 : i32
    %c0_i32_1 = arith.constant 0 : i32
    return %arg1, %c0_i32, %c0_i32_0 : i32, i32, i32
  }
  func.func @transform_11(%arg0: i32, %arg1: i32) -> (i32, i32, i32) {
    %c0_i32 = arith.constant 0 : i32
    %c0_i32_0 = arith.constant 0 : i32
    %c0_i32_1 = arith.constant 0 : i32
    return %arg1, %c0_i32, %c0_i32_0 : i32, i32, i32
  }
  func.func @transform_12(%arg0: i32, %arg1: i32) -> (i32, i32, i32) {
    %c0_i32 = arith.constant 0 : i32
    %c0_i32_0 = arith.constant 0 : i32
    %c0_i32_1 = arith.constant 0 : i32
    return %arg1, %c0_i32, %c0_i32_0 : i32, i32, i32
  }
  func.func @transform_13(%arg0: i32, %arg1: i32) -> (i32, i32, i32) {
    %c0_i32 = arith.constant 0 : i32
    %c0_i32_0 = arith.constant 0 : i32
    %c0_i32_1 = arith.constant 0 : i32
    return %arg1, %c0_i32, %c0_i32_0 : i32, i32, i32
  }
  func.func @transform_14(%arg0: i32, %arg1: i32) -> (i32, i32, i32) {
    %c0_i32 = arith.constant 0 : i32
    %c0_i32_0 = arith.constant 0 : i32
    %c0_i32_1 = arith.constant 0 : i32
    return %arg0, %c0_i32, %c0_i32_0 : i32, i32, i32
  }
}

</mosaic_0001>

<llo_original>
// kernel: tpu_custom_call.1
$region0: #{tpu_custom_call.1}
  #allocation0 [shape = 'u32[]', space=smem, size = 0x4, offset = 0x4, fixed_abs, tag = 'smem constant byte address 0x4 - core index']
  #allocation1 [shape = 'u32[144,128]{1,0:T(1,128)}', space=vmem, size = 0x12000, scoped, tag = 'internal scratch']
  #allocation2 [shape = 'f32[8,64]{1,0:T(8,128)}', space=vmem, size = 0x1000, scoped, tag = 'scratch operand']
  %s0 = inlined_call_operand.hbm [shape: f32[2,8,64], index: 0, kind: input, shape index: {}]
  %s1 = inlined_call_operand.hbm [shape: f32[2,1,64], index: 1, kind: input, shape index: {}]
  %s2 = inlined_call_operand.hbm [shape: f32[2,1,64], index: 2, kind: input, shape index: {}]
  %s3 = inlined_call_operand.vmem [shape: f32[2,64,64], index: 3, kind: input, shape index: {}]
  %s4 = inlined_call_operand.vmem [shape: f32[2,64,64], index: 4, kind: input, shape index: {}]
  %s5 = inlined_call_operand.vmem [shape: f32[2,64,64], index: 5, kind: input, shape index: {}]
  %s6 = inlined_call_operand.vmem [shape: f32[2,64,64], index: 6, kind: input, shape index: {}]
  %s7 = inlined_call_operand.vmem [shape: f32[2,1,64], index: 7, kind: input, shape index: {}]
  %s8 = inlined_call_operand.vmem [shape: f32[2,1,64], index: 8, kind: input, shape index: {}]
  %s9 = inlined_call_operand.vmem [shape: f32[2,1,64], index: 9, kind: input, shape index: {}]
  %s10 = inlined_call_operand.vmem [shape: f32[2,64,256], index: 10, kind: input, shape index: {}]
  %s11 = inlined_call_operand.vmem [shape: f32[2,1,256], index: 11, kind: input, shape index: {}]
  %s12 = inlined_call_operand.vmem [shape: f32[2,256,64], index: 12, kind: input, shape index: {}]
  %s13 = inlined_call_operand.vmem [shape: f32[2,1,64], index: 13, kind: input, shape index: {}]
  %s14 = inlined_call_operand.hbm [shape: f32[2,8,64], index: 14, kind: output, shape index: {}]
  %s15 = sld [smem:[#allocation0]]
  $region109: #{tpu_custom_call.1} parent=0
    _
  %s17 = ssub.s32 1, %s15
  %s18 = scalar_select 0, %s17, %s15
  $region1: #{tpu_custom_call.1} parent=0
    #allocation3 [shape = 'u8[8192]{0}', space=vmem, size = 0x2000, scoped, tag = 'input window, operand 0']
    #allocation4 [shape = 's32[2]{0}', space=sflag, size = 0x8, scoped, tag = 'scoped memory for tpu_custom_call.1']
    #allocation5 [shape = 's32[2]{0}', space=sflag, size = 0x8, scoped, tag = 'scoped memory for tpu_custom_call.1']
    #allocation6 [shape = 'u8[1024]{0}', space=vmem, size = 0x400, scoped, tag = 'input window, operand 1']
    #allocation7 [shape = 's32[2]{0}', space=sflag, size = 0x8, scoped, tag = 'scoped memory for tpu_custom_call.1']
    #allocation8 [shape = 'u8[1024]{0}', space=vmem, size = 0x400, scoped, tag = 'input window, operand 2']
    #allocation9 [shape = 'u8[8192]{0}', space=vmem, size = 0x2000, scoped, tag = 'output window, operand 0']
    %19 = vsyncpa [#allocation4], 0
    %s20 = scalar_lea.sflag [#allocation4], 1
    %21 = vsyncpa %s20, 0
    %22 = vsyncpa [#allocation7], 0
    %s23 = scalar_lea.sflag [#allocation7], 1
    %24 = vsyncpa %s23, 0
    %25 = vsyncpa [#allocation5], 0
    %s26 = scalar_lea.sflag [#allocation5], 1
    %27 = vsyncpa %s26, 0
    loop: start=0, step=1, limit=6
    $region2: #{tpu_custom_call.1} parent=1 // loop_pre_header
      _
    $region3: #{tpu_custom_call.1} parent=1 // loop_header
      %s29 = sphi 0, %s33
      %p30 = scmp.ge.s32.totalorder %s29, 6
      %s36 = sphi 0, %s48
      %s37 = sphi 0, %s44
      %s38 = sphi 0, %s36
      %s39 = sphi 0, %s37
      %s40 = sphi 0, %s38
      %s41 = sphi 0, %s39
      %s51 = sphi 0, %s53
      %s54 = sphi 0, %s51
      %s55 = sphi 0, %s54
      %s71 = sphi 0, %s55
      %s77 = sphi 0, %s79
      %s80 = sphi 0, %s77
      %s81 = sphi 0, %s80
      %s97 = sphi 0, %s81
      %s103 = sphi 0, %s105
      %s106 = sphi 0, %s103
      %s107 = sphi 0, %s106
      %s123 = sphi 0, %s107
      %s129 = sphi 0, %s131
      %s132 = sphi 0, %s129
      %s133 = sphi 0, %s132
      %s149 = sphi 0, %s133
      %s155 = sphi 0, %s157
      %s158 = sphi 0, %s155
      %s159 = sphi 0, %s158
      %s175 = sphi 0, %s159
      %s181 = sphi 0, %s183
      %s184 = sphi 0, %s181
      %s185 = sphi 0, %s184
      %s201 = sphi 0, %s185
      %s207 = sphi 0, %s209
      %s210 = sphi 0, %s207
      %s211 = sphi 0, %s210
      %s227 = sphi 0, %s211
      %s233 = sphi 0, %s235
      %s236 = sphi 0, %s233
      %s237 = sphi 0, %s236
      %s253 = sphi 0, %s237
      %s259 = sphi 0, %s261
      %s262 = sphi 0, %s259
      %s263 = sphi 0, %s262
      %s279 = sphi 0, %s263
      %s285 = sphi 0, %s287
      %s288 = sphi 0, %s285
      %s289 = sphi 0, %s288
      %s305 = sphi 0, %s289
      %s311 = sphi 0, %s313
      %s314 = sphi 0, %s311
      %s315 = sphi 0, %s314
      %s331 = sphi 0, %s315
      %s337 = sphi 0, %s339
      %s340 = sphi 0, %s337
      %s341 = sphi 0, %s340
      %s357 = sphi 0, %s341
      %s363 = sphi 0, %s365
      %s366 = sphi 0, %s363
      %s367 = sphi 0, %s366
      %s383 = sphi 0, %s367
      %s389 = sphi 0, %s391
      %s392 = sphi 0, %s389
      %s393 = sphi 0, %s392
      %s409 = sphi 0, %s393
      %s415 = sphi 0, %s417
      %s418 = sphi 0, %s415
      %s419 = sphi 0, %s418
      %s435 = sphi 0, %s419
    $region4: #{tpu_custom_call.1} parent=1 // loop_header_branch
      %32 = sbr.rel (%p30) target = $region8
    $region5: #{tpu_custom_call.1} parent=1 // loop_body
      %s34 = ssub.s32 %s29, 1
      %s35 = ssub.s32 %s29, 2
      %s42 = sadd.s32 1, %s37
      %p43 = scmp.ge.s32.totalorder %s42, 2
      %s44 = scalar_select %p43, 0, %s42
      %s45 = sadd.s32 1, %s36
      %s46 = scalar_select %p43, %s45, %s36
      %p47 = scmp.ge.s32.totalorder %s46, 2
      %s48 = scalar_select %p47, 0, %s46
      %s49 = ssub.s32 %s36, %s48
      %p50 = scmp.eq.s32.totalorder %s49, 0
      %s52 = sadd.s32 %s51, 1
      %s53 = scalar_select %p50, %s51, %s52
      %p56 = pneg %p50
      %p57 = scmp.eq.s32.totalorder %s29, 3
      %p58 = por %p56, %p57
      %p59 = scmp.ne.s32.totalorder %s51, %s54
      %p60 = scmp.eq.s32.totalorder %s29, 0
      %p61 = por %p59, %p60
      %p62 = scmp.ne.s32.totalorder %s51, %s54
      %p63 = scmp.eq.s32.totalorder %s34, 3
      %p64 = por %p62, %p63
      %p65 = scmp.ne.s32.totalorder %s54, %s55
      %p66 = scmp.eq.s32.totalorder %s34, 0
      %p67 = por %p65, %p66
      %p68 = scmp.ne.s32.totalorder %s54, %s55
      %p69 = scmp.eq.s32.totalorder %s35, 3
      %p70 = por %p68, %p69
      %p72 = scmp.ne.s32.totalorder %s55, %s71
      %p73 = scmp.eq.s32.totalorder %s35, 0
      %p74 = por %p72, %p73
      %s75 = ssub.s32 %s37, %s44
      %p76 = scmp.eq.s32.totalorder %s75, 0
      %s78 = sadd.s32 %s77, 1
      %s79 = scalar_select %p76, %s77, %s78
      %p82 = pneg %p76
      %p83 = scmp.eq.s32.totalorder %s29, 3
      %p84 = por %p82, %p83
      %p85 = scmp.ne.s32.totalorder %s77, %s80
      %p86 = scmp.eq.s32.totalorder %s29, 0
      %p87 = por %p85, %p86
      %p88 = scmp.ne.s32.totalorder %s77, %s80
      %p89 = scmp.eq.s32.totalorder %s34, 3
      %p90 = por %p88, %p89
      %p91 = scmp.ne.s32.totalorder %s80, %s81
      %p92 = scmp.eq.s32.totalorder %s34, 0
      %p93 = por %p91, %p92
      %p94 = scmp.ne.s32.totalorder %s80, %s81
      %p95 = scmp.eq.s32.totalorder %s35, 3
      %p96 = por %p94, %p95
      %p98 = scmp.ne.s32.totalorder %s81, %s97
      %p99 = scmp.eq.s32.totalorder %s35, 0
      %p100 = por %p98, %p99
      %s101 = ssub.s32 %s37, %s44
      %p102 = scmp.eq.s32.totalorder %s101, 0
      %s104 = sadd.s32 %s103, 1
      %s105 = scalar_select %p102, %s103, %s104
      %p108 = pneg %p102
      %p109 = scmp.eq.s32.totalorder %s29, 3
      %p110 = por %p108, %p109
      %p111 = scmp.ne.s32.totalorder %s103, %s106
      %p112 = scmp.eq.s32.totalorder %s29, 0
      %p113 = por %p111, %p112
      %p114 = scmp.ne.s32.totalorder %s103, %s106
      %p115 = scmp.eq.s32.totalorder %s34, 3
      %p116 = por %p114, %p115
      %p117 = scmp.ne.s32.totalorder %s106, %s107
      %p118 = scmp.eq.s32.totalorder %s34, 0
      %p119 = por %p117, %p118
      %p120 = scmp.ne.s32.totalorder %s106, %s107
      %p121 = scmp.eq.s32.totalorder %s35, 3
      %p122 = por %p120, %p121
      %p124 = scmp.ne.s32.totalorder %s107, %s123
      %p125 = scmp.eq.s32.totalorder %s35, 0
      %p126 = por %p124, %p125
      %s127 = ssub.s32 %s37, %s44
      %p128 = scmp.eq.s32.totalorder %s127, 0
      %s130 = sadd.s32 %s129, 1
      %s131 = scalar_select %p128, %s129, %s130
      %p134 = pneg %p128
      %p135 = scmp.eq.s32.totalorder %s29, 3
      %p136 = por %p134, %p135
      %p137 = scmp.ne.s32.totalorder %s129, %s132
      %p138 = scmp.eq.s32.totalorder %s29, 0
      %p139 = por %p137, %p138
      %p140 = scmp.ne.s32.totalorder %s129, %s132
      %p141 = scmp.eq.s32.totalorder %s34, 3
      %p142 = por %p140, %p141
      %p143 = scmp.ne.s32.totalorder %s132, %s133
      %p144 = scmp.eq.s32.totalorder %s34, 0
      %p145 = por %p143, %p144
      %p146 = scmp.ne.s32.totalorder %s132, %s133
      %p147 = scmp.eq.s32.totalorder %s35, 3
      %p148 = por %p146, %p147
      %p150 = scmp.ne.s32.totalorder %s133, %s149
      %p151 = scmp.eq.s32.totalorder %s35, 0
      %p152 = por %p150, %p151
      %s153 = ssub.s32 %s37, %s44
      %p154 = scmp.eq.s32.totalorder %s153, 0
      %s156 = sadd.s32 %s155, 1
      %s157 = scalar_select %p154, %s155, %s156
      %p160 = pneg %p154
      %p161 = scmp.eq.s32.totalorder %s29, 3
      %p162 = por %p160, %p161
      %p163 = scmp.ne.s32.totalorder %s155, %s158
      %p164 = scmp.eq.s32.totalorder %s29, 0
      %p165 = por %p163, %p164
      %p166 = scmp.ne.s32.totalorder %s155, %s158
      %p167 = scmp.eq.s32.totalorder %s34, 3
      %p168 = por %p166, %p167
      %p169 = scmp.ne.s32.totalorder %s158, %s159
      %p170 = scmp.eq.s32.totalorder %s34, 0
      %p171 = por %p169, %p170
      %p172 = scmp.ne.s32.totalorder %s158, %s159
      %p173 = scmp.eq.s32.totalorder %s35, 3
      %p174 = por %p172, %p173
      %p176 = scmp.ne.s32.totalorder %s159, %s175
      %p177 = scmp.eq.s32.totalorder %s35, 0
      %p178 = por %p176, %p177
      %s179 = ssub.s32 %s37, %s44
      %p180 = scmp.eq.s32.totalorder %s179, 0
      %s182 = sadd.s32 %s181, 1
      %s183 = scalar_select %p180, %s181, %s182
      %p186 = pneg %p180
      %p187 = scmp.eq.s32.totalorder %s29, 3
      %p188 = por %p186, %p187
      %p189 = scmp.ne.s32.totalorder %s181, %s184
      %p190 = scmp.eq.s32.totalorder %s29, 0
      %p191 = por %p189, %p190
      %p192 = scmp.ne.s32.totalorder %s181, %s184
      %p193 = scmp.eq.s32.totalorder %s34, 3
      %p194 = por %p192, %p193
      %p195 = scmp.ne.s32.totalorder %s184, %s185
      %p196 = scmp.eq.s32.totalorder %s34, 0
      %p197 = por %p195, %p196
      %p198 = scmp.ne.s32.totalorder %s184, %s185
      %p199 = scmp.eq.s32.totalorder %s35, 3
      %p200 = por %p198, %p199
      %p202 = scmp.ne.s32.totalorder %s185, %s201
      %p203 = scmp.eq.s32.totalorder %s35, 0
      %p204 = por %p202, %p203
      %s205 = ssub.s32 %s37, %s44
      %p206 = scmp.eq.s32.totalorder %s205, 0
      %s208 = sadd.s32 %s207, 1
      %s209 = scalar_select %p206, %s207, %s208
      %p212 = pneg %p206
      %p213 = scmp.eq.s32.totalorder %s29, 3
      %p214 = por %p212, %p213
      %p215 = scmp.ne.s32.totalorder %s207, %s210
      %p216 = scmp.eq.s32.totalorder %s29, 0
      %p217 = por %p215, %p216
      %p218 = scmp.ne.s32.totalorder %s207, %s210
      %p219 = scmp.eq.s32.totalorder %s34, 3
      %p220 = por %p218, %p219
      %p221 = scmp.ne.s32.totalorder %s210, %s211
      %p222 = scmp.eq.s32.totalorder %s34, 0
      %p223 = por %p221, %p222
      %p224 = scmp.ne.s32.totalorder %s210, %s211
      %p225 = scmp.eq.s32.totalorder %s35, 3
      %p226 = por %p224, %p225
      %p228 = scmp.ne.s32.totalorder %s211, %s227
      %p229 = scmp.eq.s32.totalorder %s35, 0
      %p230 = por %p228, %p229
      %s231 = ssub.s32 %s37, %s44
      %p232 = scmp.eq.s32.totalorder %s231, 0
      %s234 = sadd.s32 %s233, 1
      %s235 = scalar_select %p232, %s233, %s234
      %p238 = pneg %p232
      %p239 = scmp.eq.s32.totalorder %s29, 3
      %p240 = por %p238, %p239
      %p241 = scmp.ne.s32.totalorder %s233, %s236
      %p242 = scmp.eq.s32.totalorder %s29, 0
      %p243 = por %p241, %p242
      %p244 = scmp.ne.s32.totalorder %s233, %s236
      %p245 = scmp.eq.s32.totalorder %s34, 3
      %p246 = por %p244, %p245
      %p247 = scmp.ne.s32.totalorder %s236, %s237
      %p248 = scmp.eq.s32.totalorder %s34, 0
      %p249 = por %p247, %p248
      %p250 = scmp.ne.s32.totalorder %s236, %s237
      %p251 = scmp.eq.s32.totalorder %s35, 3
      %p252 = por %p250, %p251
      %p254 = scmp.ne.s32.totalorder %s237, %s253
      %p255 = scmp.eq.s32.totalorder %s35, 0
      %p256 = por %p254, %p255
      %s257 = ssub.s32 %s37, %s44
      %p258 = scmp.eq.s32.totalorder %s257, 0
      %s260 = sadd.s32 %s259, 1
      %s261 = scalar_select %p258, %s259, %s260
      %p264 = pneg %p258
      %p265 = scmp.eq.s32.totalorder %s29, 3
      %p266 = por %p264, %p265
      %p267 = scmp.ne.s32.totalorder %s259, %s262
      %p268 = scmp.eq.s32.totalorder %s29, 0
      %p269 = por %p267, %p268
      %p270 = scmp.ne.s32.totalorder %s259, %s262
      %p271 = scmp.eq.s32.totalorder %s34, 3
      %p272 = por %p270, %p271
      %p273 = scmp.ne.s32.totalorder %s262, %s263
      %p274 = scmp.eq.s32.totalorder %s34, 0
      %p275 = por %p273, %p274
      %p276 = scmp.ne.s32.totalorder %s262, %s263
      %p277 = scmp.eq.s32.totalorder %s35, 3
      %p278 = por %p276, %p277
      %p280 = scmp.ne.s32.totalorder %s263, %s279
      %p281 = scmp.eq.s32.totalorder %s35, 0
      %p282 = por %p280, %p281
      %s283 = ssub.s32 %s37, %s44
      %p284 = scmp.eq.s32.totalorder %s283, 0
      %s286 = sadd.s32 %s285, 1
      %s287 = scalar_select %p284, %s285, %s286
      %p290 = pneg %p284
      %p291 = scmp.eq.s32.totalorder %s29, 3
      %p292 = por %p290, %p291
      %p293 = scmp.ne.s32.totalorder %s285, %s288
      %p294 = scmp.eq.s32.totalorder %s29, 0
      %p295 = por %p293, %p294
      %p296 = scmp.ne.s32.totalorder %s285, %s288
      %p297 = scmp.eq.s32.totalorder %s34, 3
      %p298 = por %p296, %p297
      %p299 = scmp.ne.s32.totalorder %s288, %s289
      %p300 = scmp.eq.s32.totalorder %s34, 0
      %p301 = por %p299, %p300
      %p302 = scmp.ne.s32.totalorder %s288, %s289
      %p303 = scmp.eq.s32.totalorder %s35, 3
      %p304 = por %p302, %p303
      %p306 = scmp.ne.s32.totalorder %s289, %s305
      %p307 = scmp.eq.s32.totalorder %s35, 0
      %p308 = por %p306, %p307
      %s309 = ssub.s32 %s37, %s44
      %p310 = scmp.eq.s32.totalorder %s309, 0
      %s312 = sadd.s32 %s311, 1
      %s313 = scalar_select %p310, %s311, %s312
      %p316 = pneg %p310
      %p317 = scmp.eq.s32.totalorder %s29, 3
      %p318 = por %p316, %p317
      %p319 = scmp.ne.s32.totalorder %s311, %s314
      %p320 = scmp.eq.s32.totalorder %s29, 0
      %p321 = por %p319, %p320
      %p322 = scmp.ne.s32.totalorder %s311, %s314
      %p323 = scmp.eq.s32.totalorder %s34, 3
      %p324 = por %p322, %p323
      %p325 = scmp.ne.s32.totalorder %s314, %s315
      %p326 = scmp.eq.s32.totalorder %s34, 0
      %p327 = por %p325, %p326
      %p328 = scmp.ne.s32.totalorder %s314, %s315
      %p329 = scmp.eq.s32.totalorder %s35, 3
      %p330 = por %p328, %p329
      %p332 = scmp.ne.s32.totalorder %s315, %s331
      %p333 = scmp.eq.s32.totalorder %s35, 0
      %p334 = por %p332, %p333
      %s335 = ssub.s32 %s37, %s44
      %p336 = scmp.eq.s32.totalorder %s335, 0
      %s338 = sadd.s32 %s337, 1
      %s339 = scalar_select %p336, %s337, %s338
      %p342 = pneg %p336
      %p343 = scmp.eq.s32.totalorder %s29, 3
      %p344 = por %p342, %p343
      %p345 = scmp.ne.s32.totalorder %s337, %s340
      %p346 = scmp.eq.s32.totalorder %s29, 0
      %p347 = por %p345, %p346
      %p348 = scmp.ne.s32.totalorder %s337, %s340
      %p349 = scmp.eq.s32.totalorder %s34, 3
      %p350 = por %p348, %p349
      %p351 = scmp.ne.s32.totalorder %s340, %s341
      %p352 = scmp.eq.s32.totalorder %s34, 0
      %p353 = por %p351, %p352
      %p354 = scmp.ne.s32.totalorder %s340, %s341
      %p355 = scmp.eq.s32.totalorder %s35, 3
      %p356 = por %p354, %p355
      %p358 = scmp.ne.s32.totalorder %s341, %s357
      %p359 = scmp.eq.s32.totalorder %s35, 0
      %p360 = por %p358, %p359
      %s361 = ssub.s32 %s37, %s44
      %p362 = scmp.eq.s32.totalorder %s361, 0
      %s364 = sadd.s32 %s363, 1
      %s365 = scalar_select %p362, %s363, %s364
      %p368 = pneg %p362
      %p369 = scmp.eq.s32.totalorder %s29, 3
      %p370 = por %p368, %p369
      %p371 = scmp.ne.s32.totalorder %s363, %s366
      %p372 = scmp.eq.s32.totalorder %s29, 0
      %p373 = por %p371, %p372
      %p374 = scmp.ne.s32.totalorder %s363, %s366
      %p375 = scmp.eq.s32.totalorder %s34, 3
      %p376 = por %p374, %p375
      %p377 = scmp.ne.s32.totalorder %s366, %s367
      %p378 = scmp.eq.s32.totalorder %s34, 0
      %p379 = por %p377, %p378
      %p380 = scmp.ne.s32.totalorder %s366, %s367
      %p381 = scmp.eq.s32.totalorder %s35, 3
      %p382 = por %p380, %p381
      %p384 = scmp.ne.s32.totalorder %s367, %s383
      %p385 = scmp.eq.s32.totalorder %s35, 0
      %p386 = por %p384, %p385
      %s387 = ssub.s32 %s37, %s44
      %p388 = scmp.eq.s32.totalorder %s387, 0
      %s390 = sadd.s32 %s389, 1
      %s391 = scalar_select %p388, %s389, %s390
      %p394 = pneg %p388
      %p395 = scmp.eq.s32.totalorder %s29, 3
      %p396 = por %p394, %p395
      %p397 = scmp.ne.s32.totalorder %s389, %s392
      %p398 = scmp.eq.s32.totalorder %s29, 0
      %p399 = por %p397, %p398
      %p400 = scmp.ne.s32.totalorder %s389, %s392
      %p401 = scmp.eq.s32.totalorder %s34, 3
      %p402 = por %p400, %p401
      %p403 = scmp.ne.s32.totalorder %s392, %s393
      %p404 = scmp.eq.s32.totalorder %s34, 0
      %p405 = por %p403, %p404
      %p406 = scmp.ne.s32.totalorder %s392, %s393
      %p407 = scmp.eq.s32.totalorder %s35, 3
      %p408 = por %p406, %p407
      %p410 = scmp.ne.s32.totalorder %s393, %s409
      %p411 = scmp.eq.s32.totalorder %s35, 0
      %p412 = por %p410, %p411
      %s413 = ssub.s32 %s36, %s48
      %p414 = scmp.eq.s32.totalorder %s413, 0
      %s416 = sadd.s32 %s415, 1
      %s417 = scalar_select %p414, %s415, %s416
      %p420 = pneg %p414
      %p421 = scmp.eq.s32.totalorder %s29, 3
      %p422 = por %p420, %p421
      %p423 = scmp.ne.s32.totalorder %s415, %s418
      %p424 = scmp.eq.s32.totalorder %s29, 0
      %p425 = por %p423, %p424
      %p426 = scmp.ne.s32.totalorder %s415, %s418
      %p427 = scmp.eq.s32.totalorder %s34, 3
      %p428 = por %p426, %p427
      %p429 = scmp.ne.s32.totalorder %s418, %s419
      %p430 = scmp.eq.s32.totalorder %s34, 0
      %p431 = por %p429, %p430
      %p432 = scmp.ne.s32.totalorder %s418, %s419
      %p433 = scmp.eq.s32.totalorder %s35, 3
      %p434 = por %p432, %p433
      %p436 = scmp.ne.s32.totalorder %s419, %s435
      %p437 = scmp.eq.s32.totalorder %s35, 0
      %p438 = por %p436, %p437
      %p439 = scmp.le.s32.totalorder 1, %s29
      %p440 = scmp.lt.s32.totalorder %s29, 5
      %p441 = pnand %p439, %p440
      %p442 = pneg %p441
      // Predicated region
      $region9: #{tpu_custom_call.1} parent=5 // pred_check
        _
      $region10: #{tpu_custom_call.1} parent=5 // pred_check_branch
        %444 = sbr.rel (%p441) target = $region12
      $region11: #{tpu_custom_call.1} parent=5 // pred_region
        %s445 = ssub.s32 %s29, 1
      $region12: #{tpu_custom_call.1} parent=5 // pred_fallthru
        _
      %p446 = scmp.lt.s32.totalorder %s29, 4
      // Predicated region
      $region13: #{tpu_custom_call.1} parent=5 // pred_check
        %p447 = pneg %p446
      $region14: #{tpu_custom_call.1} parent=5 // pred_check_branch
        %449 = sbr.rel (%p447) target = $region16
      $region15: #{tpu_custom_call.1} parent=5 // pred_region
        // Predicated region
        $region17: #{tpu_custom_call.1} parent=15 // pred_check
          %p450 = pneg %p61
        $region18: #{tpu_custom_call.1} parent=15 // pred_check_branch
          %452 = sbr.rel (%p450) target = $region20
        $region19: #{tpu_custom_call.1} parent=15 // pred_region
          %s453 = sand.u32 %s51, 1
          %s454 = scalar_lea.sflag [#allocation4], %s453
          %s455 = sand.u32 %s51, 1
          %s456 = smul.addr %s455, 8
          %s457 = scalar_lea.vmem [#allocation3], %s456
          %s459 = ssub.s32 128, 128
          %460 = vsyncadd %s454, %s459
          %s461 = smul.addr %s36, 128
          %s462 = scalar_lea.hbm %s0, %s461
          %s464 = sshll.u32 %s457, 4
          %s465 = int_to_ptr.vmem [resolvable:$true] %s464
          %467 = dma.hbm_to_vmem [thread:$0]  %s462, 128, %s465, %s454
        $region20: #{tpu_custom_call.1} parent=15 // pred_fallthru
          _
        // Predicated region
        $region21: #{tpu_custom_call.1} parent=15 // pred_check
          %p468 = pneg %p87
        $region22: #{tpu_custom_call.1} parent=15 // pred_check_branch
          %470 = sbr.rel (%p468) target = $region24
        $region23: #{tpu_custom_call.1} parent=15 // pred_region
          %s471 = sand.u32 %s29, 1
          %s472 = scalar_lea.sflag [#allocation7], %s471
          %s473 = sand.u32 %s77, 1
          %s474 = scalar_lea.vmem [#allocation6], %s473
          %s476 = ssub.s32 16, 16
          %477 = vsyncadd %s472, %s476
          %s478 = smul.addr %s37, 16
          %s479 = scalar_lea.hbm %s1, %s478
          %s481 = sshll.u32 %s474, 4
          %s482 = int_to_ptr.vmem [resolvable:$true] %s481
          %484 = dma.hbm_to_vmem [thread:$0]  %s479, 16, %s482, %s472
        $region24: #{tpu_custom_call.1} parent=15 // pred_fallthru
          _
        // Predicated region
        $region25: #{tpu_custom_call.1} parent=15 // pred_check
          %p485 = pneg %p113
        $region26: #{tpu_custom_call.1} parent=15 // pred_check_branch
          %487 = sbr.rel (%p485) target = $region28
        $region27: #{tpu_custom_call.1} parent=15 // pred_region
          %s488 = sand.u32 %s29, 1
          %s489 = scalar_lea.sflag [#allocation7], %s488
          %s490 = sand.u32 %s103, 1
          %s491 = scalar_lea.vmem [#allocation8], %s490
          %s493 = ssub.s32 16, 16
          %494 = vsyncadd %s489, %s493
          %s495 = smul.addr %s37, 16
          %s496 = scalar_lea.hbm %s2, %s495
          %s498 = sshll.u32 %s491, 4
          %s499 = int_to_ptr.vmem [resolvable:$true] %s498
          %501 = dma.hbm_to_vmem [thread:$0]  %s496, 16, %s499, %s489
        $region28: #{tpu_custom_call.1} parent=15 // pred_fallthru
          _
        // Predicated region
        $region29: #{tpu_custom_call.1} parent=15 // pred_check
          %p502 = pneg %p139
        $region30: #{tpu_custom_call.1} parent=15 // pred_check_branch
          %504 = sbr.rel (%p502) target = $region32
        $region31: #{tpu_custom_call.1} parent=15 // pred_region
          %p505 = scmp.lt.s32.totalorder %s37, 1
          %s506 = scalar_select %p505, %s37, 1
          %s507 = smul.addr %s506, 8
          %s508 = smul.addr %s507, 8
          %s509 = scalar_lea.vmem %s3, %s508
        $region32: #{tpu_custom_call.1} parent=15 // pred_fallthru
          _
        // Predicated region
        $region33: #{tpu_custom_call.1} parent=15 // pred_check
          %p510 = pneg %p165
        $region34: #{tpu_custom_call.1} parent=15 // pred_check_branch
          %512 = sbr.rel (%p510) target = $region36
        $region35: #{tpu_custom_call.1} parent=15 // pred_region
          %p513 = scmp.lt.s32.totalorder %s37, 1
          %s514 = scalar_select %p513, %s37, 1
          %s515 = smul.addr %s514, 8
          %s516 = smul.addr %s515, 8
          %s517 = scalar_lea.vmem %s4, %s516
        $region36: #{tpu_custom_call.1} parent=15 // pred_fallthru
          _
        // Predicated region
        $region37: #{tpu_custom_call.1} parent=15 // pred_check
          %p518 = pneg %p191
        $region38: #{tpu_custom_call.1} parent=15 // pred_check_branch
          %520 = sbr.rel (%p518) target = $region40
        $region39: #{tpu_custom_call.1} parent=15 // pred_region
          %p521 = scmp.lt.s32.totalorder %s37, 1
          %s522 = scalar_select %p521, %s37, 1
          %s523 = smul.addr %s522, 8
          %s524 = smul.addr %s523, 8
          %s525 = scalar_lea.vmem %s5, %s524
        $region40: #{tpu_custom_call.1} parent=15 // pred_fallthru
          _
        // Predicated region
        $region41: #{tpu_custom_call.1} parent=15 // pred_check
          %p526 = pneg %p217
        $region42: #{tpu_custom_call.1} parent=15 // pred_check_branch
          %528 = sbr.rel (%p526) target = $region44
        $region43: #{tpu_custom_call.1} parent=15 // pred_region
          %p529 = scmp.lt.s32.totalorder %s37, 1
          %s530 = scalar_select %p529, %s37, 1
          %s531 = smul.addr %s530, 8
          %s532 = smul.addr %s531, 8
          %s533 = scalar_lea.vmem %s6, %s532
        $region44: #{tpu_custom_call.1} parent=15 // pred_fallthru
          _
        // Predicated region
        $region45: #{tpu_custom_call.1} parent=15 // pred_check
          %p534 = pneg %p243
        $region46: #{tpu_custom_call.1} parent=15 // pred_check_branch
          %536 = sbr.rel (%p534) target = $region48
        $region47: #{tpu_custom_call.1} parent=15 // pred_region
          %p537 = scmp.lt.s32.totalorder %s37, 1
          %s538 = scalar_select %p537, %s37, 1
          %s539 = scalar_lea.vmem %s7, %s538
        $region48: #{tpu_custom_call.1} parent=15 // pred_fallthru
          _
        // Predicated region
        $region49: #{tpu_custom_call.1} parent=15 // pred_check
          %p540 = pneg %p269
        $region50: #{tpu_custom_call.1} parent=15 // pred_check_branch
          %542 = sbr.rel (%p540) target = $region52
        $region51: #{tpu_custom_call.1} parent=15 // pred_region
          %p543 = scmp.lt.s32.totalorder %s37, 1
          %s544 = scalar_select %p543, %s37, 1
          %s545 = scalar_lea.vmem %s8, %s544
        $region52: #{tpu_custom_call.1} parent=15 // pred_fallthru
          _
        // Predicated region
        $region53: #{tpu_custom_call.1} parent=15 // pred_check
          %p546 = pneg %p295
        $region54: #{tpu_custom_call.1} parent=15 // pred_check_branch
          %548 = sbr.rel (%p546) target = $region56
        $region55: #{tpu_custom_call.1} parent=15 // pred_region
          %p549 = scmp.lt.s32.totalorder %s37, 1
          %s550 = scalar_select %p549, %s37, 1
          %s551 = scalar_lea.vmem %s9, %s550
        $region56: #{tpu_custom_call.1} parent=15 // pred_fallthru
          _
        // Predicated region
        $region57: #{tpu_custom_call.1} parent=15 // pred_check
          %p552 = pneg %p321
        $region58: #{tpu_custom_call.1} parent=15 // pred_check_branch
          %554 = sbr.rel (%p552) target = $region60
        $region59: #{tpu_custom_call.1} parent=15 // pred_region
          %p555 = scmp.lt.s32.totalorder %s37, 1
          %s556 = scalar_select %p555, %s37, 1
          %s557 = smul.addr %s556, 16
          %s558 = smul.addr %s557, 8
          %s559 = scalar_lea.vmem %s10, %s558
        $region60: #{tpu_custom_call.1} parent=15 // pred_fallthru
          _
        // Predicated region
        $region61: #{tpu_custom_call.1} parent=15 // pred_check
          %p560 = pneg %p347
        $region62: #{tpu_custom_call.1} parent=15 // pred_check_branch
          %562 = sbr.rel (%p560) target = $region64
        $region63: #{tpu_custom_call.1} parent=15 // pred_region
          %p563 = scmp.lt.s32.totalorder %s37, 1
          %s564 = scalar_select %p563, %s37, 1
          %s565 = smul.addr %s564, 2
          %s566 = scalar_lea.vmem %s11, %s565
        $region64: #{tpu_custom_call.1} parent=15 // pred_fallthru
          _
        // Predicated region
        $region65: #{tpu_custom_call.1} parent=15 // pred_check
          %p567 = pneg %p373
        $region66: #{tpu_custom_call.1} parent=15 // pred_check_branch
          %569 = sbr.rel (%p567) target = $region68
        $region67: #{tpu_custom_call.1} parent=15 // pred_region
          %p570 = scmp.lt.s32.totalorder %s37, 1
          %s571 = scalar_select %p570, %s37, 1
          %s572 = smul.addr %s571, 32
          %s573 = smul.addr %s572, 8
          %s574 = scalar_lea.vmem %s12, %s573
        $region68: #{tpu_custom_call.1} parent=15 // pred_fallthru
          _
        // Predicated region
        $region69: #{tpu_custom_call.1} parent=15 // pred_check
          %p575 = pneg %p399
        $region70: #{tpu_custom_call.1} parent=15 // pred_check_branch
          %577 = sbr.rel (%p575) target = $region72
        $region71: #{tpu_custom_call.1} parent=15 // pred_region
          %p578 = scmp.lt.s32.totalorder %s37, 1
          %s579 = scalar_select %p578, %s37, 1
          %s580 = scalar_lea.vmem %s13, %s579
        $region72: #{tpu_custom_call.1} parent=15 // pred_fallthru
          _
      $region16: #{tpu_custom_call.1} parent=5 // pred_fallthru
        _
      %p581 = scmp.le.s32.totalorder 1, %s29
      %p582 = scmp.lt.s32.totalorder %s29, 5
      %p583 = pnand %p581, %p582
      %p584 = pneg %p583
      // Predicated region
      $region73: #{tpu_custom_call.1} parent=5 // pred_check
        _
      $region74: #{tpu_custom_call.1} parent=5 // pred_check_branch
        %586 = sbr.rel (%p583) target = $region76
      $region75: #{tpu_custom_call.1} parent=5 // pred_region
        %s587 = ssub.s32 %s29, 1
        %s588 = sand.u32 %s54, 1
        %s589 = scalar_lea.sflag [#allocation4], %s588
        %s590 = sand.u32 %s54, 1
        %s591 = smul.addr %s590, 8
        %s592 = scalar_lea.vmem [#allocation3], %s591
        // Predicated region
        $region77: #{tpu_custom_call.1} parent=75 // pred_check
          %p593 = pneg %p67
        $region78: #{tpu_custom_call.1} parent=75 // pred_check_branch
          %595 = sbr.rel (%p593) target = $region80
        $region79: #{tpu_custom_call.1} parent=75 // pred_region
          %596 = dma.done %s589, 128
        $region80: #{tpu_custom_call.1} parent=75 // pred_fallthru
          _
        %s597 = sand.u32 %s34, 1
        %s598 = scalar_lea.sflag [#allocation7], %s597
        %s599 = sand.u32 %s80, 1
        %s600 = scalar_lea.vmem [#allocation6], %s599
        // Predicated region
        $region81: #{tpu_custom_call.1} parent=75 // pred_check
          %p601 = pneg %p93
        $region82: #{tpu_custom_call.1} parent=75 // pred_check_branch
          %603 = sbr.rel (%p601) target = $region84
        $region83: #{tpu_custom_call.1} parent=75 // pred_region
          %604 = dma.done %s598, 16
        $region84: #{tpu_custom_call.1} parent=75 // pred_fallthru
          _
        %s605 = sand.u32 %s34, 1
        %s606 = scalar_lea.sflag [#allocation7], %s605
        %s607 = sand.u32 %s106, 1
        %s608 = scalar_lea.vmem [#allocation8], %s607
        // Predicated region
        $region85: #{tpu_custom_call.1} parent=75 // pred_check
          %p609 = pneg %p119
        $region86: #{tpu_custom_call.1} parent=75 // pred_check_branch
          %611 = sbr.rel (%p609) target = $region88
        $region87: #{tpu_custom_call.1} parent=75 // pred_region
          %612 = dma.done %s606, 16
        $region88: #{tpu_custom_call.1} parent=75 // pred_fallthru
          _
        %s613 = sand.u32 %s54, 1
        %s614 = scalar_lea.sflag [#allocation4], %s613
        %s615 = sand.u32 %s54, 1
        %s616 = smul.addr %s615, 8
        %s617 = scalar_lea.vmem [#allocation3], %s616
        %p618 = pneg %p67
        %p619 = pneg %p64
        %s620 = sand.u32 %s34, 1
        %s621 = scalar_lea.sflag [#allocation7], %s620
        %s622 = sand.u32 %s80, 1
        %s623 = scalar_lea.vmem [#allocation6], %s622
        %p624 = pneg %p93
        %p625 = pneg %p90
        %s626 = sand.u32 %s34, 1
        %s627 = scalar_lea.sflag [#allocation7], %s626
        %s628 = sand.u32 %s106, 1
        %s629 = scalar_lea.vmem [#allocation8], %s628
        %p630 = pneg %p119
        %p631 = pneg %p116
        %p632 = scmp.lt.s32.totalorder %s39, 1
        %s633 = scalar_select %p632, %s39, 1
        %s634 = smul.addr %s633, 8
        %s635 = smul.addr %s634, 8
        %s636 = scalar_lea.vmem %s3, %s635
        %p637 = pneg %p145
        %p638 = pneg %p142
        %p639 = scmp.lt.s32.totalorder %s39, 1
        %s640 = scalar_select %p639, %s39, 1
        %s641 = smul.addr %s640, 8
        %s642 = smul.addr %s641, 8
        %s643 = scalar_lea.vmem %s4, %s642
        %p644 = pneg %p171
        %p645 = pneg %p168
        %p646 = scmp.lt.s32.totalorder %s39, 1
        %s647 = scalar_select %p646, %s39, 1
        %s648 = smul.addr %s647, 8
        %s649 = smul.addr %s648, 8
        %s650 = scalar_lea.vmem %s5, %s649
        %p651 = pneg %p197
        %p652 = pneg %p194
        %p653 = scmp.lt.s32.totalorder %s39, 1
        %s654 = scalar_select %p653, %s39, 1
        %s655 = smul.addr %s654, 8
        %s656 = smul.addr %s655, 8
        %s657 = scalar_lea.vmem %s6, %s656
        %p658 = pneg %p223
        %p659 = pneg %p220
        %p660 = scmp.lt.s32.totalorder %s39, 1
        %s661 = scalar_select %p660, %s39, 1
        %s662 = scalar_lea.vmem %s7, %s661
        %p663 = pneg %p249
        %p664 = pneg %p246
        %p665 = scmp.lt.s32.totalorder %s39, 1
        %s666 = scalar_select %p665, %s39, 1
        %s667 = scalar_lea.vmem %s8, %s666
        %p668 = pneg %p275
        %p669 = pneg %p272
        %p670 = scmp.lt.s32.totalorder %s39, 1
        %s671 = scalar_select %p670, %s39, 1
        %s672 = scalar_lea.vmem %s9, %s671
        %p673 = pneg %p301
        %p674 = pneg %p298
        %p675 = scmp.lt.s32.totalorder %s39, 1
        %s676 = scalar_select %p675, %s39, 1
        %s677 = smul.addr %s676, 16
        %s678 = smul.addr %s677, 8
        %s679 = scalar_lea.vmem %s10, %s678
        %p680 = pneg %p327
        %p681 = pneg %p324
        %p682 = scmp.lt.s32.totalorder %s39, 1
        %s683 = scalar_select %p682, %s39, 1
        %s684 = smul.addr %s683, 2
        %s685 = scalar_lea.vmem %s11, %s684
        %p686 = pneg %p353
        %p687 = pneg %p350
        %p688 = scmp.lt.s32.totalorder %s39, 1
        %s689 = scalar_select %p688, %s39, 1
        %s690 = smul.addr %s689, 32
        %s691 = smul.addr %s690, 8
        %s692 = scalar_lea.vmem %s12, %s691
        %p693 = pneg %p379
        %p694 = pneg %p376
        %p695 = scmp.lt.s32.totalorder %s39, 1
        %s696 = scalar_select %p695, %s39, 1
        %s697 = scalar_lea.vmem %s13, %s696
        %p698 = pneg %p405
        %p699 = pneg %p402
        %p700 = pneg %p431
        %p701 = pneg %p428
        %s702 = sand.u32 %s418, 1
        %s703 = scalar_lea.sflag [#allocation5], %s702
        %s704 = sand.u32 %s418, 1
        %s705 = smul.addr %s704, 8
        %s706 = scalar_lea.vmem [#allocation9], %s705
        %p707 = scmp.lt.s32.totalorder %s39, 1
        %s708 = scalar_select %p707, %s39, 1
        %s709 = smul.addr %s708, 8
        %s710 = smul.addr %s709, 8
        %s711 = scalar_lea.vmem %s3, %s710
        %p712 = scmp.lt.s32.totalorder %s39, 1
        %s713 = scalar_select %p712, %s39, 1
        %s714 = smul.addr %s713, 8
        %s715 = smul.addr %s714, 8
        %s716 = scalar_lea.vmem %s4, %s715
        %p717 = scmp.lt.s32.totalorder %s39, 1
        %s718 = scalar_select %p717, %s39, 1
        %s719 = smul.addr %s718, 8
        %s720 = smul.addr %s719, 8
        %s721 = scalar_lea.vmem %s5, %s720
        %p722 = scmp.lt.s32.totalorder %s39, 1
        %s723 = scalar_select %p722, %s39, 1
        %s724 = smul.addr %s723, 8
        %s725 = smul.addr %s724, 8
        %s726 = scalar_lea.vmem %s6, %s725
        %p727 = scmp.lt.s32.totalorder %s39, 1
        %s728 = scalar_select %p727, %s39, 1
        %s729 = scalar_lea.vmem %s7, %s728
        %p730 = scmp.lt.s32.totalorder %s39, 1
        %s731 = scalar_select %p730, %s39, 1
        %s732 = scalar_lea.vmem %s8, %s731
        %p733 = scmp.lt.s32.totalorder %s39, 1
        %s734 = scalar_select %p733, %s39, 1
        %s735 = scalar_lea.vmem %s9, %s734
        %p736 = scmp.lt.s32.totalorder %s39, 1
        %s737 = scalar_select %p736, %s39, 1
        %s738 = smul.addr %s737, 16
        %s739 = smul.addr %s738, 8
        %s740 = scalar_lea.vmem %s10, %s739
        %p741 = scmp.lt.s32.totalorder %s39, 1
        %s742 = scalar_select %p741, %s39, 1
        %s743 = smul.addr %s742, 2
        %s744 = scalar_lea.vmem %s11, %s743
        %p745 = scmp.lt.s32.totalorder %s39, 1
        %s746 = scalar_select %p745, %s39, 1
        %s747 = smul.addr %s746, 32
        %s748 = smul.addr %s747, 8
        %s749 = scalar_lea.vmem %s12, %s748
        %p750 = scmp.lt.s32.totalorder %s39, 1
        %s751 = scalar_select %p750, %s39, 1
        %s752 = scalar_lea.vmem %s13, %s751
        %p753 = scmp.eq.s32.totalorder %s39, 0
        // Predicated region
        $region89: #{tpu_custom_call.1} parent=75 // pred_check
          %p754 = pneg %p753
        $region90: #{tpu_custom_call.1} parent=75 // pred_check_branch
          %756 = sbr.rel (%p754) target = $region92
        $region91: #{tpu_custom_call.1} parent=75 // pred_region
          %v757 = vld [vmem:[%s592] sm:$0xff]
          %vm758 = vcmask 523264
          %759 = vst.msk [vmem:[#allocation2] sm:$0xff] %vm758, %v757
        $region92: #{tpu_custom_call.1} parent=75 // pred_fallthru
          _
        %v760 = vld [vmem:[#allocation2] sm:$0xff]
        %v761 = vld [vmem:[%s600] sm:$0x1]
        %v762 = vld [vmem:[%s608] sm:$0x1]
        %vm763 = vcmask 523264
        %v764 = vsel %vm763, %v760, 0.0
        %765 = vadd.xlane.f32.xlu0 %v764
        %v766 = vpop.xlane.xlu0 %765
        %v767 = vrcp.pop 64.0
        %v768 = vmul.f32 %v766, %v767
        %v769 = vsub.f32 %v760, %v768
        %v770 = vmul.f32 %v769, %v769
        %v771 = vsel %vm763, %v770, 0.0
        %772 = vadd.xlane.f32.xlu0 %v771
        %v773 = vpop.xlane.xlu0 %772
        %v774 = vmul.f32 %v773, %v767
        %v775 = vadd.f32 %v774, 1e-05
        %v776 = vrsqrt.pop %v775
        %v777 = vmul.f32 %v769, %v776
        %v779 = vlaneseq
        %v780 = vshrl.u32 %v779, 7
        %v781 = vsub.s32 0, %v780
        %v782 = vrot.slane %v761, %v781
        %v784 = vmul.f32 %v777, %v782
        %v786 = vlaneseq
        %v787 = vshrl.u32 %v786, 7
        %v788 = vsub.s32 0, %v787
        %v789 = vrot.slane %v762, %v788
        %v791 = vadd.f32 %v784, %v789
        %v792 = vld [vmem:[%s711] sm:$0xff]
        %v793 = vld [vmem:[%s711 + $0x8] sm:$0xff]
        %v794 = vld [vmem:[%s711 + $0x10] sm:$0xff]
        %v795 = vld [vmem:[%s711 + $0x18] sm:$0xff]
        %v796 = vld [vmem:[%s711 + $0x20] sm:$0xff]
        %v797 = vld [vmem:[%s711 + $0x28] sm:$0xff]
        %v798 = vld [vmem:[%s711 + $0x30] sm:$0xff]
        %v799 = vld [vmem:[%s711 + $0x38] sm:$0xff]
        %v801 = vsel %vm763, %v791, 0
        %803 = vmatprep.subr.mxu0 0.0
        %804 = vmatpush1.msra.mxu0 %v792
        %805 = vmatprep.subr.mxu0 0.0
        %806 = vmatpush1.msra.mxu0 %v793
        %807 = vmatprep.subr.mxu0 0.0
        %808 = vmatpush1.msra.mxu0 %v794
        %809 = vmatprep.subr.mxu0 0.0
        %810 = vmatpush1.msra.mxu0 %v795
        %811 = vmatprep.subr.mxu0 0.0
        %812 = vmatpush1.msra.mxu0 %v796
        %813 = vmatprep.subr.mxu0 0.0
        %814 = vmatpush1.msra.mxu0 %v797
        %815 = vmatprep.subr.mxu0 0.0
        %816 = vmatpush1.msra.mxu0 %v798
        %817 = vmatprep.subr.mxu0 0.0
        %818 = vmatpush1.msra.mxu0 %v799
        %819 = vmatprep.subr.mxu0 0.0
        %820 = vmatpush1.msra.mxu0 0.0
        %821 = vmatprep.subr.mxu0 0.0
        %822 = vmatpush1.msra.mxu0 0.0
        %823 = vmatprep.subr.mxu0 0.0
        %824 = vmatpush1.msra.mxu0 0.0
        %825 = vmatprep.subr.mxu0 0.0
        %826 = vmatpush1.msra.mxu0 0.0
        %827 = vmatprep.subr.mxu0 0.0
        %828 = vmatpush1.msra.mxu0 0.0
        %829 = vmatprep.subr.mxu0 0.0
        %830 = vmatpush1.msra.mxu0 0.0
        %831 = vmatprep.subr.mxu0 0.0
        %832 = vmatpush1.msra.mxu0 0.0
        %833 = vmatprep.subr.mxu0 0.0
        %834 = vmatpush1.msra.mxu0 0.0
        %835 = vmatprep.subr.mxu0 0.0
        %836 = vmatpush1.msra.mxu0 0.0
        %837 = vmatprep.subr.mxu0 0.0
        %838 = vmatpush1.msra.mxu0 0.0
        %839 = vmatprep.subr.mxu0 0.0
        %840 = vmatpush1.msra.mxu0 0.0
        %841 = vmatprep.subr.mxu0 0.0
        %842 = vmatpush1.msra.mxu0 0.0
        %843 = vmatprep.subr.mxu0 0.0
        %844 = vmatpush1.msra.mxu0 0.0
        %845 = vmatprep.subr.mxu0 0.0
        %846 = vmatpush1.msra.mxu0 0.0
        %847 = vmatprep.subr.mxu0 0.0
        %848 = vmatpush1.msra.mxu0 0.0
        %849 = vmatprep.subr.mxu0 0.0
        %850 = vmatpush1.msra.mxu0 0.0
        %851 = vmatprep.subr.mxu0 0.0
        %852 = vmatpush1.msra.mxu0 0.0
        %853 = vmatprep.subr.mxu0 0.0
        %854 = vmatpush1.msra.mxu0 0.0
        %855 = vmatprep.subr.mxu0 0.0
        %856 = vmatpush1.msra.mxu0 0.0
        %857 = vmatprep.subr.mxu0 0.0
        %858 = vmatpush1.msra.mxu0 0.0
        %859 = vmatprep.subr.mxu0 0.0
        %860 = vmatpush1.msra.mxu0 0.0
        %861 = vmatprep.subr.mxu0 0.0
        %862 = vmatpush1.msra.mxu0 0.0
        %863 = vmatprep.subr.mxu0 0.0
        %864 = vmatpush1.msra.mxu0 0.0
        %865 = vmatprep.subr.mxu0 0.0
        %866 = vmatpush1.msra.mxu0 0.0
        %867 = vmatprep.mubr.f32.mxu0 0.0
        %868 = vmatmul.mubr.f32.gmra.mrb[0].mxu0 %v801
        %v869 = vpop.f32.mrb[0].mxu0
        %v870 = vadd.f32 0.0, %v869
        %v871 = vpop.f32.mrb[0].mxu0
        %872 = vdwg.mxu0
        %v873 = vld [vmem:[%s716] sm:$0xff]
        %v874 = vld [vmem:[%s716 + $0x8] sm:$0xff]
        %v875 = vld [vmem:[%s716 + $0x10] sm:$0xff]
        %v876 = vld [vmem:[%s716 + $0x18] sm:$0xff]
        %v877 = vld [vmem:[%s716 + $0x20] sm:$0xff]
        %v878 = vld [vmem:[%s716 + $0x28] sm:$0xff]
        %v879 = vld [vmem:[%s716 + $0x30] sm:$0xff]
        %v880 = vld [vmem:[%s716 + $0x38] sm:$0xff]
        %881 = vmatprep.subr.mxu0 0.0
        %882 = vmatpush1.msra.mxu0 %v873
        %883 = vmatprep.subr.mxu0 0.0
        %884 = vmatpush1.msra.mxu0 %v874
        %885 = vmatprep.subr.mxu0 0.0
        %886 = vmatpush1.msra.mxu0 %v875
        %887 = vmatprep.subr.mxu0 0.0
        %888 = vmatpush1.msra.mxu0 %v876
        %889 = vmatprep.subr.mxu0 0.0
        %890 = vmatpush1.msra.mxu0 %v877
        %891 = vmatprep.subr.mxu0 0.0
        %892 = vmatpush1.msra.mxu0 %v878
        %893 = vmatprep.subr.mxu0 0.0
        %894 = vmatpush1.msra.mxu0 %v879
        %895 = vmatprep.subr.mxu0 0.0
        %896 = vmatpush1.msra.mxu0 %v880
        %897 = vmatprep.subr.mxu0 0.0
        %898 = vmatpush1.msra.mxu0 0.0
        %899 = vmatprep.subr.mxu0 0.0
        %900 = vmatpush1.msra.mxu0 0.0
        %901 = vmatprep.subr.mxu0 0.0
        %902 = vmatpush1.msra.mxu0 0.0
        %903 = vmatprep.subr.mxu0 0.0
        %904 = vmatpush1.msra.mxu0 0.0
        %905 = vmatprep.subr.mxu0 0.0
        %906 = vmatpush1.msra.mxu0 0.0
        %907 = vmatprep.subr.mxu0 0.0
        %908 = vmatpush1.msra.mxu0 0.0
        %909 = vmatprep.subr.mxu0 0.0
        %910 = vmatpush1.msra.mxu0 0.0
        %911 = vmatprep.subr.mxu0 0.0
        %912 = vmatpush1.msra.mxu0 0.0
        %913 = vmatprep.subr.mxu0 0.0
        %914 = vmatpush1.msra.mxu0 0.0
        %915 = vmatprep.subr.mxu0 0.0
        %916 = vmatpush1.msra.mxu0 0.0
        %917 = vmatprep.subr.mxu0 0.0
        %918 = vmatpush1.msra.mxu0 0.0
        %919 = vmatprep.subr.mxu0 0.0
        %920 = vmatpush1.msra.mxu0 0.0
        %921 = vmatprep.subr.mxu0 0.0
        %922 = vmatpush1.msra.mxu0 0.0
        %923 = vmatprep.subr.mxu0 0.0
        %924 = vmatpush1.msra.mxu0 0.0
        %925 = vmatprep.subr.mxu0 0.0
        %926 = vmatpush1.msra.mxu0 0.0
        %927 = vmatprep.subr.mxu0 0.0
        %928 = vmatpush1.msra.mxu0 0.0
        %929 = vmatprep.subr.mxu0 0.0
        %930 = vmatpush1.msra.mxu0 0.0
        %931 = vmatprep.subr.mxu0 0.0
        %932 = vmatpush1.msra.mxu0 0.0
        %933 = vmatprep.subr.mxu0 0.0
        %934 = vmatpush1.msra.mxu0 0.0
        %935 = vmatprep.subr.mxu0 0.0
        %936 = vmatpush1.msra.mxu0 0.0
        %937 = vmatprep.subr.mxu0 0.0
        %938 = vmatpush1.msra.mxu0 0.0
        %939 = vmatprep.subr.mxu0 0.0
        %940 = vmatpush1.msra.mxu0 0.0
        %941 = vmatprep.subr.mxu0 0.0
        %942 = vmatpush1.msra.mxu0 0.0
        %943 = vmatprep.subr.mxu0 0.0
        %944 = vmatpush1.msra.mxu0 0.0
        %945 = vmatprep.mubr.f32.mxu0 0.0
        %946 = vmatmul.mubr.f32.gmra.mrb[0].mxu0 %v801
        %v947 = vpop.f32.mrb[0].mxu0
        %v948 = vadd.f32 0.0, %v947
        %v949 = vpop.f32.mrb[0].mxu0
        %950 = vdwg.mxu0
        %v951 = vld [vmem:[%s721] sm:$0xff]
        %v952 = vld [vmem:[%s721 + $0x8] sm:$0xff]
        %v953 = vld [vmem:[%s721 + $0x10] sm:$0xff]
        %v954 = vld [vmem:[%s721 + $0x18] sm:$0xff]
        %v955 = vld [vmem:[%s721 + $0x20] sm:$0xff]
        %v956 = vld [vmem:[%s721 + $0x28] sm:$0xff]
        %v957 = vld [vmem:[%s721 + $0x30] sm:$0xff]
        %v958 = vld [vmem:[%s721 + $0x38] sm:$0xff]
        %959 = vmatprep.subr.mxu0 0.0
        %960 = vmatpush1.msra.mxu0 %v951
        %961 = vmatprep.subr.mxu0 0.0
        %962 = vmatpush1.msra.mxu0 %v952
        %963 = vmatprep.subr.mxu0 0.0
        %964 = vmatpush1.msra.mxu0 %v953
        %965 = vmatprep.subr.mxu0 0.0
        %966 = vmatpush1.msra.mxu0 %v954
        %967 = vmatprep.subr.mxu0 0.0
        %968 = vmatpush1.msra.mxu0 %v955
        %969 = vmatprep.subr.mxu0 0.0
        %970 = vmatpush1.msra.mxu0 %v956
        %971 = vmatprep.subr.mxu0 0.0
        %972 = vmatpush1.msra.mxu0 %v957
        %973 = vmatprep.subr.mxu0 0.0
        %974 = vmatpush1.msra.mxu0 %v958
        %975 = vmatprep.subr.mxu0 0.0
        %976 = vmatpush1.msra.mxu0 0.0
        %977 = vmatprep.subr.mxu0 0.0
        %978 = vmatpush1.msra.mxu0 0.0
        %979 = vmatprep.subr.mxu0 0.0
        %980 = vmatpush1.msra.mxu0 0.0
        %981 = vmatprep.subr.mxu0 0.0
        %982 = vmatpush1.msra.mxu0 0.0
        %983 = vmatprep.subr.mxu0 0.0
        %984 = vmatpush1.msra.mxu0 0.0
        %985 = vmatprep.subr.mxu0 0.0
        %986 = vmatpush1.msra.mxu0 0.0
        %987 = vmatprep.subr.mxu0 0.0
        %988 = vmatpush1.msra.mxu0 0.0
        %989 = vmatprep.subr.mxu0 0.0
        %990 = vmatpush1.msra.mxu0 0.0
        %991 = vmatprep.subr.mxu0 0.0
        %992 = vmatpush1.msra.mxu0 0.0
        %993 = vmatprep.subr.mxu0 0.0
        %994 = vmatpush1.msra.mxu0 0.0
        %995 = vmatprep.subr.mxu0 0.0
        %996 = vmatpush1.msra.mxu0 0.0
        %997 = vmatprep.subr.mxu0 0.0
        %998 = vmatpush1.msra.mxu0 0.0
        %999 = vmatprep.subr.mxu0 0.0
        %1000 = vmatpush1.msra.mxu0 0.0
        %1001 = vmatprep.subr.mxu0 0.0
        %1002 = vmatpush1.msra.mxu0 0.0
        %1003 = vmatprep.subr.mxu0 0.0
        %1004 = vmatpush1.msra.mxu0 0.0
        %1005 = vmatprep.subr.mxu0 0.0
        %1006 = vmatpush1.msra.mxu0 0.0
        %1007 = vmatprep.subr.mxu0 0.0
        %1008 = vmatpush1.msra.mxu0 0.0
        %1009 = vmatprep.subr.mxu0 0.0
        %1010 = vmatpush1.msra.mxu0 0.0
        %1011 = vmatprep.subr.mxu0 0.0
        %1012 = vmatpush1.msra.mxu0 0.0
        %1013 = vmatprep.subr.mxu0 0.0
        %1014 = vmatpush1.msra.mxu0 0.0
        %1015 = vmatprep.subr.mxu0 0.0
        %1016 = vmatpush1.msra.mxu0 0.0
        %1017 = vmatprep.subr.mxu0 0.0
        %1018 = vmatpush1.msra.mxu0 0.0
        %1019 = vmatprep.subr.mxu0 0.0
        %1020 = vmatpush1.msra.mxu0 0.0
        %1021 = vmatprep.subr.mxu0 0.0
        %1022 = vmatpush1.msra.mxu0 0.0
        %1023 = vmatprep.mubr.f32.mxu0 0.0
        %1024 = vmatmul.mubr.f32.gmra.mrb[0].mxu0 %v801
        %v1025 = vpop.f32.mrb[0].mxu0
        %v1026 = vadd.f32 0.0, %v1025
        %v1027 = vpop.f32.mrb[0].mxu0
        %1028 = vdwg.mxu0
        %v1029 = vld [vmem:[%s726] sm:$0xff]
        %v1030 = vld [vmem:[%s726 + $0x8] sm:$0xff]
        %v1031 = vld [vmem:[%s726 + $0x10] sm:$0xff]
        %v1032 = vld [vmem:[%s726 + $0x18] sm:$0xff]
        %v1033 = vld [vmem:[%s726 + $0x20] sm:$0xff]
        %v1034 = vld [vmem:[%s726 + $0x28] sm:$0xff]
        %v1035 = vld [vmem:[%s726 + $0x30] sm:$0xff]
        %v1036 = vld [vmem:[%s726 + $0x38] sm:$0xff]
        %v1037 = vmul.f32 %v870, 0.59460354
        %vm1038 = vcmask 64512
        %v1039 = vsel %vm1038, %v1037, -inf
        %1040 = vmax.xlane.f32.xlu0 %v1039
        %v1041 = vpop.xlane.xlu0 %1040
        %v1042 = vsub.f32 %v1037, %v1041
        %v1043 = vmul.f32 %v1042, 1.442695
        %v1044 = vpow.pop %v1043
        %v1045 = vsel %vm1038, %v1044, 0.0
        %1046 = vadd.xlane.f32.xlu0 %v1045
        %v1047 = vpop.xlane.xlu0 %1046
        %v1048 = vrcp.pop %v1047
        %v1049 = vmul.f32 %v1044, %v1048
        %v1050 = vmul.f32 %v948, 0.59460354
        %v1051 = vsel %vm1038, %v1050, -inf
        %v1052 = vrot.slane %v1051, 4
        %v1053 = vmax.f32 %v1051, %v1052
        %v1054 = vrot.slane %v1053, 2
        %v1055 = vmax.f32 %v1053, %v1054
        %v1056 = vrot.slane %v1055, 1
        %v1057 = vmax.f32 %v1055, %v1056
        %v1058 = vsub.f32 %v1050, %v1057
        %v1059 = vmul.f32 %v1058, 1.442695
        %v1060 = vpow.pop %v1059
        %v1061 = vsel %vm1038, %v1060, 0.0
        %v1062 = vrot.slane %v1061, 4
        %v1063 = vadd.f32 %v1061, %v1062
        %v1064 = vrot.slane %v1063, 2
        %v1065 = vadd.f32 %v1063, %v1064
        %v1066 = vrot.slane %v1065, 1
        %v1067 = vadd.f32 %v1065, %v1066
        %v1068 = vrcp.pop %v1067
        %v1069 = vmul.f32 %v1060, %v1068
        %1070 = vxpose.xlu0.b32.start [1/16] %v1069, 128
        %1071 = vxpose.xlu0.b32.cont [2/16] 0.0, 128
        %1072 = vxpose.xlu0.b32.cont [3/16] 0.0, 128
        %1073 = vxpose.xlu0.b32.cont [4/16] 0.0, 128
        %1074 = vxpose.xlu0.b32.cont [5/16] 0.0, 128
        %1075 = vxpose.xlu0.b32.cont [6/16] 0.0, 128
        %1076 = vxpose.xlu0.b32.cont [7/16] 0.0, 128
        %1077 = vxpose.xlu0.b32.cont [8/16] 0.0, 128
        %1078 = vxpose.xlu0.b32.cont [9/16] 0.0, 128
        %1079 = vxpose.xlu0.b32.cont [10/16] 0.0, 128
        %1080 = vxpose.xlu0.b32.cont [11/16] 0.0, 128
        %1081 = vxpose.xlu0.b32.cont [12/16] 0.0, 128
        %1082 = vxpose.xlu0.b32.cont [13/16] 0.0, 128
        %1083 = vxpose.xlu0.b32.cont [14/16] 0.0, 128
        %1084 = vxpose.xlu0.b32.cont [15/16] 0.0, 128
        %1085 = vxpose.xlu0.b32.end [16/16] 0.0, 128
        %v1086 = vpop.trf.xlu0
        %v1087 = vpop.trf.xlu0
        %v1088 = vpop.trf.xlu0
        %v1089 = vpop.trf.xlu0
        %v1090 = vpop.trf.xlu0
        %v1091 = vpop.trf.xlu0
        %v1092 = vpop.trf.xlu0
        %v1093 = vpop.trf.xlu0
        %v1094 = vpop.trf.xlu0
        %v1095 = vpop.trf.xlu0
        %v1096 = vpop.trf.xlu0
        %v1097 = vpop.trf.xlu0
        %v1098 = vpop.trf.xlu0
        %v1099 = vpop.trf.xlu0
        %v1100 = vpop.trf.xlu0
        %v1101 = vpop.trf.xlu0
        %v1103 = vsel %vm1038, %v1086, 0
        %1105 = vmatprep.subr.mxu0 0.0
        %1106 = vmatpush1.msra.mxu0 %v1026
        %1107 = vmatprep.subr.mxu0 0.0
        %1108 = vmatpush1.msra.mxu0 0.0
        %1109 = vmatprep.subr.mxu0 0.0
        %1110 = vmatpush1.msra.mxu0 0.0
        %1111 = vmatprep.subr.mxu0 0.0
        %1112 = vmatpush1.msra.mxu0 0.0
        %1113 = vmatprep.subr.mxu0 0.0
        %1114 = vmatpush1.msra.mxu0 0.0
        %1115 = vmatprep.subr.mxu0 0.0
        %1116 = vmatpush1.msra.mxu0 0.0
        %1117 = vmatprep.subr.mxu0 0.0
        %1118 = vmatpush1.msra.mxu0 0.0
        %1119 = vmatprep.subr.mxu0 0.0
        %1120 = vmatpush1.msra.mxu0 0.0
        %1121 = vmatprep.subr.mxu0 0.0
        %1122 = vmatpush1.msra.mxu0 0.0
        %1123 = vmatprep.subr.mxu0 0.0
        %1124 = vmatpush1.msra.mxu0 0.0
        %1125 = vmatprep.subr.mxu0 0.0
        %1126 = vmatpush1.msra.mxu0 0.0
        %1127 = vmatprep.subr.mxu0 0.0
        %1128 = vmatpush1.msra.mxu0 0.0
        %1129 = vmatprep.subr.mxu0 0.0
        %1130 = vmatpush1.msra.mxu0 0.0
        %1131 = vmatprep.subr.mxu0 0.0
        %1132 = vmatpush1.msra.mxu0 0.0
        %1133 = vmatprep.subr.mxu0 0.0
        %1134 = vmatpush1.msra.mxu0 0.0
        %1135 = vmatprep.subr.mxu0 0.0
        %1136 = vmatpush1.msra.mxu0 0.0
        %1137 = vmatprep.subr.mxu0 0.0
        %1138 = vmatpush1.msra.mxu0 0.0
        %1139 = vmatprep.subr.mxu0 0.0
        %1140 = vmatpush1.msra.mxu0 0.0
        %1141 = vmatprep.subr.mxu0 0.0
        %1142 = vmatpush1.msra.mxu0 0.0
        %1143 = vmatprep.subr.mxu0 0.0
        %1144 = vmatpush1.msra.mxu0 0.0
        %1145 = vmatprep.subr.mxu0 0.0
        %1146 = vmatpush1.msra.mxu0 0.0
        %1147 = vmatprep.subr.mxu0 0.0
        %1148 = vmatpush1.msra.mxu0 0.0
        %1149 = vmatprep.subr.mxu0 0.0
        %1150 = vmatpush1.msra.mxu0 0.0
        %1151 = vmatprep.subr.mxu0 0.0
        %1152 = vmatpush1.msra.mxu0 0.0
        %1153 = vmatprep.subr.mxu0 0.0
        %1154 = vmatpush1.msra.mxu0 0.0
        %1155 = vmatprep.subr.mxu0 0.0
        %1156 = vmatpush1.msra.mxu0 0.0
        %1157 = vmatprep.subr.mxu0 0.0
        %1158 = vmatpush1.msra.mxu0 0.0
        %1159 = vmatprep.subr.mxu0 0.0
        %1160 = vmatpush1.msra.mxu0 0.0
        %1161 = vmatprep.subr.mxu0 0.0
        %1162 = vmatpush1.msra.mxu0 0.0
        %1163 = vmatprep.subr.mxu0 0.0
        %1164 = vmatpush1.msra.mxu0 0.0
        %1165 = vmatprep.subr.mxu0 0.0
        %1166 = vmatpush1.msra.mxu0 0.0
        %1167 = vmatprep.subr.mxu0 0.0
        %1168 = vmatpush1.msra.mxu0 0.0
        %1169 = vmatprep.mubr.f32.mxu0 0.0
        %1170 = vmatmul.mubr.f32.gmra.mrb[0].mxu0 %v1103
        %v1171 = vpop.f32.mrb[0].mxu0
        %v1172 = vadd.f32 0.0, %v1171
        %v1173 = vpop.f32.mrb[0].mxu0
        %1174 = vdwg.mxu0
        %v1176 = vsel %vm1038, %v1049, 0
        %1178 = vmatprep.subr.mxu0 0.0
        %1179 = vmatpush1.msra.mxu0 %v1172
        %1180 = vmatprep.subr.mxu0 0.0
        %1181 = vmatpush1.msra.mxu0 0.0
        %1182 = vmatprep.subr.mxu0 0.0
        %1183 = vmatpush1.msra.mxu0 0.0
        %1184 = vmatprep.subr.mxu0 0.0
        %1185 = vmatpush1.msra.mxu0 0.0
        %1186 = vmatprep.subr.mxu0 0.0
        %1187 = vmatpush1.msra.mxu0 0.0
        %1188 = vmatprep.subr.mxu0 0.0
        %1189 = vmatpush1.msra.mxu0 0.0
        %1190 = vmatprep.subr.mxu0 0.0
        %1191 = vmatpush1.msra.mxu0 0.0
        %1192 = vmatprep.subr.mxu0 0.0
        %1193 = vmatpush1.msra.mxu0 0.0
        %1194 = vmatprep.subr.mxu0 0.0
        %1195 = vmatpush1.msra.mxu0 0.0
        %1196 = vmatprep.subr.mxu0 0.0
        %1197 = vmatpush1.msra.mxu0 0.0
        %1198 = vmatprep.subr.mxu0 0.0
        %1199 = vmatpush1.msra.mxu0 0.0
        %1200 = vmatprep.subr.mxu0 0.0
        %1201 = vmatpush1.msra.mxu0 0.0
        %1202 = vmatprep.subr.mxu0 0.0
        %1203 = vmatpush1.msra.mxu0 0.0
        %1204 = vmatprep.subr.mxu0 0.0
        %1205 = vmatpush1.msra.mxu0 0.0
        %1206 = vmatprep.subr.mxu0 0.0
        %1207 = vmatpush1.msra.mxu0 0.0
        %1208 = vmatprep.subr.mxu0 0.0
        %1209 = vmatpush1.msra.mxu0 0.0
        %1210 = vmatprep.subr.mxu0 0.0
        %1211 = vmatpush1.msra.mxu0 0.0
        %1212 = vmatprep.subr.mxu0 0.0
        %1213 = vmatpush1.msra.mxu0 0.0
        %1214 = vmatprep.subr.mxu0 0.0
        %1215 = vmatpush1.msra.mxu0 0.0
        %1216 = vmatprep.subr.mxu0 0.0
        %1217 = vmatpush1.msra.mxu0 0.0
        %1218 = vmatprep.subr.mxu0 0.0
        %1219 = vmatpush1.msra.mxu0 0.0
        %1220 = vmatprep.subr.mxu0 0.0
        %1221 = vmatpush1.msra.mxu0 0.0
        %1222 = vmatprep.subr.mxu0 0.0
        %1223 = vmatpush1.msra.mxu0 0.0
        %1224 = vmatprep.subr.mxu0 0.0
        %1225 = vmatpush1.msra.mxu0 0.0
        %1226 = vmatprep.subr.mxu0 0.0
        %1227 = vmatpush1.msra.mxu0 0.0
        %1228 = vmatprep.subr.mxu0 0.0
        %1229 = vmatpush1.msra.mxu0 0.0
        %1230 = vmatprep.subr.mxu0 0.0
        %1231 = vmatpush1.msra.mxu0 0.0
        %1232 = vmatprep.subr.mxu0 0.0
        %1233 = vmatpush1.msra.mxu0 0.0
        %1234 = vmatprep.subr.mxu0 0.0
        %1235 = vmatpush1.msra.mxu0 0.0
        %1236 = vmatprep.subr.mxu0 0.0
        %1237 = vmatpush1.msra.mxu0 0.0
        %1238 = vmatprep.subr.mxu0 0.0
        %1239 = vmatpush1.msra.mxu0 0.0
        %1240 = vmatprep.subr.mxu0 0.0
        %1241 = vmatpush1.msra.mxu0 0.0
        %1242 = vmatprep.mubr.f32.mxu0 0.0
        %1243 = vmatmul.mubr.f32.gmra.mrb[0].mxu0 %v1176
        %v1244 = vpop.f32.mrb[0].mxu0
        %v1245 = vadd.f32 0.0, %v1244
        %v1246 = vpop.f32.mrb[0].mxu0
        %1247 = vdwg.mxu0
        %vm1248 = vcmask 130112
        %v1249 = vsel %vm1248, %v1037, -inf
        %1250 = vmax.xlane.f32.xlu0 %v1249
        %v1251 = vpop.xlane.xlu0 %1250
        %v1252 = vsub.f32 %v1037, %v1251
        %v1253 = vmul.f32 %v1252, 1.442695
        %v1254 = vpow.pop %v1253
        %1256 = vrot.lane.b32.xlu0 %v1254, 120
        %v1257 = vpop.permute.xlu0 %1256
        %v1259 = vsel %vm1038, %v1257, 0.0
        %1260 = vadd.xlane.f32.xlu0 %v1259
        %v1261 = vpop.xlane.xlu0 %1260
        %v1262 = vrcp.pop %v1261
        %v1263 = vmul.f32 %v1254, %v1262
        %v1264 = vsel %vm1248, %v1050, -inf
        %v1265 = vrot.slane %v1264, 4
        %v1266 = vmax.f32 %v1264, %v1265
        %v1267 = vrot.slane %v1266, 2
        %v1268 = vmax.f32 %v1266, %v1267
        %v1269 = vrot.slane %v1268, 1
        %v1270 = vmax.f32 %v1268, %v1269
        %v1271 = vsub.f32 %v1050, %v1270
        %v1272 = vmul.f32 %v1271, 1.442695
        %v1273 = vpow.pop %v1272
        %v1274 = vsel %vm1248, %v1273, 0.0
        %v1275 = vrot.slane %v1274, 4
        %v1276 = vadd.f32 %v1274, %v1275
        %v1277 = vrot.slane %v1276, 2
        %v1278 = vadd.f32 %v1276, %v1277
        %v1279 = vrot.slane %v1278, 1
        %v1280 = vadd.f32 %v1278, %v1279
        %v1281 = vrcp.pop %v1280
        %v1282 = vmul.f32 %v1273, %v1281
        %1284 = vrot.lane.b32.xlu0 %v1282, 120
        %v1285 = vpop.permute.xlu0 %1284
        %1287 = vxpose.xlu0.b32.start [1/16] %v1285, 128
        %1288 = vxpose.xlu0.b32.cont [2/16] 0.0, 128
        %1289 = vxpose.xlu0.b32.cont [3/16] 0.0, 128
        %1290 = vxpose.xlu0.b32.cont [4/16] 0.0, 128
        %1291 = vxpose.xlu0.b32.cont [5/16] 0.0, 128
        %1292 = vxpose.xlu0.b32.cont [6/16] 0.0, 128
        %1293 = vxpose.xlu0.b32.cont [7/16] 0.0, 128
        %1294 = vxpose.xlu0.b32.cont [8/16] 0.0, 128
        %1295 = vxpose.xlu0.b32.cont [9/16] 0.0, 128
        %1296 = vxpose.xlu0.b32.cont [10/16] 0.0, 128
        %1297 = vxpose.xlu0.b32.cont [11/16] 0.0, 128
        %1298 = vxpose.xlu0.b32.cont [12/16] 0.0, 128
        %1299 = vxpose.xlu0.b32.cont [13/16] 0.0, 128
        %1300 = vxpose.xlu0.b32.cont [14/16] 0.0, 128
        %1301 = vxpose.xlu0.b32.cont [15/16] 0.0, 128
        %1302 = vxpose.xlu0.b32.end [16/16] 0.0, 128
        %v1303 = vpop.trf.xlu0
        %v1304 = vpop.trf.xlu0
        %v1305 = vpop.trf.xlu0
        %v1306 = vpop.trf.xlu0
        %v1307 = vpop.trf.xlu0
        %v1308 = vpop.trf.xlu0
        %v1309 = vpop.trf.xlu0
        %v1310 = vpop.trf.xlu0
        %v1311 = vpop.trf.xlu0
        %v1312 = vpop.trf.xlu0
        %v1313 = vpop.trf.xlu0
        %v1314 = vpop.trf.xlu0
        %v1315 = vpop.trf.xlu0
        %v1316 = vpop.trf.xlu0
        %v1317 = vpop.trf.xlu0
        %v1318 = vpop.trf.xlu0
        %1320 = vrot.lane.b32.xlu0 %v1026, 120
        %v1321 = vpop.permute.xlu0 %1320
        %v1324 = vsel %vm1038, %v1303, 0
        %1326 = vmatprep.subr.mxu0 0.0
        %1327 = vmatpush1.msra.mxu0 %v1321
        %1328 = vmatprep.subr.mxu0 0.0
        %1329 = vmatpush1.msra.mxu0 0.0
        %1330 = vmatprep.subr.mxu0 0.0
        %1331 = vmatpush1.msra.mxu0 0.0
        %1332 = vmatprep.subr.mxu0 0.0
        %1333 = vmatpush1.msra.mxu0 0.0
        %1334 = vmatprep.subr.mxu0 0.0
        %1335 = vmatpush1.msra.mxu0 0.0
        %1336 = vmatprep.subr.mxu0 0.0
        %1337 = vmatpush1.msra.mxu0 0.0
        %1338 = vmatprep.subr.mxu0 0.0
        %1339 = vmatpush1.msra.mxu0 0.0
        %1340 = vmatprep.subr.mxu0 0.0
        %1341 = vmatpush1.msra.mxu0 0.0
        %1342 = vmatprep.subr.mxu0 0.0
        %1343 = vmatpush1.msra.mxu0 0.0
        %1344 = vmatprep.subr.mxu0 0.0
        %1345 = vmatpush1.msra.mxu0 0.0
        %1346 = vmatprep.subr.mxu0 0.0
        %1347 = vmatpush1.msra.mxu0 0.0
        %1348 = vmatprep.subr.mxu0 0.0
        %1349 = vmatpush1.msra.mxu0 0.0
        %1350 = vmatprep.subr.mxu0 0.0
        %1351 = vmatpush1.msra.mxu0 0.0
        %1352 = vmatprep.subr.mxu0 0.0
        %1353 = vmatpush1.msra.mxu0 0.0
        %1354 = vmatprep.subr.mxu0 0.0
        %1355 = vmatpush1.msra.mxu0 0.0
        %1356 = vmatprep.subr.mxu0 0.0
        %1357 = vmatpush1.msra.mxu0 0.0
        %1358 = vmatprep.subr.mxu0 0.0
        %1359 = vmatpush1.msra.mxu0 0.0
        %1360 = vmatprep.subr.mxu0 0.0
        %1361 = vmatpush1.msra.mxu0 0.0
        %1362 = vmatprep.subr.mxu0 0.0
        %1363 = vmatpush1.msra.mxu0 0.0
        %1364 = vmatprep.subr.mxu0 0.0
        %1365 = vmatpush1.msra.mxu0 0.0
        %1366 = vmatprep.subr.mxu0 0.0
        %1367 = vmatpush1.msra.mxu0 0.0
        %1368 = vmatprep.subr.mxu0 0.0
        %1369 = vmatpush1.msra.mxu0 0.0
        %1370 = vmatprep.subr.mxu0 0.0
        %1371 = vmatpush1.msra.mxu0 0.0
        %1372 = vmatprep.subr.mxu0 0.0
        %1373 = vmatpush1.msra.mxu0 0.0
        %1374 = vmatprep.subr.mxu0 0.0
        %1375 = vmatpush1.msra.mxu0 0.0
        %1376 = vmatprep.subr.mxu0 0.0
        %1377 = vmatpush1.msra.mxu0 0.0
        %1378 = vmatprep.subr.mxu0 0.0
        %1379 = vmatpush1.msra.mxu0 0.0
        %1380 = vmatprep.subr.mxu0 0.0
        %1381 = vmatpush1.msra.mxu0 0.0
        %1382 = vmatprep.subr.mxu0 0.0
        %1383 = vmatpush1.msra.mxu0 0.0
        %1384 = vmatprep.subr.mxu0 0.0
        %1385 = vmatpush1.msra.mxu0 0.0
        %1386 = vmatprep.subr.mxu0 0.0
        %1387 = vmatpush1.msra.mxu0 0.0
        %1388 = vmatprep.subr.mxu0 0.0
        %1389 = vmatpush1.msra.mxu0 0.0
        %1390 = vmatprep.mubr.f32.mxu0 0.0
        %1391 = vmatmul.mubr.f32.gmra.mrb[0].mxu0 %v1324
        %v1392 = vpop.f32.mrb[0].mxu0
        %v1393 = vadd.f32 0.0, %v1392
        %v1394 = vpop.f32.mrb[0].mxu0
        %1395 = vdwg.mxu0
        %1397 = vrot.lane.b32.xlu0 %v1263, 120
        %v1398 = vpop.permute.xlu0 %1397
        %v1399 = vsel %vm1038, %v1398, 0
        %1401 = vmatprep.subr.mxu0 0.0
        %1402 = vmatpush1.msra.mxu0 %v1393
        %1403 = vmatprep.subr.mxu0 0.0
        %1404 = vmatpush1.msra.mxu0 0.0
        %1405 = vmatprep.subr.mxu0 0.0
        %1406 = vmatpush1.msra.mxu0 0.0
        %1407 = vmatprep.subr.mxu0 0.0
        %1408 = vmatpush1.msra.mxu0 0.0
        %1409 = vmatprep.subr.mxu0 0.0
        %1410 = vmatpush1.msra.mxu0 0.0
        %1411 = vmatprep.subr.mxu0 0.0
        %1412 = vmatpush1.msra.mxu0 0.0
        %1413 = vmatprep.subr.mxu0 0.0
        %1414 = vmatpush1.msra.mxu0 0.0
        %1415 = vmatprep.subr.mxu0 0.0
        %1416 = vmatpush1.msra.mxu0 0.0
        %1417 = vmatprep.subr.mxu0 0.0
        %1418 = vmatpush1.msra.mxu0 0.0
        %1419 = vmatprep.subr.mxu0 0.0
        %1420 = vmatpush1.msra.mxu0 0.0
        %1421 = vmatprep.subr.mxu0 0.0
        %1422 = vmatpush1.msra.mxu0 0.0
        %1423 = vmatprep.subr.mxu0 0.0
        %1424 = vmatpush1.msra.mxu0 0.0
        %1425 = vmatprep.subr.mxu0 0.0
        %1426 = vmatpush1.msra.mxu0 0.0
        %1427 = vmatprep.subr.mxu0 0.0
        %1428 = vmatpush1.msra.mxu0 0.0
        %1429 = vmatprep.subr.mxu0 0.0
        %1430 = vmatpush1.msra.mxu0 0.0
        %1431 = vmatprep.subr.mxu0 0.0
        %1432 = vmatpush1.msra.mxu0 0.0
        %1433 = vmatprep.subr.mxu0 0.0
        %1434 = vmatpush1.msra.mxu0 0.0
        %1435 = vmatprep.subr.mxu0 0.0
        %1436 = vmatpush1.msra.mxu0 0.0
        %1437 = vmatprep.subr.mxu0 0.0
        %1438 = vmatpush1.msra.mxu0 0.0
        %1439 = vmatprep.subr.mxu0 0.0
        %1440 = vmatpush1.msra.mxu0 0.0
        %1441 = vmatprep.subr.mxu0 0.0
        %1442 = vmatpush1.msra.mxu0 0.0
        %1443 = vmatprep.subr.mxu0 0.0
        %1444 = vmatpush1.msra.mxu0 0.0
        %1445 = vmatprep.subr.mxu0 0.0
        %1446 = vmatpush1.msra.mxu0 0.0
        %1447 = vmatprep.subr.mxu0 0.0
        %1448 = vmatpush1.msra.mxu0 0.0
        %1449 = vmatprep.subr.mxu0 0.0
        %1450 = vmatpush1.msra.mxu0 0.0
        %1451 = vmatprep.subr.mxu0 0.0
        %1452 = vmatpush1.msra.mxu0 0.0
        %1453 = vmatprep.subr.mxu0 0.0
        %1454 = vmatpush1.msra.mxu0 0.0
        %1455 = vmatprep.subr.mxu0 0.0
        %1456 = vmatpush1.msra.mxu0 0.0
        %1457 = vmatprep.subr.mxu0 0.0
        %1458 = vmatpush1.msra.mxu0 0.0
        %1459 = vmatprep.subr.mxu0 0.0
        %1460 = vmatpush1.msra.mxu0 0.0
        %1461 = vmatprep.subr.mxu0 0.0
        %1462 = vmatpush1.msra.mxu0 0.0
        %1463 = vmatprep.subr.mxu0 0.0
        %1464 = vmatpush1.msra.mxu0 0.0
        %1465 = vmatprep.mubr.f32.mxu0 0.0
        %1466 = vmatmul.mubr.f32.gmra.mrb[0].mxu0 %v1399
        %v1467 = vpop.f32.mrb[0].mxu0
        %v1468 = vadd.f32 0.0, %v1467
        %v1469 = vpop.f32.mrb[0].mxu0
        %1470 = vdwg.mxu0
        %v1472 = vsel %vm1038, %v1468, 0
        %1474 = vmatprep.subr.mxu0 0.0
        %1475 = vmatpush1.msra.mxu0 %v1030
        %1476 = vmatprep.subr.mxu0 0.0
        %1477 = vmatpush1.msra.mxu0 0.0
        %1478 = vmatprep.subr.mxu0 0.0
        %1479 = vmatpush1.msra.mxu0 0.0
        %1480 = vmatprep.subr.mxu0 0.0
        %1481 = vmatpush1.msra.mxu0 0.0
        %1482 = vmatprep.subr.mxu0 0.0
        %1483 = vmatpush1.msra.mxu0 0.0
        %1484 = vmatprep.subr.mxu0 0.0
        %1485 = vmatpush1.msra.mxu0 0.0
        %1486 = vmatprep.subr.mxu0 0.0
        %1487 = vmatpush1.msra.mxu0 0.0
        %1488 = vmatprep.subr.mxu0 0.0
        %1489 = vmatpush1.msra.mxu0 0.0
        %1490 = vmatprep.subr.mxu0 0.0
        %1491 = vmatpush1.msra.mxu0 0.0
        %1492 = vmatprep.subr.mxu0 0.0
        %1493 = vmatpush1.msra.mxu0 0.0
        %1494 = vmatprep.subr.mxu0 0.0
        %1495 = vmatpush1.msra.mxu0 0.0
        %1496 = vmatprep.subr.mxu0 0.0
        %1497 = vmatpush1.msra.mxu0 0.0
        %1498 = vmatprep.subr.mxu0 0.0
        %1499 = vmatpush1.msra.mxu0 0.0
        %1500 = vmatprep.subr.mxu0 0.0
        %1501 = vmatpush1.msra.mxu0 0.0
        %1502 = vmatprep.subr.mxu0 0.0
        %1503 = vmatpush1.msra.mxu0 0.0
        %1504 = vmatprep.subr.mxu0 0.0
        %1505 = vmatpush1.msra.mxu0 0.0
        %1506 = vmatprep.subr.mxu0 0.0
        %1507 = vmatpush1.msra.mxu0 0.0
        %1508 = vmatprep.subr.mxu0 0.0
        %1509 = vmatpush1.msra.mxu0 0.0
        %1510 = vmatprep.subr.mxu0 0.0
        %1511 = vmatpush1.msra.mxu0 0.0
        %1512 = vmatprep.subr.mxu0 0.0
        %1513 = vmatpush1.msra.mxu0 0.0
        %1514 = vmatprep.subr.mxu0 0.0
        %1515 = vmatpush1.msra.mxu0 0.0
        %1516 = vmatprep.subr.mxu0 0.0
        %1517 = vmatpush1.msra.mxu0 0.0
        %1518 = vmatprep.subr.mxu0 0.0
        %1519 = vmatpush1.msra.mxu0 0.0
        %1520 = vmatprep.subr.mxu0 0.0
        %1521 = vmatpush1.msra.mxu0 0.0
        %1522 = vmatprep.subr.mxu0 0.0
        %1523 = vmatpush1.msra.mxu0 0.0
        %1524 = vmatprep.subr.mxu0 0.0
        %1525 = vmatpush1.msra.mxu0 0.0
        %1526 = vmatprep.subr.mxu0 0.0
        %1527 = vmatpush1.msra.mxu0 0.0
        %1528 = vmatprep.subr.mxu0 0.0
        %1529 = vmatpush1.msra.mxu0 0.0
        %1530 = vmatprep.subr.mxu0 0.0
        %1531 = vmatpush1.msra.mxu0 0.0
        %1532 = vmatprep.subr.mxu0 0.0
        %1533 = vmatpush1.msra.mxu0 0.0
        %1534 = vmatprep.subr.mxu0 0.0
        %1535 = vmatpush1.msra.mxu0 0.0
        %1536 = vmatprep.subr.mxu0 0.0
        %1537 = vmatpush1.msra.mxu0 0.0
        %1538 = vmatprep.mubr.f32.mxu0 0.0
        %1539 = vmatmul.mubr.f32.gmra.mrb[0].mxu0 %v1472
        %v1540 = vpop.f32.mrb[0].mxu0
        %v1541 = vadd.f32 0.0, %v1540
        %v1542 = vpop.f32.mrb[0].mxu0
        %1543 = vdwg.mxu0
        %v1545 = vsel %vm1038, %v1245, 0
        %1547 = vmatprep.subr.mxu0 0.0
        %1548 = vmatpush1.msra.mxu0 %v1029
        %1549 = vmatprep.subr.mxu0 0.0
        %1550 = vmatpush1.msra.mxu0 0.0
        %1551 = vmatprep.subr.mxu0 0.0
        %1552 = vmatpush1.msra.mxu0 0.0
        %1553 = vmatprep.subr.mxu0 0.0
        %1554 = vmatpush1.msra.mxu0 0.0
        %1555 = vmatprep.subr.mxu0 0.0
        %1556 = vmatpush1.msra.mxu0 0.0
        %1557 = vmatprep.subr.mxu0 0.0
        %1558 = vmatpush1.msra.mxu0 0.0
        %1559 = vmatprep.subr.mxu0 0.0
        %1560 = vmatpush1.msra.mxu0 0.0
        %1561 = vmatprep.subr.mxu0 0.0
        %1562 = vmatpush1.msra.mxu0 0.0
        %1563 = vmatprep.subr.mxu0 0.0
        %1564 = vmatpush1.msra.mxu0 0.0
        %1565 = vmatprep.subr.mxu0 0.0
        %1566 = vmatpush1.msra.mxu0 0.0
        %1567 = vmatprep.subr.mxu0 0.0
        %1568 = vmatpush1.msra.mxu0 0.0
        %1569 = vmatprep.subr.mxu0 0.0
        %1570 = vmatpush1.msra.mxu0 0.0
        %1571 = vmatprep.subr.mxu0 0.0
        %1572 = vmatpush1.msra.mxu0 0.0
        %1573 = vmatprep.subr.mxu0 0.0
        %1574 = vmatpush1.msra.mxu0 0.0
        %1575 = vmatprep.subr.mxu0 0.0
        %1576 = vmatpush1.msra.mxu0 0.0
        %1577 = vmatprep.subr.mxu0 0.0
        %1578 = vmatpush1.msra.mxu0 0.0
        %1579 = vmatprep.subr.mxu0 0.0
        %1580 = vmatpush1.msra.mxu0 0.0
        %1581 = vmatprep.subr.mxu0 0.0
        %1582 = vmatpush1.msra.mxu0 0.0
        %1583 = vmatprep.subr.mxu0 0.0
        %1584 = vmatpush1.msra.mxu0 0.0
        %1585 = vmatprep.subr.mxu0 0.0
        %1586 = vmatpush1.msra.mxu0 0.0
        %1587 = vmatprep.subr.mxu0 0.0
        %1588 = vmatpush1.msra.mxu0 0.0
        %1589 = vmatprep.subr.mxu0 0.0
        %1590 = vmatpush1.msra.mxu0 0.0
        %1591 = vmatprep.subr.mxu0 0.0
        %1592 = vmatpush1.msra.mxu0 0.0
        %1593 = vmatprep.subr.mxu0 0.0
        %1594 = vmatpush1.msra.mxu0 0.0
        %1595 = vmatprep.subr.mxu0 0.0
        %1596 = vmatpush1.msra.mxu0 0.0
        %1597 = vmatprep.subr.mxu0 0.0
        %1598 = vmatpush1.msra.mxu0 0.0
        %1599 = vmatprep.subr.mxu0 0.0
        %1600 = vmatpush1.msra.mxu0 0.0
        %1601 = vmatprep.subr.mxu0 0.0
        %1602 = vmatpush1.msra.mxu0 0.0
        %1603 = vmatprep.subr.mxu0 0.0
        %1604 = vmatpush1.msra.mxu0 0.0
        %1605 = vmatprep.subr.mxu0 0.0
        %1606 = vmatpush1.msra.mxu0 0.0
        %1607 = vmatprep.subr.mxu0 0.0
        %1608 = vmatpush1.msra.mxu0 0.0
        %1609 = vmatprep.subr.mxu0 0.0
        %1610 = vmatpush1.msra.mxu0 0.0
        %1611 = vmatprep.mubr.f32.mxu0 0.0
        %1612 = vmatmul.mubr.f32.gmra.mrb[0].mxu0 %v1545
        %v1613 = vpop.f32.mrb[0].mxu0
        %v1614 = vadd.f32 %v1541, %v1613
        %v1615 = vpop.f32.mrb[0].mxu0
        %1616 = vdwg.mxu0
        %vm1617 = vcmask 195712
        %v1618 = vsel %vm1617, %v1037, -inf
        %1619 = vmax.xlane.f32.xlu0 %v1618
        %v1620 = vpop.xlane.xlu0 %1619
        %v1621 = vsub.f32 %v1037, %v1620
        %v1622 = vmul.f32 %v1621, 1.442695
        %v1623 = vpow.pop %v1622
        %1625 = vrot.lane.b32.xlu0 %v1623, 112
        %v1626 = vpop.permute.xlu0 %1625
        %v1628 = vsel %vm1038, %v1626, 0.0
        %1629 = vadd.xlane.f32.xlu0 %v1628
        %v1630 = vpop.xlane.xlu0 %1629
        %v1631 = vrcp.pop %v1630
        %v1632 = vmul.f32 %v1623, %v1631
        %v1633 = vsel %vm1617, %v1050, -inf
        %v1634 = vrot.slane %v1633, 4
        %v1635 = vmax.f32 %v1633, %v1634
        %v1636 = vrot.slane %v1635, 2
        %v1637 = vmax.f32 %v1635, %v1636
        %v1638 = vrot.slane %v1637, 1
        %v1639 = vmax.f32 %v1637, %v1638
        %v1640 = vsub.f32 %v1050, %v1639
        %v1641 = vmul.f32 %v1640, 1.442695
        %v1642 = vpow.pop %v1641
        %v1643 = vsel %vm1617, %v1642, 0.0
        %v1644 = vrot.slane %v1643, 4
        %v1645 = vadd.f32 %v1643, %v1644
        %v1646 = vrot.slane %v1645, 2
        %v1647 = vadd.f32 %v1645, %v1646
        %v1648 = vrot.slane %v1647, 1
        %v1649 = vadd.f32 %v1647, %v1648
        %v1650 = vrcp.pop %v1649
        %v1651 = vmul.f32 %v1642, %v1650
        %1653 = vrot.lane.b32.xlu0 %v1651, 112
        %v1654 = vpop.permute.xlu0 %1653
        %1656 = vxpose.xlu0.b32.start [1/16] %v1654, 128
        %1657 = vxpose.xlu0.b32.cont [2/16] 0.0, 128
        %1658 = vxpose.xlu0.b32.cont [3/16] 0.0, 128
        %1659 = vxpose.xlu0.b32.cont [4/16] 0.0, 128
        %1660 = vxpose.xlu0.b32.cont [5/16] 0.0, 128
        %1661 = vxpose.xlu0.b32.cont [6/16] 0.0, 128
        %1662 = vxpose.xlu0.b32.cont [7/16] 0.0, 128
        %1663 = vxpose.xlu0.b32.cont [8/16] 0.0, 128
        %1664 = vxpose.xlu0.b32.cont [9/16] 0.0, 128
        %1665 = vxpose.xlu0.b32.cont [10/16] 0.0, 128
        %1666 = vxpose.xlu0.b32.cont [11/16] 0.0, 128
        %1667 = vxpose.xlu0.b32.cont [12/16] 0.0, 128
        %1668 = vxpose.xlu0.b32.cont [13/16] 0.0, 128
        %1669 = vxpose.xlu0.b32.cont [14/16] 0.0, 128
        %1670 = vxpose.xlu0.b32.cont [15/16] 0.0, 128
        %1671 = vxpose.xlu0.b32.end [16/16] 0.0, 128
        %v1672 = vpop.trf.xlu0
        %v1673 = vpop.trf.xlu0
        %v1674 = vpop.trf.xlu0
        %v1675 = vpop.trf.xlu0
        %v1676 = vpop.trf.xlu0
        %v1677 = vpop.trf.xlu0
        %v1678 = vpop.trf.xlu0
        %v1679 = vpop.trf.xlu0
        %v1680 = vpop.trf.xlu0
        %v1681 = vpop.trf.xlu0
        %v1682 = vpop.trf.xlu0
        %v1683 = vpop.trf.xlu0
        %v1684 = vpop.trf.xlu0
        %v1685 = vpop.trf.xlu0
        %v1686 = vpop.trf.xlu0
        %v1687 = vpop.trf.xlu0
        %1688 = vrot.lane.b32.xlu0 %v1026, 112
        %v1689 = vpop.permute.xlu0 %1688
        %v1692 = vsel %vm1038, %v1672, 0
        %1694 = vmatprep.subr.mxu0 0.0
        %1695 = vmatpush1.msra.mxu0 %v1689
        %1696 = vmatprep.subr.mxu0 0.0
        %1697 = vmatpush1.msra.mxu0 0.0
        %1698 = vmatprep.subr.mxu0 0.0
        %1699 = vmatpush1.msra.mxu0 0.0
        %1700 = vmatprep.subr.mxu0 0.0
        %1701 = vmatpush1.msra.mxu0 0.0
        %1702 = vmatprep.subr.mxu0 0.0
        %1703 = vmatpush1.msra.mxu0 0.0
        %1704 = vmatprep.subr.mxu0 0.0
        %1705 = vmatpush1.msra.mxu0 0.0
        %1706 = vmatprep.subr.mxu0 0.0
        %1707 = vmatpush1.msra.mxu0 0.0
        %1708 = vmatprep.subr.mxu0 0.0
        %1709 = vmatpush1.msra.mxu0 0.0
        %1710 = vmatprep.subr.mxu0 0.0
        %1711 = vmatpush1.msra.mxu0 0.0
        %1712 = vmatprep.subr.mxu0 0.0
        %1713 = vmatpush1.msra.mxu0 0.0
        %1714 = vmatprep.subr.mxu0 0.0
        %1715 = vmatpush1.msra.mxu0 0.0
        %1716 = vmatprep.subr.mxu0 0.0
        %1717 = vmatpush1.msra.mxu0 0.0
        %1718 = vmatprep.subr.mxu0 0.0
        %1719 = vmatpush1.msra.mxu0 0.0
        %1720 = vmatprep.subr.mxu0 0.0
        %1721 = vmatpush1.msra.mxu0 0.0
        %1722 = vmatprep.subr.mxu0 0.0
        %1723 = vmatpush1.msra.mxu0 0.0
        %1724 = vmatprep.subr.mxu0 0.0
        %1725 = vmatpush1.msra.mxu0 0.0
        %1726 = vmatprep.subr.mxu0 0.0
        %1727 = vmatpush1.msra.mxu0 0.0
        %1728 = vmatprep.subr.mxu0 0.0
        %1729 = vmatpush1.msra.mxu0 0.0
        %1730 = vmatprep.subr.mxu0 0.0
        %1731 = vmatpush1.msra.mxu0 0.0
        %1732 = vmatprep.subr.mxu0 0.0
        %1733 = vmatpush1.msra.mxu0 0.0
        %1734 = vmatprep.subr.mxu0 0.0
        %1735 = vmatpush1.msra.mxu0 0.0
        %1736 = vmatprep.subr.mxu0 0.0
        %1737 = vmatpush1.msra.mxu0 0.0
        %1738 = vmatprep.subr.mxu0 0.0
        %1739 = vmatpush1.msra.mxu0 0.0
        %1740 = vmatprep.subr.mxu0 0.0
        %1741 = vmatpush1.msra.mxu0 0.0
        %1742 = vmatprep.subr.mxu0 0.0
        %1743 = vmatpush1.msra.mxu0 0.0
        %1744 = vmatprep.subr.mxu0 0.0
        %1745 = vmatpush1.msra.mxu0 0.0
        %1746 = vmatprep.subr.mxu0 0.0
        %1747 = vmatpush1.msra.mxu0 0.0
        %1748 = vmatprep.subr.mxu0 0.0
        %1749 = vmatpush1.msra.mxu0 0.0
        %1750 = vmatprep.subr.mxu0 0.0
        %1751 = vmatpush1.msra.mxu0 0.0
        %1752 = vmatprep.subr.mxu0 0.0
        %1753 = vmatpush1.msra.mxu0 0.0
        %1754 = vmatprep.subr.mxu0 0.0
        %1755 = vmatpush1.msra.mxu0 0.0
        %1756 = vmatprep.subr.mxu0 0.0
        %1757 = vmatpush1.msra.mxu0 0.0
        %1758 = vmatprep.mubr.f32.mxu0 0.0
        %1759 = vmatmul.mubr.f32.gmra.mrb[0].mxu0 %v1692
        %v1760 = vpop.f32.mrb[0].mxu0
        %v1761 = vadd.f32 0.0, %v1760
        %v1762 = vpop.f32.mrb[0].mxu0
        %1763 = vdwg.mxu0
        %1765 = vrot.lane.b32.xlu0 %v1632, 112
        %v1766 = vpop.permute.xlu0 %1765
        %v1767 = vsel %vm1038, %v1766, 0
        %1769 = vmatprep.subr.mxu0 0.0
        %1770 = vmatpush1.msra.mxu0 %v1761
        %1771 = vmatprep.subr.mxu0 0.0
        %1772 = vmatpush1.msra.mxu0 0.0
        %1773 = vmatprep.subr.mxu0 0.0
        %1774 = vmatpush1.msra.mxu0 0.0
        %1775 = vmatprep.subr.mxu0 0.0
        %1776 = vmatpush1.msra.mxu0 0.0
        %1777 = vmatprep.subr.mxu0 0.0
        %1778 = vmatpush1.msra.mxu0 0.0
        %1779 = vmatprep.subr.mxu0 0.0
        %1780 = vmatpush1.msra.mxu0 0.0
        %1781 = vmatprep.subr.mxu0 0.0
        %1782 = vmatpush1.msra.mxu0 0.0
        %1783 = vmatprep.subr.mxu0 0.0
        %1784 = vmatpush1.msra.mxu0 0.0
        %1785 = vmatprep.subr.mxu0 0.0
        %1786 = vmatpush1.msra.mxu0 0.0
        %1787 = vmatprep.subr.mxu0 0.0
        %1788 = vmatpush1.msra.mxu0 0.0
        %1789 = vmatprep.subr.mxu0 0.0
        %1790 = vmatpush1.msra.mxu0 0.0
        %1791 = vmatprep.subr.mxu0 0.0
        %1792 = vmatpush1.msra.mxu0 0.0
        %1793 = vmatprep.subr.mxu0 0.0
        %1794 = vmatpush1.msra.mxu0 0.0
        %1795 = vmatprep.subr.mxu0 0.0
        %1796 = vmatpush1.msra.mxu0 0.0
        %1797 = vmatprep.subr.mxu0 0.0
        %1798 = vmatpush1.msra.mxu0 0.0
        %1799 = vmatprep.subr.mxu0 0.0
        %1800 = vmatpush1.msra.mxu0 0.0
        %1801 = vmatprep.subr.mxu0 0.0
        %1802 = vmatpush1.msra.mxu0 0.0
        %1803 = vmatprep.subr.mxu0 0.0
        %1804 = vmatpush1.msra.mxu0 0.0
        %1805 = vmatprep.subr.mxu0 0.0
        %1806 = vmatpush1.msra.mxu0 0.0
        %1807 = vmatprep.subr.mxu0 0.0
        %1808 = vmatpush1.msra.mxu0 0.0
        %1809 = vmatprep.subr.mxu0 0.0
        %1810 = vmatpush1.msra.mxu0 0.0
        %1811 = vmatprep.subr.mxu0 0.0
        %1812 = vmatpush1.msra.mxu0 0.0
        %1813 = vmatprep.subr.mxu0 0.0
        %1814 = vmatpush1.msra.mxu0 0.0
        %1815 = vmatprep.subr.mxu0 0.0
        %1816 = vmatpush1.msra.mxu0 0.0
        %1817 = vmatprep.subr.mxu0 0.0
        %1818 = vmatpush1.msra.mxu0 0.0
        %1819 = vmatprep.subr.mxu0 0.0
        %1820 = vmatpush1.msra.mxu0 0.0
        %1821 = vmatprep.subr.mxu0 0.0
        %1822 = vmatpush1.msra.mxu0 0.0
        %1823 = vmatprep.subr.mxu0 0.0
        %1824 = vmatpush1.msra.mxu0 0.0
        %1825 = vmatprep.subr.mxu0 0.0
        %1826 = vmatpush1.msra.mxu0 0.0
        %1827 = vmatprep.subr.mxu0 0.0
        %1828 = vmatpush1.msra.mxu0 0.0
        %1829 = vmatprep.subr.mxu0 0.0
        %1830 = vmatpush1.msra.mxu0 0.0
        %1831 = vmatprep.subr.mxu0 0.0
        %1832 = vmatpush1.msra.mxu0 0.0
        %1833 = vmatprep.mubr.f32.mxu0 0.0
        %1834 = vmatmul.mubr.f32.gmra.mrb[0].mxu0 %v1767
        %v1835 = vpop.f32.mrb[0].mxu0
        %v1836 = vadd.f32 0.0, %v1835
        %v1837 = vpop.f32.mrb[0].mxu0
        %1838 = vdwg.mxu0
        %v1840 = vsel %vm1038, %v1836, 0
        %1842 = vmatprep.subr.mxu0 0.0
        %1843 = vmatpush1.msra.mxu0 %v1031
        %1844 = vmatprep.subr.mxu0 0.0
        %1845 = vmatpush1.msra.mxu0 0.0
        %1846 = vmatprep.subr.mxu0 0.0
        %1847 = vmatpush1.msra.mxu0 0.0
        %1848 = vmatprep.subr.mxu0 0.0
        %1849 = vmatpush1.msra.mxu0 0.0
        %1850 = vmatprep.subr.mxu0 0.0
        %1851 = vmatpush1.msra.mxu0 0.0
        %1852 = vmatprep.subr.mxu0 0.0
        %1853 = vmatpush1.msra.mxu0 0.0
        %1854 = vmatprep.subr.mxu0 0.0
        %1855 = vmatpush1.msra.mxu0 0.0
        %1856 = vmatprep.subr.mxu0 0.0
        %1857 = vmatpush1.msra.mxu0 0.0
        %1858 = vmatprep.subr.mxu0 0.0
        %1859 = vmatpush1.msra.mxu0 0.0
        %1860 = vmatprep.subr.mxu0 0.0
        %1861 = vmatpush1.msra.mxu0 0.0
        %1862 = vmatprep.subr.mxu0 0.0
        %1863 = vmatpush1.msra.mxu0 0.0
        %1864 = vmatprep.subr.mxu0 0.0
        %1865 = vmatpush1.msra.mxu0 0.0
        %1866 = vmatprep.subr.mxu0 0.0
        %1867 = vmatpush1.msra.mxu0 0.0
        %1868 = vmatprep.subr.mxu0 0.0
        %1869 = vmatpush1.msra.mxu0 0.0
        %1870 = vmatprep.subr.mxu0 0.0
        %1871 = vmatpush1.msra.mxu0 0.0
        %1872 = vmatprep.subr.mxu0 0.0
        %1873 = vmatpush1.msra.mxu0 0.0
        %1874 = vmatprep.subr.mxu0 0.0
        %1875 = vmatpush1.msra.mxu0 0.0
        %1876 = vmatprep.subr.mxu0 0.0
        %1877 = vmatpush1.msra.mxu0 0.0
        %1878 = vmatprep.subr.mxu0 0.0
        %1879 = vmatpush1.msra.mxu0 0.0
        %1880 = vmatprep.subr.mxu0 0.0
        %1881 = vmatpush1.msra.mxu0 0.0
        %1882 = vmatprep.subr.mxu0 0.0
        %1883 = vmatpush1.msra.mxu0 0.0
        %1884 = vmatprep.subr.mxu0 0.0
        %1885 = vmatpush1.msra.mxu0 0.0
        %1886 = vmatprep.subr.mxu0 0.0
        %1887 = vmatpush1.msra.mxu0 0.0
        %1888 = vmatprep.subr.mxu0 0.0
        %1889 = vmatpush1.msra.mxu0 0.0
        %1890 = vmatprep.subr.mxu0 0.0
        %1891 = vmatpush1.msra.mxu0 0.0
        %1892 = vmatprep.subr.mxu0 0.0
        %1893 = vmatpush1.msra.mxu0 0.0
        %1894 = vmatprep.subr.mxu0 0.0
        %1895 = vmatpush1.msra.mxu0 0.0
        %1896 = vmatprep.subr.mxu0 0.0
        %1897 = vmatpush1.msra.mxu0 0.0
        %1898 = vmatprep.subr.mxu0 0.0
        %1899 = vmatpush1.msra.mxu0 0.0
        %1900 = vmatprep.subr.mxu0 0.0
        %1901 = vmatpush1.msra.mxu0 0.0
        %1902 = vmatprep.subr.mxu0 0.0
        %1903 = vmatpush1.msra.mxu0 0.0
        %1904 = vmatprep.subr.mxu0 0.0
        %1905 = vmatpush1.msra.mxu0 0.0
        %1906 = vmatprep.mubr.f32.mxu0 0.0
        %1907 = vmatmul.mubr.f32.gmra.mrb[0].mxu0 %v1840
        %v1908 = vpop.f32.mrb[0].mxu0
        %v1909 = vadd.f32 0.0, %v1908
        %v1910 = vpop.f32.mrb[0].mxu0
        %1911 = vdwg.mxu0
        %v1912 = vadd.f32 %v1614, %v1909
        %vm1913 = vcmask 261312
        %v1914 = vsel %vm1913, %v1037, -inf
        %1915 = vmax.xlane.f32.xlu0 %v1914
        %v1916 = vpop.xlane.xlu0 %1915
        %v1917 = vsub.f32 %v1037, %v1916
        %v1918 = vmul.f32 %v1917, 1.442695
        %v1919 = vpow.pop %v1918
        %1921 = vrot.lane.b32.xlu0 %v1919, 104
        %v1922 = vpop.permute.xlu0 %1921
        %v1924 = vsel %vm1038, %v1922, 0.0
        %1925 = vadd.xlane.f32.xlu0 %v1924
        %v1926 = vpop.xlane.xlu0 %1925
        %v1927 = vrcp.pop %v1926
        %v1928 = vmul.f32 %v1919, %v1927
        %v1929 = vsel %vm1913, %v1050, -inf
        %v1930 = vrot.slane %v1929, 4
        %v1931 = vmax.f32 %v1929, %v1930
        %v1932 = vrot.slane %v1931, 2
        %v1933 = vmax.f32 %v1931, %v1932
        %v1934 = vrot.slane %v1933, 1
        %v1935 = vmax.f32 %v1933, %v1934
        %v1936 = vsub.f32 %v1050, %v1935
        %v1937 = vmul.f32 %v1936, 1.442695
        %v1938 = vpow.pop %v1937
        %v1939 = vsel %vm1913, %v1938, 0.0
        %v1940 = vrot.slane %v1939, 4
        %v1941 = vadd.f32 %v1939, %v1940
        %v1942 = vrot.slane %v1941, 2
        %v1943 = vadd.f32 %v1941, %v1942
        %v1944 = vrot.slane %v1943, 1
        %v1945 = vadd.f32 %v1943, %v1944
        %v1946 = vrcp.pop %v1945
        %v1947 = vmul.f32 %v1938, %v1946
        %1949 = vrot.lane.b32.xlu0 %v1947, 104
        %v1950 = vpop.permute.xlu0 %1949
        %1952 = vxpose.xlu0.b32.start [1/16] %v1950, 128
        %1953 = vxpose.xlu0.b32.cont [2/16] 0.0, 128
        %1954 = vxpose.xlu0.b32.cont [3/16] 0.0, 128
        %1955 = vxpose.xlu0.b32.cont [4/16] 0.0, 128
        %1956 = vxpose.xlu0.b32.cont [5/16] 0.0, 128
        %1957 = vxpose.xlu0.b32.cont [6/16] 0.0, 128
        %1958 = vxpose.xlu0.b32.cont [7/16] 0.0, 128
        %1959 = vxpose.xlu0.b32.cont [8/16] 0.0, 128
        %1960 = vxpose.xlu0.b32.cont [9/16] 0.0, 128
        %1961 = vxpose.xlu0.b32.cont [10/16] 0.0, 128
        %1962 = vxpose.xlu0.b32.cont [11/16] 0.0, 128
        %1963 = vxpose.xlu0.b32.cont [12/16] 0.0, 128
        %1964 = vxpose.xlu0.b32.cont [13/16] 0.0, 128
        %1965 = vxpose.xlu0.b32.cont [14/16] 0.0, 128
        %1966 = vxpose.xlu0.b32.cont [15/16] 0.0, 128
        %1967 = vxpose.xlu0.b32.end [16/16] 0.0, 128
        %v1968 = vpop.trf.xlu0
        %v1969 = vpop.trf.xlu0
        %v1970 = vpop.trf.xlu0
        %v1971 = vpop.trf.xlu0
        %v1972 = vpop.trf.xlu0
        %v1973 = vpop.trf.xlu0
        %v1974 = vpop.trf.xlu0
        %v1975 = vpop.trf.xlu0
        %v1976 = vpop.trf.xlu0
        %v1977 = vpop.trf.xlu0
        %v1978 = vpop.trf.xlu0
        %v1979 = vpop.trf.xlu0
        %v1980 = vpop.trf.xlu0
        %v1981 = vpop.trf.xlu0
        %v1982 = vpop.trf.xlu0
        %v1983 = vpop.trf.xlu0
        %1984 = vrot.lane.b32.xlu0 %v1026, 104
        %v1985 = vpop.permute.xlu0 %1984
        %v1988 = vsel %vm1038, %v1968, 0
        %1990 = vmatprep.subr.mxu0 0.0
        %1991 = vmatpush1.msra.mxu0 %v1985
        %1992 = vmatprep.subr.mxu0 0.0
        %1993 = vmatpush1.msra.mxu0 0.0
        %1994 = vmatprep.subr.mxu0 0.0
        %1995 = vmatpush1.msra.mxu0 0.0
        %1996 = vmatprep.subr.mxu0 0.0
        %1997 = vmatpush1.msra.mxu0 0.0
        %1998 = vmatprep.subr.mxu0 0.0
        %1999 = vmatpush1.msra.mxu0 0.0
        %2000 = vmatprep.subr.mxu0 0.0
        %2001 = vmatpush1.msra.mxu0 0.0
        %2002 = vmatprep.subr.mxu0 0.0
        %2003 = vmatpush1.msra.mxu0 0.0
        %2004 = vmatprep.subr.mxu0 0.0
        %2005 = vmatpush1.msra.mxu0 0.0
        %2006 = vmatprep.subr.mxu0 0.0
        %2007 = vmatpush1.msra.mxu0 0.0
        %2008 = vmatprep.subr.mxu0 0.0
        %2009 = vmatpush1.msra.mxu0 0.0
        %2010 = vmatprep.subr.mxu0 0.0
        %2011 = vmatpush1.msra.mxu0 0.0
        %2012 = vmatprep.subr.mxu0 0.0
        %2013 = vmatpush1.msra.mxu0 0.0
        %2014 = vmatprep.subr.mxu0 0.0
        %2015 = vmatpush1.msra.mxu0 0.0
        %2016 = vmatprep.subr.mxu0 0.0
        %2017 = vmatpush1.msra.mxu0 0.0
        %2018 = vmatprep.subr.mxu0 0.0
        %2019 = vmatpush1.msra.mxu0 0.0
        %2020 = vmatprep.subr.mxu0 0.0
        %2021 = vmatpush1.msra.mxu0 0.0
        %2022 = vmatprep.subr.mxu0 0.0
        %2023 = vmatpush1.msra.mxu0 0.0
        %2024 = vmatprep.subr.mxu0 0.0
        %2025 = vmatpush1.msra.mxu0 0.0
        %2026 = vmatprep.subr.mxu0 0.0
        %2027 = vmatpush1.msra.mxu0 0.0
        %2028 = vmatprep.subr.mxu0 0.0
        %2029 = vmatpush1.msra.mxu0 0.0
        %2030 = vmatprep.subr.mxu0 0.0
        %2031 = vmatpush1.msra.mxu0 0.0
        %2032 = vmatprep.subr.mxu0 0.0
        %2033 = vmatpush1.msra.mxu0 0.0
        %2034 = vmatprep.subr.mxu0 0.0
        %2035 = vmatpush1.msra.mxu0 0.0
        %2036 = vmatprep.subr.mxu0 0.0
        %2037 = vmatpush1.msra.mxu0 0.0
        %2038 = vmatprep.subr.mxu0 0.0
        %2039 = vmatpush1.msra.mxu0 0.0
        %2040 = vmatprep.subr.mxu0 0.0
        %2041 = vmatpush1.msra.mxu0 0.0
        %2042 = vmatprep.subr.mxu0 0.0
        %2043 = vmatpush1.msra.mxu0 0.0
        %2044 = vmatprep.subr.mxu0 0.0
        %2045 = vmatpush1.msra.mxu0 0.0
        %2046 = vmatprep.subr.mxu0 0.0
        %2047 = vmatpush1.msra.mxu0 0.0
        %2048 = vmatprep.subr.mxu0 0.0
        %2049 = vmatpush1.msra.mxu0 0.0
        %2050 = vmatprep.subr.mxu0 0.0
        %2051 = vmatpush1.msra.mxu0 0.0
        %2052 = vmatprep.subr.mxu0 0.0
        %2053 = vmatpush1.msra.mxu0 0.0
        %2054 = vmatprep.mubr.f32.mxu0 0.0
        %2055 = vmatmul.mubr.f32.gmra.mrb[0].mxu0 %v1988
        %v2056 = vpop.f32.mrb[0].mxu0
        %v2057 = vadd.f32 0.0, %v2056
        %v2058 = vpop.f32.mrb[0].mxu0
        %2059 = vdwg.mxu0
        %2061 = vrot.lane.b32.xlu0 %v1928, 104
        %v2062 = vpop.permute.xlu0 %2061
        %v2063 = vsel %vm1038, %v2062, 0
        %2065 = vmatprep.subr.mxu0 0.0
        %2066 = vmatpush1.msra.mxu0 %v2057
        %2067 = vmatprep.subr.mxu0 0.0
        %2068 = vmatpush1.msra.mxu0 0.0
        %2069 = vmatprep.subr.mxu0 0.0
        %2070 = vmatpush1.msra.mxu0 0.0
        %2071 = vmatprep.subr.mxu0 0.0
        %2072 = vmatpush1.msra.mxu0 0.0
        %2073 = vmatprep.subr.mxu0 0.0
        %2074 = vmatpush1.msra.mxu0 0.0
        %2075 = vmatprep.subr.mxu0 0.0
        %2076 = vmatpush1.msra.mxu0 0.0
        %2077 = vmatprep.subr.mxu0 0.0
        %2078 = vmatpush1.msra.mxu0 0.0
        %2079 = vmatprep.subr.mxu0 0.0
        %2080 = vmatpush1.msra.mxu0 0.0
        %2081 = vmatprep.subr.mxu0 0.0
        %2082 = vmatpush1.msra.mxu0 0.0
        %2083 = vmatprep.subr.mxu0 0.0
        %2084 = vmatpush1.msra.mxu0 0.0
        %2085 = vmatprep.subr.mxu0 0.0
        %2086 = vmatpush1.msra.mxu0 0.0
        %2087 = vmatprep.subr.mxu0 0.0
        %2088 = vmatpush1.msra.mxu0 0.0
        %2089 = vmatprep.subr.mxu0 0.0
        %2090 = vmatpush1.msra.mxu0 0.0
        %2091 = vmatprep.subr.mxu0 0.0
        %2092 = vmatpush1.msra.mxu0 0.0
        %2093 = vmatprep.subr.mxu0 0.0
        %2094 = vmatpush1.msra.mxu0 0.0
        %2095 = vmatprep.subr.mxu0 0.0
        %2096 = vmatpush1.msra.mxu0 0.0
        %2097 = vmatprep.subr.mxu0 0.0
        %2098 = vmatpush1.msra.mxu0 0.0
        %2099 = vmatprep.subr.mxu0 0.0
        %2100 = vmatpush1.msra.mxu0 0.0
        %2101 = vmatprep.subr.mxu0 0.0
        %2102 = vmatpush1.msra.mxu0 0.0
        %2103 = vmatprep.subr.mxu0 0.0
        %2104 = vmatpush1.msra.mxu0 0.0
        %2105 = vmatprep.subr.mxu0 0.0
        %2106 = vmatpush1.msra.mxu0 0.0
        %2107 = vmatprep.subr.mxu0 0.0
        %2108 = vmatpush1.msra.mxu0 0.0
        %2109 = vmatprep.subr.mxu0 0.0
        %2110 = vmatpush1.msra.mxu0 0.0
        %2111 = vmatprep.subr.mxu0 0.0
        %2112 = vmatpush1.msra.mxu0 0.0
        %2113 = vmatprep.subr.mxu0 0.0
        %2114 = vmatpush1.msra.mxu0 0.0
        %2115 = vmatprep.subr.mxu0 0.0
        %2116 = vmatpush1.msra.mxu0 0.0
        %2117 = vmatprep.subr.mxu0 0.0
        %2118 = vmatpush1.msra.mxu0 0.0
        %2119 = vmatprep.subr.mxu0 0.0
        %2120 = vmatpush1.msra.mxu0 0.0
        %2121 = vmatprep.subr.mxu0 0.0
        %2122 = vmatpush1.msra.mxu0 0.0
        %2123 = vmatprep.subr.mxu0 0.0
        %2124 = vmatpush1.msra.mxu0 0.0
        %2125 = vmatprep.subr.mxu0 0.0
        %2126 = vmatpush1.msra.mxu0 0.0
        %2127 = vmatprep.subr.mxu0 0.0
        %2128 = vmatpush1.msra.mxu0 0.0
        %2129 = vmatprep.mubr.f32.mxu0 0.0
        %2130 = vmatmul.mubr.f32.gmra.mrb[0].mxu0 %v2063
        %v2131 = vpop.f32.mrb[0].mxu0
        %v2132 = vadd.f32 0.0, %v2131
        %v2133 = vpop.f32.mrb[0].mxu0
        %2134 = vdwg.mxu0
        %v2136 = vsel %vm1038, %v2132, 0
        %2138 = vmatprep.subr.mxu0 0.0
        %2139 = vmatpush1.msra.mxu0 %v1032
        %2140 = vmatprep.subr.mxu0 0.0
        %2141 = vmatpush1.msra.mxu0 0.0
        %2142 = vmatprep.subr.mxu0 0.0
        %2143 = vmatpush1.msra.mxu0 0.0
        %2144 = vmatprep.subr.mxu0 0.0
        %2145 = vmatpush1.msra.mxu0 0.0
        %2146 = vmatprep.subr.mxu0 0.0
        %2147 = vmatpush1.msra.mxu0 0.0
        %2148 = vmatprep.subr.mxu0 0.0
        %2149 = vmatpush1.msra.mxu0 0.0
        %2150 = vmatprep.subr.mxu0 0.0
        %2151 = vmatpush1.msra.mxu0 0.0
        %2152 = vmatprep.subr.mxu0 0.0
        %2153 = vmatpush1.msra.mxu0 0.0
        %2154 = vmatprep.subr.mxu0 0.0
        %2155 = vmatpush1.msra.mxu0 0.0
        %2156 = vmatprep.subr.mxu0 0.0
        %2157 = vmatpush1.msra.mxu0 0.0
        %2158 = vmatprep.subr.mxu0 0.0
        %2159 = vmatpush1.msra.mxu0 0.0
        %2160 = vmatprep.subr.mxu0 0.0
        %2161 = vmatpush1.msra.mxu0 0.0
        %2162 = vmatprep.subr.mxu0 0.0
        %2163 = vmatpush1.msra.mxu0 0.0
        %2164 = vmatprep.subr.mxu0 0.0
        %2165 = vmatpush1.msra.mxu0 0.0
        %2166 = vmatprep.subr.mxu0 0.0
        %2167 = vmatpush1.msra.mxu0 0.0
        %2168 = vmatprep.subr.mxu0 0.0
        %2169 = vmatpush1.msra.mxu0 0.0
        %2170 = vmatprep.subr.mxu0 0.0
        %2171 = vmatpush1.msra.mxu0 0.0
        %2172 = vmatprep.subr.mxu0 0.0
        %2173 = vmatpush1.msra.mxu0 0.0
        %2174 = vmatprep.subr.mxu0 0.0
        %2175 = vmatpush1.msra.mxu0 0.0
        %2176 = vmatprep.subr.mxu0 0.0
        %2177 = vmatpush1.msra.mxu0 0.0
        %2178 = vmatprep.subr.mxu0 0.0
        %2179 = vmatpush1.msra.mxu0 0.0
        %2180 = vmatprep.subr.mxu0 0.0
        %2181 = vmatpush1.msra.mxu0 0.0
        %2182 = vmatprep.subr.mxu0 0.0
        %2183 = vmatpush1.msra.mxu0 0.0
        %2184 = vmatprep.subr.mxu0 0.0
        %2185 = vmatpush1.msra.mxu0 0.0
        %2186 = vmatprep.subr.mxu0 0.0
        %2187 = vmatpush1.msra.mxu0 0.0
        %2188 = vmatprep.subr.mxu0 0.0
        %2189 = vmatpush1.msra.mxu0 0.0
        %2190 = vmatprep.subr.mxu0 0.0
        %2191 = vmatpush1.msra.mxu0 0.0
        %2192 = vmatprep.subr.mxu0 0.0
        %2193 = vmatpush1.msra.mxu0 0.0
        %2194 = vmatprep.subr.mxu0 0.0
        %2195 = vmatpush1.msra.mxu0 0.0
        %2196 = vmatprep.subr.mxu0 0.0
        %2197 = vmatpush1.msra.mxu0 0.0
        %2198 = vmatprep.subr.mxu0 0.0
        %2199 = vmatpush1.msra.mxu0 0.0
        %2200 = vmatprep.subr.mxu0 0.0
        %2201 = vmatpush1.msra.mxu0 0.0
        %2202 = vmatprep.mubr.f32.mxu0 0.0
        %2203 = vmatmul.mubr.f32.gmra.mrb[0].mxu0 %v2136
        %v2204 = vpop.f32.mrb[0].mxu0
        %v2205 = vadd.f32 0.0, %v2204
        %v2206 = vpop.f32.mrb[0].mxu0
        %2207 = vdwg.mxu0
        %v2208 = vadd.f32 %v1912, %v2205
        %vm2209 = vcmask 326912
        %v2210 = vsel %vm2209, %v1037, -inf
        %2211 = vmax.xlane.f32.xlu0 %v2210
        %v2212 = vpop.xlane.xlu0 %2211
        %v2213 = vsub.f32 %v1037, %v2212
        %v2214 = vmul.f32 %v2213, 1.442695
        %v2215 = vpow.pop %v2214
        %2217 = vrot.lane.b32.xlu0 %v2215, 96
        %v2218 = vpop.permute.xlu0 %2217
        %v2220 = vsel %vm1038, %v2218, 0.0
        %2221 = vadd.xlane.f32.xlu0 %v2220
        %v2222 = vpop.xlane.xlu0 %2221
        %v2223 = vrcp.pop %v2222
        %v2224 = vmul.f32 %v2215, %v2223
        %v2225 = vsel %vm2209, %v1050, -inf
        %v2226 = vrot.slane %v2225, 4
        %v2227 = vmax.f32 %v2225, %v2226
        %v2228 = vrot.slane %v2227, 2
        %v2229 = vmax.f32 %v2227, %v2228
        %v2230 = vrot.slane %v2229, 1
        %v2231 = vmax.f32 %v2229, %v2230
        %v2232 = vsub.f32 %v1050, %v2231
        %v2233 = vmul.f32 %v2232, 1.442695
        %v2234 = vpow.pop %v2233
        %v2235 = vsel %vm2209, %v2234, 0.0
        %v2236 = vrot.slane %v2235, 4
        %v2237 = vadd.f32 %v2235, %v2236
        %v2238 = vrot.slane %v2237, 2
        %v2239 = vadd.f32 %v2237, %v2238
        %v2240 = vrot.slane %v2239, 1
        %v2241 = vadd.f32 %v2239, %v2240
        %v2242 = vrcp.pop %v2241
        %v2243 = vmul.f32 %v2234, %v2242
        %2245 = vrot.lane.b32.xlu0 %v2243, 96
        %v2246 = vpop.permute.xlu0 %2245
        %2248 = vxpose.xlu0.b32.start [1/16] %v2246, 128
        %2249 = vxpose.xlu0.b32.cont [2/16] 0.0, 128
        %2250 = vxpose.xlu0.b32.cont [3/16] 0.0, 128
        %2251 = vxpose.xlu0.b32.cont [4/16] 0.0, 128
        %2252 = vxpose.xlu0.b32.cont [5/16] 0.0, 128
        %2253 = vxpose.xlu0.b32.cont [6/16] 0.0, 128
        %2254 = vxpose.xlu0.b32.cont [7/16] 0.0, 128
        %2255 = vxpose.xlu0.b32.cont [8/16] 0.0, 128
        %2256 = vxpose.xlu0.b32.cont [9/16] 0.0, 128
        %2257 = vxpose.xlu0.b32.cont [10/16] 0.0, 128
        %2258 = vxpose.xlu0.b32.cont [11/16] 0.0, 128
        %2259 = vxpose.xlu0.b32.cont [12/16] 0.0, 128
        %2260 = vxpose.xlu0.b32.cont [13/16] 0.0, 128
        %2261 = vxpose.xlu0.b32.cont [14/16] 0.0, 128
        %2262 = vxpose.xlu0.b32.cont [15/16] 0.0, 128
        %2263 = vxpose.xlu0.b32.end [16/16] 0.0, 128
        %v2264 = vpop.trf.xlu0
        %v2265 = vpop.trf.xlu0
        %v2266 = vpop.trf.xlu0
        %v2267 = vpop.trf.xlu0
        %v2268 = vpop.trf.xlu0
        %v2269 = vpop.trf.xlu0
        %v2270 = vpop.trf.xlu0
        %v2271 = vpop.trf.xlu0
        %v2272 = vpop.trf.xlu0
        %v2273 = vpop.trf.xlu0
        %v2274 = vpop.trf.xlu0
        %v2275 = vpop.trf.xlu0
        %v2276 = vpop.trf.xlu0
        %v2277 = vpop.trf.xlu0
        %v2278 = vpop.trf.xlu0
        %v2279 = vpop.trf.xlu0
        %2280 = vrot.lane.b32.xlu0 %v1026, 96
        %v2281 = vpop.permute.xlu0 %2280
        %v2284 = vsel %vm1038, %v2264, 0
        %2286 = vmatprep.subr.mxu0 0.0
        %2287 = vmatpush1.msra.mxu0 %v2281
        %2288 = vmatprep.subr.mxu0 0.0
        %2289 = vmatpush1.msra.mxu0 0.0
        %2290 = vmatprep.subr.mxu0 0.0
        %2291 = vmatpush1.msra.mxu0 0.0
        %2292 = vmatprep.subr.mxu0 0.0
        %2293 = vmatpush1.msra.mxu0 0.0
        %2294 = vmatprep.subr.mxu0 0.0
        %2295 = vmatpush1.msra.mxu0 0.0
        %2296 = vmatprep.subr.mxu0 0.0
        %2297 = vmatpush1.msra.mxu0 0.0
        %2298 = vmatprep.subr.mxu0 0.0
        %2299 = vmatpush1.msra.mxu0 0.0
        %2300 = vmatprep.subr.mxu0 0.0
        %2301 = vmatpush1.msra.mxu0 0.0
        %2302 = vmatprep.subr.mxu0 0.0
        %2303 = vmatpush1.msra.mxu0 0.0
        %2304 = vmatprep.subr.mxu0 0.0
        %2305 = vmatpush1.msra.mxu0 0.0
        %2306 = vmatprep.subr.mxu0 0.0
        %2307 = vmatpush1.msra.mxu0 0.0
        %2308 = vmatprep.subr.mxu0 0.0
        %2309 = vmatpush1.msra.mxu0 0.0
        %2310 = vmatprep.subr.mxu0 0.0
        %2311 = vmatpush1.msra.mxu0 0.0
        %2312 = vmatprep.subr.mxu0 0.0
        %2313 = vmatpush1.msra.mxu0 0.0
        %2314 = vmatprep.subr.mxu0 0.0
        %2315 = vmatpush1.msra.mxu0 0.0
        %2316 = vmatprep.subr.mxu0 0.0
        %2317 = vmatpush1.msra.mxu0 0.0
        %2318 = vmatprep.subr.mxu0 0.0
        %2319 = vmatpush1.msra.mxu0 0.0
        %2320 = vmatprep.subr.mxu0 0.0
        %2321 = vmatpush1.msra.mxu0 0.0
        %2322 = vmatprep.subr.mxu0 0.0
        %2323 = vmatpush1.msra.mxu0 0.0
        %2324 = vmatprep.subr.mxu0 0.0
        %2325 = vmatpush1.msra.mxu0 0.0
        %2326 = vmatprep.subr.mxu0 0.0
        %2327 = vmatpush1.msra.mxu0 0.0
        %2328 = vmatprep.subr.mxu0 0.0
        %2329 = vmatpush1.msra.mxu0 0.0
        %2330 = vmatprep.subr.mxu0 0.0
        %2331 = vmatpush1.msra.mxu0 0.0
        %2332 = vmatprep.subr.mxu0 0.0
        %2333 = vmatpush1.msra.mxu0 0.0
        %2334 = vmatprep.subr.mxu0 0.0
        %2335 = vmatpush1.msra.mxu0 0.0
        %2336 = vmatprep.subr.mxu0 0.0
        %2337 = vmatpush1.msra.mxu0 0.0
        %2338 = vmatprep.subr.mxu0 0.0
        %2339 = vmatpush1.msra.mxu0 0.0
        %2340 = vmatprep.subr.mxu0 0.0
        %2341 = vmatpush1.msra.mxu0 0.0
        %2342 = vmatprep.subr.mxu0 0.0
        %2343 = vmatpush1.msra.mxu0 0.0
        %2344 = vmatprep.subr.mxu0 0.0
        %2345 = vmatpush1.msra.mxu0 0.0
        %2346 = vmatprep.subr.mxu0 0.0
        %2347 = vmatpush1.msra.mxu0 0.0
        %2348 = vmatprep.subr.mxu0 0.0
        %2349 = vmatpush1.msra.mxu0 0.0
        %2350 = vmatprep.mubr.f32.mxu0 0.0
        %2351 = vmatmul.mubr.f32.gmra.mrb[0].mxu0 %v2284
        %v2352 = vpop.f32.mrb[0].mxu0
        %v2353 = vadd.f32 0.0, %v2352
        %v2354 = vpop.f32.mrb[0].mxu0
        %2355 = vdwg.mxu0
        %2357 = vrot.lane.b32.xlu0 %v2224, 96
        %v2358 = vpop.permute.xlu0 %2357
        %v2359 = vsel %vm1038, %v2358, 0
        %2361 = vmatprep.subr.mxu0 0.0
        %2362 = vmatpush1.msra.mxu0 %v2353
        %2363 = vmatprep.subr.mxu0 0.0
        %2364 = vmatpush1.msra.mxu0 0.0
        %2365 = vmatprep.subr.mxu0 0.0
        %2366 = vmatpush1.msra.mxu0 0.0
        %2367 = vmatprep.subr.mxu0 0.0
        %2368 = vmatpush1.msra.mxu0 0.0
        %2369 = vmatprep.subr.mxu0 0.0
        %2370 = vmatpush1.msra.mxu0 0.0
        %2371 = vmatprep.subr.mxu0 0.0
        %2372 = vmatpush1.msra.mxu0 0.0
        %2373 = vmatprep.subr.mxu0 0.0
        %2374 = vmatpush1.msra.mxu0 0.0
        %2375 = vmatprep.subr.mxu0 0.0
        %2376 = vmatpush1.msra.mxu0 0.0
        %2377 = vmatprep.subr.mxu0 0.0
        %2378 = vmatpush1.msra.mxu0 0.0
        %2379 = vmatprep.subr.mxu0 0.0
        %2380 = vmatpush1.msra.mxu0 0.0
        %2381 = vmatprep.subr.mxu0 0.0
        %2382 = vmatpush1.msra.mxu0 0.0
        %2383 = vmatprep.subr.mxu0 0.0
        %2384 = vmatpush1.msra.mxu0 0.0
        %2385 = vmatprep.subr.mxu0 0.0
        %2386 = vmatpush1.msra.mxu0 0.0
        %2387 = vmatprep.subr.mxu0 0.0
        %2388 = vmatpush1.msra.mxu0 0.0
        %2389 = vmatprep.subr.mxu0 0.0
        %2390 = vmatpush1.msra.mxu0 0.0
        %2391 = vmatprep.subr.mxu0 0.0
        %2392 = vmatpush1.msra.mxu0 0.0
        %2393 = vmatprep.subr.mxu0 0.0
        %2394 = vmatpush1.msra.mxu0 0.0
        %2395 = vmatprep.subr.mxu0 0.0
        %2396 = vmatpush1.msra.mxu0 0.0
        %2397 = vmatprep.subr.mxu0 0.0
        %2398 = vmatpush1.msra.mxu0 0.0
        %2399 = vmatprep.subr.mxu0 0.0
        %2400 = vmatpush1.msra.mxu0 0.0
        %2401 = vmatprep.subr.mxu0 0.0
        %2402 = vmatpush1.msra.mxu0 0.0
        %2403 = vmatprep.subr.mxu0 0.0
        %2404 = vmatpush1.msra.mxu0 0.0
        %2405 = vmatprep.subr.mxu0 0.0
        %2406 = vmatpush1.msra.mxu0 0.0
        %2407 = vmatprep.subr.mxu0 0.0
        %2408 = vmatpush1.msra.mxu0 0.0
        %2409 = vmatprep.subr.mxu0 0.0
        %2410 = vmatpush1.msra.mxu0 0.0
        %2411 = vmatprep.subr.mxu0 0.0
        %2412 = vmatpush1.msra.mxu0 0.0
        %2413 = vmatprep.subr.mxu0 0.0
        %2414 = vmatpush1.msra.mxu0 0.0
        %2415 = vmatprep.subr.mxu0 0.0
        %2416 = vmatpush1.msra.mxu0 0.0
        %2417 = vmatprep.subr.mxu0 0.0
        %2418 = vmatpush1.msra.mxu0 0.0
        %2419 = vmatprep.subr.mxu0 0.0
        %2420 = vmatpush1.msra.mxu0 0.0
        %2421 = vmatprep.subr.mxu0 0.0
        %2422 = vmatpush1.msra.mxu0 0.0
        %2423 = vmatprep.subr.mxu0 0.0
        %2424 = vmatpush1.msra.mxu0 0.0
        %2425 = vmatprep.mubr.f32.mxu0 0.0
        %2426 = vmatmul.mubr.f32.gmra.mrb[0].mxu0 %v2359
        %v2427 = vpop.f32.mrb[0].mxu0
        %v2428 = vadd.f32 0.0, %v2427
        %v2429 = vpop.f32.mrb[0].mxu0
        %2430 = vdwg.mxu0
        %v2432 = vsel %vm1038, %v2428, 0
        %2434 = vmatprep.subr.mxu0 0.0
        %2435 = vmatpush1.msra.mxu0 %v1033
        %2436 = vmatprep.subr.mxu0 0.0
        %2437 = vmatpush1.msra.mxu0 0.0
        %2438 = vmatprep.subr.mxu0 0.0
        %2439 = vmatpush1.msra.mxu0 0.0
        %2440 = vmatprep.subr.mxu0 0.0
        %2441 = vmatpush1.msra.mxu0 0.0
        %2442 = vmatprep.subr.mxu0 0.0
        %2443 = vmatpush1.msra.mxu0 0.0
        %2444 = vmatprep.subr.mxu0 0.0
        %2445 = vmatpush1.msra.mxu0 0.0
        %2446 = vmatprep.subr.mxu0 0.0
        %2447 = vmatpush1.msra.mxu0 0.0
        %2448 = vmatprep.subr.mxu0 0.0
        %2449 = vmatpush1.msra.mxu0 0.0
        %2450 = vmatprep.subr.mxu0 0.0
        %2451 = vmatpush1.msra.mxu0 0.0
        %2452 = vmatprep.subr.mxu0 0.0
        %2453 = vmatpush1.msra.mxu0 0.0
        %2454 = vmatprep.subr.mxu0 0.0
        %2455 = vmatpush1.msra.mxu0 0.0
        %2456 = vmatprep.subr.mxu0 0.0
        %2457 = vmatpush1.msra.mxu0 0.0
        %2458 = vmatprep.subr.mxu0 0.0
        %2459 = vmatpush1.msra.mxu0 0.0
        %2460 = vmatprep.subr.mxu0 0.0
        %2461 = vmatpush1.msra.mxu0 0.0
        %2462 = vmatprep.subr.mxu0 0.0
        %2463 = vmatpush1.msra.mxu0 0.0
        %2464 = vmatprep.subr.mxu0 0.0
        %2465 = vmatpush1.msra.mxu0 0.0
        %2466 = vmatprep.subr.mxu0 0.0
        %2467 = vmatpush1.msra.mxu0 0.0
        %2468 = vmatprep.subr.mxu0 0.0
        %2469 = vmatpush1.msra.mxu0 0.0
        %2470 = vmatprep.subr.mxu0 0.0
        %2471 = vmatpush1.msra.mxu0 0.0
        %2472 = vmatprep.subr.mxu0 0.0
        %2473 = vmatpush1.msra.mxu0 0.0
        %2474 = vmatprep.subr.mxu0 0.0
        %2475 = vmatpush1.msra.mxu0 0.0
        %2476 = vmatprep.subr.mxu0 0.0
        %2477 = vmatpush1.msra.mxu0 0.0
        %2478 = vmatprep.subr.mxu0 0.0
        %2479 = vmatpush1.msra.mxu0 0.0
        %2480 = vmatprep.subr.mxu0 0.0
        %2481 = vmatpush1.msra.mxu0 0.0
        %2482 = vmatprep.subr.mxu0 0.0
        %2483 = vmatpush1.msra.mxu0 0.0
        %2484 = vmatprep.subr.mxu0 0.0
        %2485 = vmatpush1.msra.mxu0 0.0
        %2486 = vmatprep.subr.mxu0 0.0
        %2487 = vmatpush1.msra.mxu0 0.0
        %2488 = vmatprep.subr.mxu0 0.0
        %2489 = vmatpush1.msra.mxu0 0.0
        %2490 = vmatprep.subr.mxu0 0.0
        %2491 = vmatpush1.msra.mxu0 0.0
        %2492 = vmatprep.subr.mxu0 0.0
        %2493 = vmatpush1.msra.mxu0 0.0
        %2494 = vmatprep.subr.mxu0 0.0
        %2495 = vmatpush1.msra.mxu0 0.0
        %2496 = vmatprep.subr.mxu0 0.0
        %2497 = vmatpush1.msra.mxu0 0.0
        %2498 = vmatprep.mubr.f32.mxu0 0.0
        %2499 = vmatmul.mubr.f32.gmra.mrb[0].mxu0 %v2432
        %v2500 = vpop.f32.mrb[0].mxu0
        %v2501 = vadd.f32 0.0, %v2500
        %v2502 = vpop.f32.mrb[0].mxu0
        %2503 = vdwg.mxu0
        %v2504 = vadd.f32 %v2208, %v2501
        %vm2505 = vcmask 392512
        %v2506 = vsel %vm2505, %v1037, -inf
        %2507 = vmax.xlane.f32.xlu0 %v2506
        %v2508 = vpop.xlane.xlu0 %2507
        %v2509 = vsub.f32 %v1037, %v2508
        %v2510 = vmul.f32 %v2509, 1.442695
        %v2511 = vpow.pop %v2510
        %2513 = vrot.lane.b32.xlu0 %v2511, 88
        %v2514 = vpop.permute.xlu0 %2513
        %v2516 = vsel %vm1038, %v2514, 0.0
        %2517 = vadd.xlane.f32.xlu0 %v2516
        %v2518 = vpop.xlane.xlu0 %2517
        %v2519 = vrcp.pop %v2518
        %v2520 = vmul.f32 %v2511, %v2519
        %v2521 = vsel %vm2505, %v1050, -inf
        %v2522 = vrot.slane %v2521, 4
        %v2523 = vmax.f32 %v2521, %v2522
        %v2524 = vrot.slane %v2523, 2
        %v2525 = vmax.f32 %v2523, %v2524
        %v2526 = vrot.slane %v2525, 1
        %v2527 = vmax.f32 %v2525, %v2526
        %v2528 = vsub.f32 %v1050, %v2527
        %v2529 = vmul.f32 %v2528, 1.442695
        %v2530 = vpow.pop %v2529
        %v2531 = vsel %vm2505, %v2530, 0.0
        %v2532 = vrot.slane %v2531, 4
        %v2533 = vadd.f32 %v2531, %v2532
        %v2534 = vrot.slane %v2533, 2
        %v2535 = vadd.f32 %v2533, %v2534
        %v2536 = vrot.slane %v2535, 1
        %v2537 = vadd.f32 %v2535, %v2536
        %v2538 = vrcp.pop %v2537
        %v2539 = vmul.f32 %v2530, %v2538
        %2541 = vrot.lane.b32.xlu0 %v2539, 88
        %v2542 = vpop.permute.xlu0 %2541
        %2544 = vxpose.xlu0.b32.start [1/16] %v2542, 128
        %2545 = vxpose.xlu0.b32.cont [2/16] 0.0, 128
        %2546 = vxpose.xlu0.b32.cont [3/16] 0.0, 128
        %2547 = vxpose.xlu0.b32.cont [4/16] 0.0, 128
        %2548 = vxpose.xlu0.b32.cont [5/16] 0.0, 128
        %2549 = vxpose.xlu0.b32.cont [6/16] 0.0, 128
        %2550 = vxpose.xlu0.b32.cont [7/16] 0.0, 128
        %2551 = vxpose.xlu0.b32.cont [8/16] 0.0, 128
        %2552 = vxpose.xlu0.b32.cont [9/16] 0.0, 128
        %2553 = vxpose.xlu0.b32.cont [10/16] 0.0, 128
        %2554 = vxpose.xlu0.b32.cont [11/16] 0.0, 128
        %2555 = vxpose.xlu0.b32.cont [12/16] 0.0, 128
        %2556 = vxpose.xlu0.b32.cont [13/16] 0.0, 128
        %2557 = vxpose.xlu0.b32.cont [14/16] 0.0, 128
        %2558 = vxpose.xlu0.b32.cont [15/16] 0.0, 128
        %2559 = vxpose.xlu0.b32.end [16/16] 0.0, 128
        %v2560 = vpop.trf.xlu0
        %v2561 = vpop.trf.xlu0
        %v2562 = vpop.trf.xlu0
        %v2563 = vpop.trf.xlu0
        %v2564 = vpop.trf.xlu0
        %v2565 = vpop.trf.xlu0
        %v2566 = vpop.trf.xlu0
        %v2567 = vpop.trf.xlu0
        %v2568 = vpop.trf.xlu0
        %v2569 = vpop.trf.xlu0
        %v2570 = vpop.trf.xlu0
        %v2571 = vpop.trf.xlu0
        %v2572 = vpop.trf.xlu0
        %v2573 = vpop.trf.xlu0
        %v2574 = vpop.trf.xlu0
        %v2575 = vpop.trf.xlu0
        %2576 = vrot.lane.b32.xlu0 %v1026, 88
        %v2577 = vpop.permute.xlu0 %2576
        %v2580 = vsel %vm1038, %v2560, 0
        %2582 = vmatprep.subr.mxu0 0.0
        %2583 = vmatpush1.msra.mxu0 %v2577
        %2584 = vmatprep.subr.mxu0 0.0
        %2585 = vmatpush1.msra.mxu0 0.0
        %2586 = vmatprep.subr.mxu0 0.0
        %2587 = vmatpush1.msra.mxu0 0.0
        %2588 = vmatprep.subr.mxu0 0.0
        %2589 = vmatpush1.msra.mxu0 0.0
        %2590 = vmatprep.subr.mxu0 0.0
        %2591 = vmatpush1.msra.mxu0 0.0
        %2592 = vmatprep.subr.mxu0 0.0
        %2593 = vmatpush1.msra.mxu0 0.0
        %2594 = vmatprep.subr.mxu0 0.0
        %2595 = vmatpush1.msra.mxu0 0.0
        %2596 = vmatprep.subr.mxu0 0.0
        %2597 = vmatpush1.msra.mxu0 0.0
        %2598 = vmatprep.subr.mxu0 0.0
        %2599 = vmatpush1.msra.mxu0 0.0
        %2600 = vmatprep.subr.mxu0 0.0
        %2601 = vmatpush1.msra.mxu0 0.0
        %2602 = vmatprep.subr.mxu0 0.0
        %2603 = vmatpush1.msra.mxu0 0.0
        %2604 = vmatprep.subr.mxu0 0.0
        %2605 = vmatpush1.msra.mxu0 0.0
        %2606 = vmatprep.subr.mxu0 0.0
        %2607 = vmatpush1.msra.mxu0 0.0
        %2608 = vmatprep.subr.mxu0 0.0
        %2609 = vmatpush1.msra.mxu0 0.0
        %2610 = vmatprep.subr.mxu0 0.0
        %2611 = vmatpush1.msra.mxu0 0.0
        %2612 = vmatprep.subr.mxu0 0.0
        %2613 = vmatpush1.msra.mxu0 0.0
        %2614 = vmatprep.subr.mxu0 0.0
        %2615 = vmatpush1.msra.mxu0 0.0
        %2616 = vmatprep.subr.mxu0 0.0
        %2617 = vmatpush1.msra.mxu0 0.0
        %2618 = vmatprep.subr.mxu0 0.0
        %2619 = vmatpush1.msra.mxu0 0.0
        %2620 = vmatprep.subr.mxu0 0.0
        %2621 = vmatpush1.msra.mxu0 0.0
        %2622 = vmatprep.subr.mxu0 0.0
        %2623 = vmatpush1.msra.mxu0 0.0
        %2624 = vmatprep.subr.mxu0 0.0
        %2625 = vmatpush1.msra.mxu0 0.0
        %2626 = vmatprep.subr.mxu0 0.0
        %2627 = vmatpush1.msra.mxu0 0.0
        %2628 = vmatprep.subr.mxu0 0.0
        %2629 = vmatpush1.msra.mxu0 0.0
        %2630 = vmatprep.subr.mxu0 0.0
        %2631 = vmatpush1.msra.mxu0 0.0
        %2632 = vmatprep.subr.mxu0 0.0
        %2633 = vmatpush1.msra.mxu0 0.0
        %2634 = vmatprep.subr.mxu0 0.0
        %2635 = vmatpush1.msra.mxu0 0.0
        %2636 = vmatprep.subr.mxu0 0.0
        %2637 = vmatpush1.msra.mxu0 0.0
        %2638 = vmatprep.subr.mxu0 0.0
        %2639 = vmatpush1.msra.mxu0 0.0
        %2640 = vmatprep.subr.mxu0 0.0
        %2641 = vmatpush1.msra.mxu0 0.0
        %2642 = vmatprep.subr.mxu0 0.0
        %2643 = vmatpush1.msra.mxu0 0.0
        %2644 = vmatprep.subr.mxu0 0.0
        %2645 = vmatpush1.msra.mxu0 0.0
        %2646 = vmatprep.mubr.f32.mxu0 0.0
        %2647 = vmatmul.mubr.f32.gmra.mrb[0].mxu0 %v2580
        %v2648 = vpop.f32.mrb[0].mxu0
        %v2649 = vadd.f32 0.0, %v2648
        %v2650 = vpop.f32.mrb[0].mxu0
        %2651 = vdwg.mxu0
        %2653 = vrot.lane.b32.xlu0 %v2520, 88
        %v2654 = vpop.permute.xlu0 %2653
        %v2655 = vsel %vm1038, %v2654, 0
        %2657 = vmatprep.subr.mxu0 0.0
        %2658 = vmatpush1.msra.mxu0 %v2649
        %2659 = vmatprep.subr.mxu0 0.0
        %2660 = vmatpush1.msra.mxu0 0.0
        %2661 = vmatprep.subr.mxu0 0.0
        %2662 = vmatpush1.msra.mxu0 0.0
        %2663 = vmatprep.subr.mxu0 0.0
        %2664 = vmatpush1.msra.mxu0 0.0
        %2665 = vmatprep.subr.mxu0 0.0
        %2666 = vmatpush1.msra.mxu0 0.0
        %2667 = vmatprep.subr.mxu0 0.0
        %2668 = vmatpush1.msra.mxu0 0.0
        %2669 = vmatprep.subr.mxu0 0.0
        %2670 = vmatpush1.msra.mxu0 0.0
        %2671 = vmatprep.subr.mxu0 0.0
        %2672 = vmatpush1.msra.mxu0 0.0
        %2673 = vmatprep.subr.mxu0 0.0
        %2674 = vmatpush1.msra.mxu0 0.0
        %2675 = vmatprep.subr.mxu0 0.0
        %2676 = vmatpush1.msra.mxu0 0.0
        %2677 = vmatprep.subr.mxu0 0.0
        %2678 = vmatpush1.msra.mxu0 0.0
        %2679 = vmatprep.subr.mxu0 0.0
        %2680 = vmatpush1.msra.mxu0 0.0
        %2681 = vmatprep.subr.mxu0 0.0
        %2682 = vmatpush1.msra.mxu0 0.0
        %2683 = vmatprep.subr.mxu0 0.0
        %2684 = vmatpush1.msra.mxu0 0.0
        %2685 = vmatprep.subr.mxu0 0.0
        %2686 = vmatpush1.msra.mxu0 0.0
        %2687 = vmatprep.subr.mxu0 0.0
        %2688 = vmatpush1.msra.mxu0 0.0
        %2689 = vmatprep.subr.mxu0 0.0
        %2690 = vmatpush1.msra.mxu0 0.0
        %2691 = vmatprep.subr.mxu0 0.0
        %2692 = vmatpush1.msra.mxu0 0.0
        %2693 = vmatprep.subr.mxu0 0.0
        %2694 = vmatpush1.msra.mxu0 0.0
        %2695 = vmatprep.subr.mxu0 0.0
        %2696 = vmatpush1.msra.mxu0 0.0
        %2697 = vmatprep.subr.mxu0 0.0
        %2698 = vmatpush1.msra.mxu0 0.0
        %2699 = vmatprep.subr.mxu0 0.0
        %2700 = vmatpush1.msra.mxu0 0.0
        %2701 = vmatprep.subr.mxu0 0.0
        %2702 = vmatpush1.msra.mxu0 0.0
        %2703 = vmatprep.subr.mxu0 0.0
        %2704 = vmatpush1.msra.mxu0 0.0
        %2705 = vmatprep.subr.mxu0 0.0
        %2706 = vmatpush1.msra.mxu0 0.0
        %2707 = vmatprep.subr.mxu0 0.0
        %2708 = vmatpush1.msra.mxu0 0.0
        %2709 = vmatprep.subr.mxu0 0.0
        %2710 = vmatpush1.msra.mxu0 0.0
        %2711 = vmatprep.subr.mxu0 0.0
        %2712 = vmatpush1.msra.mxu0 0.0
        %2713 = vmatprep.subr.mxu0 0.0
        %2714 = vmatpush1.msra.mxu0 0.0
        %2715 = vmatprep.subr.mxu0 0.0
        %2716 = vmatpush1.msra.mxu0 0.0
        %2717 = vmatprep.subr.mxu0 0.0
        %2718 = vmatpush1.msra.mxu0 0.0
        %2719 = vmatprep.subr.mxu0 0.0
        %2720 = vmatpush1.msra.mxu0 0.0
        %2721 = vmatprep.mubr.f32.mxu0 0.0
        %2722 = vmatmul.mubr.f32.gmra.mrb[0].mxu0 %v2655
        %v2723 = vpop.f32.mrb[0].mxu0
        %v2724 = vadd.f32 0.0, %v2723
        %v2725 = vpop.f32.mrb[0].mxu0
        %2726 = vdwg.mxu0
        %v2728 = vsel %vm1038, %v2724, 0
        %2730 = vmatprep.subr.mxu0 0.0
        %2731 = vmatpush1.msra.mxu0 %v1034
        %2732 = vmatprep.subr.mxu0 0.0
        %2733 = vmatpush1.msra.mxu0 0.0
        %2734 = vmatprep.subr.mxu0 0.0
        %2735 = vmatpush1.msra.mxu0 0.0
        %2736 = vmatprep.subr.mxu0 0.0
        %2737 = vmatpush1.msra.mxu0 0.0
        %2738 = vmatprep.subr.mxu0 0.0
        %2739 = vmatpush1.msra.mxu0 0.0
        %2740 = vmatprep.subr.mxu0 0.0
        %2741 = vmatpush1.msra.mxu0 0.0
        %2742 = vmatprep.subr.mxu0 0.0
        %2743 = vmatpush1.msra.mxu0 0.0
        %2744 = vmatprep.subr.mxu0 0.0
        %2745 = vmatpush1.msra.mxu0 0.0
        %2746 = vmatprep.subr.mxu0 0.0
        %2747 = vmatpush1.msra.mxu0 0.0
        %2748 = vmatprep.subr.mxu0 0.0
        %2749 = vmatpush1.msra.mxu0 0.0
        %2750 = vmatprep.subr.mxu0 0.0
        %2751 = vmatpush1.msra.mxu0 0.0
        %2752 = vmatprep.subr.mxu0 0.0
        %2753 = vmatpush1.msra.mxu0 0.0
        %2754 = vmatprep.subr.mxu0 0.0
        %2755 = vmatpush1.msra.mxu0 0.0
        %2756 = vmatprep.subr.mxu0 0.0
        %2757 = vmatpush1.msra.mxu0 0.0
        %2758 = vmatprep.subr.mxu0 0.0
        %2759 = vmatpush1.msra.mxu0 0.0
        %2760 = vmatprep.subr.mxu0 0.0
        %2761 = vmatpush1.msra.mxu0 0.0
        %2762 = vmatprep.subr.mxu0 0.0
        %2763 = vmatpush1.msra.mxu0 0.0
        %2764 = vmatprep.subr.mxu0 0.0
        %2765 = vmatpush1.msra.mxu0 0.0
        %2766 = vmatprep.subr.mxu0 0.0
        %2767 = vmatpush1.msra.mxu0 0.0
        %2768 = vmatprep.subr.mxu0 0.0
        %2769 = vmatpush1.msra.mxu0 0.0
        %2770 = vmatprep.subr.mxu0 0.0
        %2771 = vmatpush1.msra.mxu0 0.0
        %2772 = vmatprep.subr.mxu0 0.0
        %2773 = vmatpush1.msra.mxu0 0.0
        %2774 = vmatprep.subr.mxu0 0.0
        %2775 = vmatpush1.msra.mxu0 0.0
        %2776 = vmatprep.subr.mxu0 0.0
        %2777 = vmatpush1.msra.mxu0 0.0
        %2778 = vmatprep.subr.mxu0 0.0
        %2779 = vmatpush1.msra.mxu0 0.0
        %2780 = vmatprep.subr.mxu0 0.0
        %2781 = vmatpush1.msra.mxu0 0.0
        %2782 = vmatprep.subr.mxu0 0.0
        %2783 = vmatpush1.msra.mxu0 0.0
        %2784 = vmatprep.subr.mxu0 0.0
        %2785 = vmatpush1.msra.mxu0 0.0
        %2786 = vmatprep.subr.mxu0 0.0
        %2787 = vmatpush1.msra.mxu0 0.0
        %2788 = vmatprep.subr.mxu0 0.0
        %2789 = vmatpush1.msra.mxu0 0.0
        %2790 = vmatprep.subr.mxu0 0.0
        %2791 = vmatpush1.msra.mxu0 0.0
        %2792 = vmatprep.subr.mxu0 0.0
        %2793 = vmatpush1.msra.mxu0 0.0
        %2794 = vmatprep.mubr.f32.mxu0 0.0
        %2795 = vmatmul.mubr.f32.gmra.mrb[0].mxu0 %v2728
        %v2796 = vpop.f32.mrb[0].mxu0
        %v2797 = vadd.f32 0.0, %v2796
        %v2798 = vpop.f32.mrb[0].mxu0
        %2799 = vdwg.mxu0
        %v2800 = vadd.f32 %v2504, %v2797
        %vm2801 = vcmask 458112
        %v2802 = vsel %vm2801, %v1037, -inf
        %2803 = vmax.xlane.f32.xlu0 %v2802
        %v2804 = vpop.xlane.xlu0 %2803
        %v2805 = vsub.f32 %v1037, %v2804
        %v2806 = vmul.f32 %v2805, 1.442695
        %v2807 = vpow.pop %v2806
        %2809 = vrot.lane.b32.xlu0 %v2807, 80
        %v2810 = vpop.permute.xlu0 %2809
        %v2812 = vsel %vm1038, %v2810, 0.0
        %2813 = vadd.xlane.f32.xlu0 %v2812
        %v2814 = vpop.xlane.xlu0 %2813
        %v2815 = vrcp.pop %v2814
        %v2816 = vmul.f32 %v2807, %v2815
        %v2817 = vsel %vm2801, %v1050, -inf
        %v2818 = vrot.slane %v2817, 4
        %v2819 = vmax.f32 %v2817, %v2818
        %v2820 = vrot.slane %v2819, 2
        %v2821 = vmax.f32 %v2819, %v2820
        %v2822 = vrot.slane %v2821, 1
        %v2823 = vmax.f32 %v2821, %v2822
        %v2824 = vsub.f32 %v1050, %v2823
        %v2825 = vmul.f32 %v2824, 1.442695
        %v2826 = vpow.pop %v2825
        %v2827 = vsel %vm2801, %v2826, 0.0
        %v2828 = vrot.slane %v2827, 4
        %v2829 = vadd.f32 %v2827, %v2828
        %v2830 = vrot.slane %v2829, 2
        %v2831 = vadd.f32 %v2829, %v2830
        %v2832 = vrot.slane %v2831, 1
        %v2833 = vadd.f32 %v2831, %v2832
        %v2834 = vrcp.pop %v2833
        %v2835 = vmul.f32 %v2826, %v2834
        %2837 = vrot.lane.b32.xlu0 %v2835, 80
        %v2838 = vpop.permute.xlu0 %2837
        %2840 = vxpose.xlu0.b32.start [1/16] %v2838, 128
        %2841 = vxpose.xlu0.b32.cont [2/16] 0.0, 128
        %2842 = vxpose.xlu0.b32.cont [3/16] 0.0, 128
        %2843 = vxpose.xlu0.b32.cont [4/16] 0.0, 128
        %2844 = vxpose.xlu0.b32.cont [5/16] 0.0, 128
        %2845 = vxpose.xlu0.b32.cont [6/16] 0.0, 128
        %2846 = vxpose.xlu0.b32.cont [7/16] 0.0, 128
        %2847 = vxpose.xlu0.b32.cont [8/16] 0.0, 128
        %2848 = vxpose.xlu0.b32.cont [9/16] 0.0, 128
        %2849 = vxpose.xlu0.b32.cont [10/16] 0.0, 128
        %2850 = vxpose.xlu0.b32.cont [11/16] 0.0, 128
        %2851 = vxpose.xlu0.b32.cont [12/16] 0.0, 128
        %2852 = vxpose.xlu0.b32.cont [13/16] 0.0, 128
        %2853 = vxpose.xlu0.b32.cont [14/16] 0.0, 128
        %2854 = vxpose.xlu0.b32.cont [15/16] 0.0, 128
        %2855 = vxpose.xlu0.b32.end [16/16] 0.0, 128
        %v2856 = vpop.trf.xlu0
        %v2857 = vpop.trf.xlu0
        %v2858 = vpop.trf.xlu0
        %v2859 = vpop.trf.xlu0
        %v2860 = vpop.trf.xlu0
        %v2861 = vpop.trf.xlu0
        %v2862 = vpop.trf.xlu0
        %v2863 = vpop.trf.xlu0
        %v2864 = vpop.trf.xlu0
        %v2865 = vpop.trf.xlu0
        %v2866 = vpop.trf.xlu0
        %v2867 = vpop.trf.xlu0
        %v2868 = vpop.trf.xlu0
        %v2869 = vpop.trf.xlu0
        %v2870 = vpop.trf.xlu0
        %v2871 = vpop.trf.xlu0
        %2872 = vrot.lane.b32.xlu0 %v1026, 80
        %v2873 = vpop.permute.xlu0 %2872
        %v2876 = vsel %vm1038, %v2856, 0
        %2878 = vmatprep.subr.mxu0 0.0
        %2879 = vmatpush1.msra.mxu0 %v2873
        %2880 = vmatprep.subr.mxu0 0.0
        %2881 = vmatpush1.msra.mxu0 0.0
        %2882 = vmatprep.subr.mxu0 0.0
        %2883 = vmatpush1.msra.mxu0 0.0
        %2884 = vmatprep.subr.mxu0 0.0
        %2885 = vmatpush1.msra.mxu0 0.0
        %2886 = vmatprep.subr.mxu0 0.0
        %2887 = vmatpush1.msra.mxu0 0.0
        %2888 = vmatprep.subr.mxu0 0.0
        %2889 = vmatpush1.msra.mxu0 0.0
        %2890 = vmatprep.subr.mxu0 0.0
        %2891 = vmatpush1.msra.mxu0 0.0
        %2892 = vmatprep.subr.mxu0 0.0
        %2893 = vmatpush1.msra.mxu0 0.0
        %2894 = vmatprep.subr.mxu0 0.0
        %2895 = vmatpush1.msra.mxu0 0.0
        %2896 = vmatprep.subr.mxu0 0.0
        %2897 = vmatpush1.msra.mxu0 0.0
        %2898 = vmatprep.subr.mxu0 0.0
        %2899 = vmatpush1.msra.mxu0 0.0
        %2900 = vmatprep.subr.mxu0 0.0
        %2901 = vmatpush1.msra.mxu0 0.0
        %2902 = vmatprep.subr.mxu0 0.0
        %2903 = vmatpush1.msra.mxu0 0.0
        %2904 = vmatprep.subr.mxu0 0.0
        %2905 = vmatpush1.msra.mxu0 0.0
        %2906 = vmatprep.subr.mxu0 0.0
        %2907 = vmatpush1.msra.mxu0 0.0
        %2908 = vmatprep.subr.mxu0 0.0
        %2909 = vmatpush1.msra.mxu0 0.0
        %2910 = vmatprep.subr.mxu0 0.0
        %2911 = vmatpush1.msra.mxu0 0.0
        %2912 = vmatprep.subr.mxu0 0.0
        %2913 = vmatpush1.msra.mxu0 0.0
        %2914 = vmatprep.subr.mxu0 0.0
        %2915 = vmatpush1.msra.mxu0 0.0
        %2916 = vmatprep.subr.mxu0 0.0
        %2917 = vmatpush1.msra.mxu0 0.0
        %2918 = vmatprep.subr.mxu0 0.0
        %2919 = vmatpush1.msra.mxu0 0.0
        %2920 = vmatprep.subr.mxu0 0.0
        %2921 = vmatpush1.msra.mxu0 0.0
        %2922 = vmatprep.subr.mxu0 0.0
        %2923 = vmatpush1.msra.mxu0 0.0
        %2924 = vmatprep.subr.mxu0 0.0
        %2925 = vmatpush1.msra.mxu0 0.0
        %2926 = vmatprep.subr.mxu0 0.0
        %2927 = vmatpush1.msra.mxu0 0.0
        %2928 = vmatprep.subr.mxu0 0.0
        %2929 = vmatpush1.msra.mxu0 0.0
        %2930 = vmatprep.subr.mxu0 0.0
        %2931 = vmatpush1.msra.mxu0 0.0
        %2932 = vmatprep.subr.mxu0 0.0
        %2933 = vmatpush1.msra.mxu0 0.0
        %2934 = vmatprep.subr.mxu0 0.0
        %2935 = vmatpush1.msra.mxu0 0.0
        %2936 = vmatprep.subr.mxu0 0.0
        %2937 = vmatpush1.msra.mxu0 0.0
        %2938 = vmatprep.subr.mxu0 0.0
        %2939 = vmatpush1.msra.mxu0 0.0
        %2940 = vmatprep.subr.mxu0 0.0
        %2941 = vmatpush1.msra.mxu0 0.0
        %2942 = vmatprep.mubr.f32.mxu0 0.0
        %2943 = vmatmul.mubr.f32.gmra.mrb[0].mxu0 %v2876
        %v2944 = vpop.f32.mrb[0].mxu0
        %v2945 = vadd.f32 0.0, %v2944
        %v2946 = vpop.f32.mrb[0].mxu0
        %2947 = vdwg.mxu0
        %2949 = vrot.lane.b32.xlu0 %v2816, 80
        %v2950 = vpop.permute.xlu0 %2949
        %v2951 = vsel %vm1038, %v2950, 0
        %2953 = vmatprep.subr.mxu0 0.0
        %2954 = vmatpush1.msra.mxu0 %v2945
        %2955 = vmatprep.subr.mxu0 0.0
        %2956 = vmatpush1.msra.mxu0 0.0
        %2957 = vmatprep.subr.mxu0 0.0
        %2958 = vmatpush1.msra.mxu0 0.0
        %2959 = vmatprep.subr.mxu0 0.0
        %2960 = vmatpush1.msra.mxu0 0.0
        %2961 = vmatprep.subr.mxu0 0.0
        %2962 = vmatpush1.msra.mxu0 0.0
        %2963 = vmatprep.subr.mxu0 0.0
        %2964 = vmatpush1.msra.mxu0 0.0
        %2965 = vmatprep.subr.mxu0 0.0
        %2966 = vmatpush1.msra.mxu0 0.0
        %2967 = vmatprep.subr.mxu0 0.0
        %2968 = vmatpush1.msra.mxu0 0.0
        %2969 = vmatprep.subr.mxu0 0.0
        %2970 = vmatpush1.msra.mxu0 0.0
        %2971 = vmatprep.subr.mxu0 0.0
        %2972 = vmatpush1.msra.mxu0 0.0
        %2973 = vmatprep.subr.mxu0 0.0
        %2974 = vmatpush1.msra.mxu0 0.0
        %2975 = vmatprep.subr.mxu0 0.0
        %2976 = vmatpush1.msra.mxu0 0.0
        %2977 = vmatprep.subr.mxu0 0.0
        %2978 = vmatpush1.msra.mxu0 0.0
        %2979 = vmatprep.subr.mxu0 0.0
        %2980 = vmatpush1.msra.mxu0 0.0
        %2981 = vmatprep.subr.mxu0 0.0
        %2982 = vmatpush1.msra.mxu0 0.0
        %2983 = vmatprep.subr.mxu0 0.0
        %2984 = vmatpush1.msra.mxu0 0.0
        %2985 = vmatprep.subr.mxu0 0.0
        %2986 = vmatpush1.msra.mxu0 0.0
        %2987 = vmatprep.subr.mxu0 0.0
        %2988 = vmatpush1.msra.mxu0 0.0
        %2989 = vmatprep.subr.mxu0 0.0
        %2990 = vmatpush1.msra.mxu0 0.0
        %2991 = vmatprep.subr.mxu0 0.0
        %2992 = vmatpush1.msra.mxu0 0.0
        %2993 = vmatprep.subr.mxu0 0.0
        %2994 = vmatpush1.msra.mxu0 0.0
        %2995 = vmatprep.subr.mxu0 0.0
        %2996 = vmatpush1.msra.mxu0 0.0
        %2997 = vmatprep.subr.mxu0 0.0
        %2998 = vmatpush1.msra.mxu0 0.0
        %2999 = vmatprep.subr.mxu0 0.0
        %3000 = vmatpush1.msra.mxu0 0.0
        %3001 = vmatprep.subr.mxu0 0.0
        %3002 = vmatpush1.msra.mxu0 0.0
        %3003 = vmatprep.subr.mxu0 0.0
        %3004 = vmatpush1.msra.mxu0 0.0
        %3005 = vmatprep.subr.mxu0 0.0
        %3006 = vmatpush1.msra.mxu0 0.0
        %3007 = vmatprep.subr.mxu0 0.0
        %3008 = vmatpush1.msra.mxu0 0.0
        %3009 = vmatprep.subr.mxu0 0.0
        %3010 = vmatpush1.msra.mxu0 0.0
        %3011 = vmatprep.subr.mxu0 0.0
        %3012 = vmatpush1.msra.mxu0 0.0
        %3013 = vmatprep.subr.mxu0 0.0
        %3014 = vmatpush1.msra.mxu0 0.0
        %3015 = vmatprep.subr.mxu0 0.0
        %3016 = vmatpush1.msra.mxu0 0.0
        %3017 = vmatprep.mubr.f32.mxu0 0.0
        %3018 = vmatmul.mubr.f32.gmra.mrb[0].mxu0 %v2951
        %v3019 = vpop.f32.mrb[0].mxu0
        %v3020 = vadd.f32 0.0, %v3019
        %v3021 = vpop.f32.mrb[0].mxu0
        %3022 = vdwg.mxu0
        %v3024 = vsel %vm1038, %v3020, 0
        %3026 = vmatprep.subr.mxu0 0.0
        %3027 = vmatpush1.msra.mxu0 %v1035
        %3028 = vmatprep.subr.mxu0 0.0
        %3029 = vmatpush1.msra.mxu0 0.0
        %3030 = vmatprep.subr.mxu0 0.0
        %3031 = vmatpush1.msra.mxu0 0.0
        %3032 = vmatprep.subr.mxu0 0.0
        %3033 = vmatpush1.msra.mxu0 0.0
        %3034 = vmatprep.subr.mxu0 0.0
        %3035 = vmatpush1.msra.mxu0 0.0
        %3036 = vmatprep.subr.mxu0 0.0
        %3037 = vmatpush1.msra.mxu0 0.0
        %3038 = vmatprep.subr.mxu0 0.0
        %3039 = vmatpush1.msra.mxu0 0.0
        %3040 = vmatprep.subr.mxu0 0.0
        %3041 = vmatpush1.msra.mxu0 0.0
        %3042 = vmatprep.subr.mxu0 0.0
        %3043 = vmatpush1.msra.mxu0 0.0
        %3044 = vmatprep.subr.mxu0 0.0
        %3045 = vmatpush1.msra.mxu0 0.0
        %3046 = vmatprep.subr.mxu0 0.0
        %3047 = vmatpush1.msra.mxu0 0.0
        %3048 = vmatprep.subr.mxu0 0.0
        %3049 = vmatpush1.msra.mxu0 0.0
        %3050 = vmatprep.subr.mxu0 0.0
        %3051 = vmatpush1.msra.mxu0 0.0
        %3052 = vmatprep.subr.mxu0 0.0
        %3053 = vmatpush1.msra.mxu0 0.0
        %3054 = vmatprep.subr.mxu0 0.0
        %3055 = vmatpush1.msra.mxu0 0.0
        %3056 = vmatprep.subr.mxu0 0.0
        %3057 = vmatpush1.msra.mxu0 0.0
        %3058 = vmatprep.subr.mxu0 0.0
        %3059 = vmatpush1.msra.mxu0 0.0
        %3060 = vmatprep.subr.mxu0 0.0
        %3061 = vmatpush1.msra.mxu0 0.0
        %3062 = vmatprep.subr.mxu0 0.0
        %3063 = vmatpush1.msra.mxu0 0.0
        %3064 = vmatprep.subr.mxu0 0.0
        %3065 = vmatpush1.msra.mxu0 0.0
        %3066 = vmatprep.subr.mxu0 0.0
        %3067 = vmatpush1.msra.mxu0 0.0
        %3068 = vmatprep.subr.mxu0 0.0
        %3069 = vmatpush1.msra.mxu0 0.0
        %3070 = vmatprep.subr.mxu0 0.0
        %3071 = vmatpush1.msra.mxu0 0.0
        %3072 = vmatprep.subr.mxu0 0.0
        %3073 = vmatpush1.msra.mxu0 0.0
        %3074 = vmatprep.subr.mxu0 0.0
        %3075 = vmatpush1.msra.mxu0 0.0
        %3076 = vmatprep.subr.mxu0 0.0
        %3077 = vmatpush1.msra.mxu0 0.0
        %3078 = vmatprep.subr.mxu0 0.0
        %3079 = vmatpush1.msra.mxu0 0.0
        %3080 = vmatprep.subr.mxu0 0.0
        %3081 = vmatpush1.msra.mxu0 0.0
        %3082 = vmatprep.subr.mxu0 0.0
        %3083 = vmatpush1.msra.mxu0 0.0
        %3084 = vmatprep.subr.mxu0 0.0
        %3085 = vmatpush1.msra.mxu0 0.0
        %3086 = vmatprep.subr.mxu0 0.0
        %3087 = vmatpush1.msra.mxu0 0.0
        %3088 = vmatprep.subr.mxu0 0.0
        %3089 = vmatpush1.msra.mxu0 0.0
        %3090 = vmatprep.mubr.f32.mxu0 0.0
        %3091 = vmatmul.mubr.f32.gmra.mrb[0].mxu0 %v3024
        %v3092 = vpop.f32.mrb[0].mxu0
        %v3093 = vadd.f32 0.0, %v3092
        %v3094 = vpop.f32.mrb[0].mxu0
        %3095 = vdwg.mxu0
        %v3096 = vadd.f32 %v2800, %v3093
        %vm3097 = vcmask 523712
        %v3098 = vsel %vm3097, %v1037, -inf
        %3099 = vmax.xlane.f32.xlu0 %v3098
        %v3100 = vpop.xlane.xlu0 %3099
        %v3101 = vsub.f32 %v1037, %v3100
        %v3102 = vmul.f32 %v3101, 1.442695
        %v3103 = vpow.pop %v3102
        %3105 = vrot.lane.b32.xlu0 %v3103, 72
        %v3106 = vpop.permute.xlu0 %3105
        %v3108 = vsel %vm1038, %v3106, 0.0
        %3109 = vadd.xlane.f32.xlu0 %v3108
        %v3110 = vpop.xlane.xlu0 %3109
        %v3111 = vrcp.pop %v3110
        %v3112 = vmul.f32 %v3103, %v3111
        %v3113 = vsel %vm3097, %v1050, -inf
        %v3114 = vrot.slane %v3113, 4
        %v3115 = vmax.f32 %v3113, %v3114
        %v3116 = vrot.slane %v3115, 2
        %v3117 = vmax.f32 %v3115, %v3116
        %v3118 = vrot.slane %v3117, 1
        %v3119 = vmax.f32 %v3117, %v3118
        %v3120 = vsub.f32 %v1050, %v3119
        %v3121 = vmul.f32 %v3120, 1.442695
        %v3122 = vpow.pop %v3121
        %v3123 = vsel %vm3097, %v3122, 0.0
        %v3124 = vrot.slane %v3123, 4
        %v3125 = vadd.f32 %v3123, %v3124
        %v3126 = vrot.slane %v3125, 2
        %v3127 = vadd.f32 %v3125, %v3126
        %v3128 = vrot.slane %v3127, 1
        %v3129 = vadd.f32 %v3127, %v3128
        %v3130 = vrcp.pop %v3129
        %v3131 = vmul.f32 %v3122, %v3130
        %3133 = vrot.lane.b32.xlu0 %v3131, 72
        %v3134 = vpop.permute.xlu0 %3133
        %3136 = vxpose.xlu0.b32.start [1/16] %v3134, 128
        %3137 = vxpose.xlu0.b32.cont [2/16] 0.0, 128
        %3138 = vxpose.xlu0.b32.cont [3/16] 0.0, 128
        %3139 = vxpose.xlu0.b32.cont [4/16] 0.0, 128
        %3140 = vxpose.xlu0.b32.cont [5/16] 0.0, 128
        %3141 = vxpose.xlu0.b32.cont [6/16] 0.0, 128
        %3142 = vxpose.xlu0.b32.cont [7/16] 0.0, 128
        %3143 = vxpose.xlu0.b32.cont [8/16] 0.0, 128
        %3144 = vxpose.xlu0.b32.cont [9/16] 0.0, 128
        %3145 = vxpose.xlu0.b32.cont [10/16] 0.0, 128
        %3146 = vxpose.xlu0.b32.cont [11/16] 0.0, 128
        %3147 = vxpose.xlu0.b32.cont [12/16] 0.0, 128
        %3148 = vxpose.xlu0.b32.cont [13/16] 0.0, 128
        %3149 = vxpose.xlu0.b32.cont [14/16] 0.0, 128
        %3150 = vxpose.xlu0.b32.cont [15/16] 0.0, 128
        %3151 = vxpose.xlu0.b32.end [16/16] 0.0, 128
        %v3152 = vpop.trf.xlu0
        %v3153 = vpop.trf.xlu0
        %v3154 = vpop.trf.xlu0
        %v3155 = vpop.trf.xlu0
        %v3156 = vpop.trf.xlu0
        %v3157 = vpop.trf.xlu0
        %v3158 = vpop.trf.xlu0
        %v3159 = vpop.trf.xlu0
        %v3160 = vpop.trf.xlu0
        %v3161 = vpop.trf.xlu0
        %v3162 = vpop.trf.xlu0
        %v3163 = vpop.trf.xlu0
        %v3164 = vpop.trf.xlu0
        %v3165 = vpop.trf.xlu0
        %v3166 = vpop.trf.xlu0
        %v3167 = vpop.trf.xlu0
        %3168 = vrot.lane.b32.xlu0 %v1026, 72
        %v3169 = vpop.permute.xlu0 %3168
        %v3172 = vsel %vm1038, %v3152, 0
        %3174 = vmatprep.subr.mxu0 0.0
        %3175 = vmatpush1.msra.mxu0 %v3169
        %3176 = vmatprep.subr.mxu0 0.0
        %3177 = vmatpush1.msra.mxu0 0.0
        %3178 = vmatprep.subr.mxu0 0.0
        %3179 = vmatpush1.msra.mxu0 0.0
        %3180 = vmatprep.subr.mxu0 0.0
        %3181 = vmatpush1.msra.mxu0 0.0
        %3182 = vmatprep.subr.mxu0 0.0
        %3183 = vmatpush1.msra.mxu0 0.0
        %3184 = vmatprep.subr.mxu0 0.0
        %3185 = vmatpush1.msra.mxu0 0.0
        %3186 = vmatprep.subr.mxu0 0.0
        %3187 = vmatpush1.msra.mxu0 0.0
        %3188 = vmatprep.subr.mxu0 0.0
        %3189 = vmatpush1.msra.mxu0 0.0
        %3190 = vmatprep.subr.mxu0 0.0
        %3191 = vmatpush1.msra.mxu0 0.0
        %3192 = vmatprep.subr.mxu0 0.0
        %3193 = vmatpush1.msra.mxu0 0.0
        %3194 = vmatprep.subr.mxu0 0.0
        %3195 = vmatpush1.msra.mxu0 0.0
        %3196 = vmatprep.subr.mxu0 0.0
        %3197 = vmatpush1.msra.mxu0 0.0
        %3198 = vmatprep.subr.mxu0 0.0
        %3199 = vmatpush1.msra.mxu0 0.0
        %3200 = vmatprep.subr.mxu0 0.0
        %3201 = vmatpush1.msra.mxu0 0.0
        %3202 = vmatprep.subr.mxu0 0.0
        %3203 = vmatpush1.msra.mxu0 0.0
        %3204 = vmatprep.subr.mxu0 0.0
        %3205 = vmatpush1.msra.mxu0 0.0
        %3206 = vmatprep.subr.mxu0 0.0
        %3207 = vmatpush1.msra.mxu0 0.0
        %3208 = vmatprep.subr.mxu0 0.0
        %3209 = vmatpush1.msra.mxu0 0.0
        %3210 = vmatprep.subr.mxu0 0.0
        %3211 = vmatpush1.msra.mxu0 0.0
        %3212 = vmatprep.subr.mxu0 0.0
        %3213 = vmatpush1.msra.mxu0 0.0
        %3214 = vmatprep.subr.mxu0 0.0
        %3215 = vmatpush1.msra.mxu0 0.0
        %3216 = vmatprep.subr.mxu0 0.0
        %3217 = vmatpush1.msra.mxu0 0.0
        %3218 = vmatprep.subr.mxu0 0.0
        %3219 = vmatpush1.msra.mxu0 0.0
        %3220 = vmatprep.subr.mxu0 0.0
        %3221 = vmatpush1.msra.mxu0 0.0
        %3222 = vmatprep.subr.mxu0 0.0
        %3223 = vmatpush1.msra.mxu0 0.0
        %3224 = vmatprep.subr.mxu0 0.0
        %3225 = vmatpush1.msra.mxu0 0.0
        %3226 = vmatprep.subr.mxu0 0.0
        %3227 = vmatpush1.msra.mxu0 0.0
        %3228 = vmatprep.subr.mxu0 0.0
        %3229 = vmatpush1.msra.mxu0 0.0
        %3230 = vmatprep.subr.mxu0 0.0
        %3231 = vmatpush1.msra.mxu0 0.0
        %3232 = vmatprep.subr.mxu0 0.0
        %3233 = vmatpush1.msra.mxu0 0.0
        %3234 = vmatprep.subr.mxu0 0.0
        %3235 = vmatpush1.msra.mxu0 0.0
        %3236 = vmatprep.subr.mxu0 0.0
        %3237 = vmatpush1.msra.mxu0 0.0
        %3238 = vmatprep.mubr.f32.mxu0 0.0
        %3239 = vmatmul.mubr.f32.gmra.mrb[0].mxu0 %v3172
        %v3240 = vpop.f32.mrb[0].mxu0
        %v3241 = vadd.f32 0.0, %v3240
        %v3242 = vpop.f32.mrb[0].mxu0
        %3243 = vdwg.mxu0
        %3245 = vrot.lane.b32.xlu0 %v3112, 72
        %v3246 = vpop.permute.xlu0 %3245
        %v3247 = vsel %vm1038, %v3246, 0
        %3249 = vmatprep.subr.mxu0 0.0
        %3250 = vmatpush1.msra.mxu0 %v3241
        %3251 = vmatprep.subr.mxu0 0.0
        %3252 = vmatpush1.msra.mxu0 0.0
        %3253 = vmatprep.subr.mxu0 0.0
        %3254 = vmatpush1.msra.mxu0 0.0
        %3255 = vmatprep.subr.mxu0 0.0
        %3256 = vmatpush1.msra.mxu0 0.0
        %3257 = vmatprep.subr.mxu0 0.0
        %3258 = vmatpush1.msra.mxu0 0.0
        %3259 = vmatprep.subr.mxu0 0.0
        %3260 = vmatpush1.msra.mxu0 0.0
        %3261 = vmatprep.subr.mxu0 0.0
        %3262 = vmatpush1.msra.mxu0 0.0
        %3263 = vmatprep.subr.mxu0 0.0
        %3264 = vmatpush1.msra.mxu0 0.0
        %3265 = vmatprep.subr.mxu0 0.0
        %3266 = vmatpush1.msra.mxu0 0.0
        %3267 = vmatprep.subr.mxu0 0.0
        %3268 = vmatpush1.msra.mxu0 0.0
        %3269 = vmatprep.subr.mxu0 0.0
        %3270 = vmatpush1.msra.mxu0 0.0
        %3271 = vmatprep.subr.mxu0 0.0
        %3272 = vmatpush1.msra.mxu0 0.0
        %3273 = vmatprep.subr.mxu0 0.0
        %3274 = vmatpush1.msra.mxu0 0.0
        %3275 = vmatprep.subr.mxu0 0.0
        %3276 = vmatpush1.msra.mxu0 0.0
        %3277 = vmatprep.subr.mxu0 0.0
        %3278 = vmatpush1.msra.mxu0 0.0
        %3279 = vmatprep.subr.mxu0 0.0
        %3280 = vmatpush1.msra.mxu0 0.0
        %3281 = vmatprep.subr.mxu0 0.0
        %3282 = vmatpush1.msra.mxu0 0.0
        %3283 = vmatprep.subr.mxu0 0.0
        %3284 = vmatpush1.msra.mxu0 0.0
        %3285 = vmatprep.subr.mxu0 0.0
        %3286 = vmatpush1.msra.mxu0 0.0
        %3287 = vmatprep.subr.mxu0 0.0
        %3288 = vmatpush1.msra.mxu0 0.0
        %3289 = vmatprep.subr.mxu0 0.0
        %3290 = vmatpush1.msra.mxu0 0.0
        %3291 = vmatprep.subr.mxu0 0.0
        %3292 = vmatpush1.msra.mxu0 0.0
        %3293 = vmatprep.subr.mxu0 0.0
        %3294 = vmatpush1.msra.mxu0 0.0
        %3295 = vmatprep.subr.mxu0 0.0
        %3296 = vmatpush1.msra.mxu0 0.0
        %3297 = vmatprep.subr.mxu0 0.0
        %3298 = vmatpush1.msra.mxu0 0.0
        %3299 = vmatprep.subr.mxu0 0.0
        %3300 = vmatpush1.msra.mxu0 0.0
        %3301 = vmatprep.subr.mxu0 0.0
        %3302 = vmatpush1.msra.mxu0 0.0
        %3303 = vmatprep.subr.mxu0 0.0
        %3304 = vmatpush1.msra.mxu0 0.0
        %3305 = vmatprep.subr.mxu0 0.0
        %3306 = vmatpush1.msra.mxu0 0.0
        %3307 = vmatprep.subr.mxu0 0.0
        %3308 = vmatpush1.msra.mxu0 0.0
        %3309 = vmatprep.subr.mxu0 0.0
        %3310 = vmatpush1.msra.mxu0 0.0
        %3311 = vmatprep.subr.mxu0 0.0
        %3312 = vmatpush1.msra.mxu0 0.0
        %3313 = vmatprep.mubr.f32.mxu0 0.0
        %3314 = vmatmul.mubr.f32.gmra.mrb[0].mxu0 %v3247
        %v3315 = vpop.f32.mrb[0].mxu0
        %v3316 = vadd.f32 0.0, %v3315
        %v3317 = vpop.f32.mrb[0].mxu0
        %3318 = vdwg.mxu0
        %v3320 = vsel %vm1038, %v3316, 0
        %3322 = vmatprep.subr.mxu0 0.0
        %3323 = vmatpush1.msra.mxu0 %v1036
        %3324 = vmatprep.subr.mxu0 0.0
        %3325 = vmatpush1.msra.mxu0 0.0
        %3326 = vmatprep.subr.mxu0 0.0
        %3327 = vmatpush1.msra.mxu0 0.0
        %3328 = vmatprep.subr.mxu0 0.0
        %3329 = vmatpush1.msra.mxu0 0.0
        %3330 = vmatprep.subr.mxu0 0.0
        %3331 = vmatpush1.msra.mxu0 0.0
        %3332 = vmatprep.subr.mxu0 0.0
        %3333 = vmatpush1.msra.mxu0 0.0
        %3334 = vmatprep.subr.mxu0 0.0
        %3335 = vmatpush1.msra.mxu0 0.0
        %3336 = vmatprep.subr.mxu0 0.0
        %3337 = vmatpush1.msra.mxu0 0.0
        %3338 = vmatprep.subr.mxu0 0.0
        %3339 = vmatpush1.msra.mxu0 0.0
        %3340 = vmatprep.subr.mxu0 0.0
        %3341 = vmatpush1.msra.mxu0 0.0
        %3342 = vmatprep.subr.mxu0 0.0
        %3343 = vmatpush1.msra.mxu0 0.0
        %3344 = vmatprep.subr.mxu0 0.0
        %3345 = vmatpush1.msra.mxu0 0.0
        %3346 = vmatprep.subr.mxu0 0.0
        %3347 = vmatpush1.msra.mxu0 0.0
        %3348 = vmatprep.subr.mxu0 0.0
        %3349 = vmatpush1.msra.mxu0 0.0
        %3350 = vmatprep.subr.mxu0 0.0
        %3351 = vmatpush1.msra.mxu0 0.0
        %3352 = vmatprep.subr.mxu0 0.0
        %3353 = vmatpush1.msra.mxu0 0.0
        %3354 = vmatprep.subr.mxu0 0.0
        %3355 = vmatpush1.msra.mxu0 0.0
        %3356 = vmatprep.subr.mxu0 0.0
        %3357 = vmatpush1.msra.mxu0 0.0
        %3358 = vmatprep.subr.mxu0 0.0
        %3359 = vmatpush1.msra.mxu0 0.0
        %3360 = vmatprep.subr.mxu0 0.0
        %3361 = vmatpush1.msra.mxu0 0.0
        %3362 = vmatprep.subr.mxu0 0.0
        %3363 = vmatpush1.msra.mxu0 0.0
        %3364 = vmatprep.subr.mxu0 0.0
        %3365 = vmatpush1.msra.mxu0 0.0
        %3366 = vmatprep.subr.mxu0 0.0
        %3367 = vmatpush1.msra.mxu0 0.0
        %3368 = vmatprep.subr.mxu0 0.0
        %3369 = vmatpush1.msra.mxu0 0.0
        %3370 = vmatprep.subr.mxu0 0.0
        %3371 = vmatpush1.msra.mxu0 0.0
        %3372 = vmatprep.subr.mxu0 0.0
        %3373 = vmatpush1.msra.mxu0 0.0
        %3374 = vmatprep.subr.mxu0 0.0
        %3375 = vmatpush1.msra.mxu0 0.0
        %3376 = vmatprep.subr.mxu0 0.0
        %3377 = vmatpush1.msra.mxu0 0.0
        %3378 = vmatprep.subr.mxu0 0.0
        %3379 = vmatpush1.msra.mxu0 0.0
        %3380 = vmatprep.subr.mxu0 0.0
        %3381 = vmatpush1.msra.mxu0 0.0
        %3382 = vmatprep.subr.mxu0 0.0
        %3383 = vmatpush1.msra.mxu0 0.0
        %3384 = vmatprep.subr.mxu0 0.0
        %3385 = vmatpush1.msra.mxu0 0.0
        %3386 = vmatprep.mubr.f32.mxu0 0.0
        %3387 = vmatmul.mubr.f32.gmra.mrb[0].mxu0 %v3320
        %v3388 = vpop.f32.mrb[0].mxu0
        %v3389 = vadd.f32 0.0, %v3388
        %v3390 = vpop.f32.mrb[0].mxu0
        %3391 = vdwg.mxu0
        %v3392 = vadd.f32 %v3096, %v3389
        %v3393 = vadd.f32 %v760, %v3392
        %v3394 = vld [vmem:[%s729] sm:$0x1]
        %v3396 = vlaneseq
        %v3397 = vshrl.u32 %v3396, 7
        %v3398 = vsub.s32 0, %v3397
        %v3399 = vrot.slane %v3394, %v3398
        %v3401 = vadd.f32 %v3393, %v3399
        %v3402 = vld [vmem:[%s732] sm:$0x1]
        %v3403 = vld [vmem:[%s735] sm:$0x1]
        %v3404 = vsel %vm763, %v3401, 0.0
        %3405 = vadd.xlane.f32.xlu0 %v3404
        %v3406 = vpop.xlane.xlu0 %3405
        %v3407 = vmul.f32 %v3406, %v767
        %v3408 = vsub.f32 %v3401, %v3407
        %v3409 = vmul.f32 %v3408, %v3408
        %v3410 = vsel %vm763, %v3409, 0.0
        %3411 = vadd.xlane.f32.xlu0 %v3410
        %v3412 = vpop.xlane.xlu0 %3411
        %v3413 = vmul.f32 %v3412, %v767
        %v3414 = vadd.f32 %v3413, 1e-05
        %v3415 = vrsqrt.pop %v3414
        %v3416 = vmul.f32 %v3408, %v3415
        %v3418 = vlaneseq
        %v3419 = vshrl.u32 %v3418, 7
        %v3420 = vsub.s32 0, %v3419
        %v3421 = vrot.slane %v3402, %v3420
        %v3423 = vmul.f32 %v3416, %v3421
        %v3425 = vlaneseq
        %v3426 = vshrl.u32 %v3425, 7
        %v3427 = vsub.s32 0, %v3426
        %v3428 = vrot.slane %v3403, %v3427
        %v3430 = vadd.f32 %v3423, %v3428
        %v3431 = vld [vmem:[%s740] sm:$0xff]
        %v3432 = vld [vmem:[%s740 + $0x8] sm:$0xff]
        %v3433 = vld [vmem:[%s740 + $0x10] sm:$0xff]
        %v3434 = vld [vmem:[%s740 + $0x18] sm:$0xff]
        %v3435 = vld [vmem:[%s740 + $0x20] sm:$0xff]
        %v3436 = vld [vmem:[%s740 + $0x28] sm:$0xff]
        %v3437 = vld [vmem:[%s740 + $0x30] sm:$0xff]
        %v3438 = vld [vmem:[%s740 + $0x38] sm:$0xff]
        %v3439 = vld [vmem:[%s740 + $0x40] sm:$0xff]
        %v3440 = vld [vmem:[%s740 + $0x48] sm:$0xff]
        %v3441 = vld [vmem:[%s740 + $0x50] sm:$0xff]
        %v3442 = vld [vmem:[%s740 + $0x58] sm:$0xff]
        %v3443 = vld [vmem:[%s740 + $0x60] sm:$0xff]
        %v3444 = vld [vmem:[%s740 + $0x68] sm:$0xff]
        %v3445 = vld [vmem:[%s740 + $0x70] sm:$0xff]
        %v3446 = vld [vmem:[%s740 + $0x78] sm:$0xff]
        %v3447 = vld [vmem:[%s744] sm:$0x3]
        %v3449 = vlaneseq
        %v3450 = vshrl.u32 %v3449, 7
        %v3451 = vsub.s32 0, %v3450
        %v3452 = vrot.slane %v3447, %v3451
        %v3453 = vlaneseq
        %v3454 = vshrl.u32 %v3453, 7
        %v3455 = vsub.s32 1, %v3454
        %v3456 = vrot.slane %v3447, %v3455
        %v3460 = vsel %vm763, %v3430, 0
        %3462 = vmatprep.subr.mxu0 %v3432
        %3463 = vmatpush1.msra.mxu0 %v3431
        %3464 = vmatprep.subr.mxu0 %v3434
        %3465 = vmatpush1.msra.mxu0 %v3433
        %3466 = vmatprep.subr.mxu0 %v3436
        %3467 = vmatpush1.msra.mxu0 %v3435
        %3468 = vmatprep.subr.mxu0 %v3438
        %3469 = vmatpush1.msra.mxu0 %v3437
        %3470 = vmatprep.subr.mxu0 %v3440
        %3471 = vmatpush1.msra.mxu0 %v3439
        %3472 = vmatprep.subr.mxu0 %v3442
        %3473 = vmatpush1.msra.mxu0 %v3441
        %3474 = vmatprep.subr.mxu0 %v3444
        %3475 = vmatpush1.msra.mxu0 %v3443
        %3476 = vmatprep.subr.mxu0 %v3446
        %3477 = vmatpush1.msra.mxu0 %v3445
        %3478 = vmatprep.subr.mxu0 0.0
        %3479 = vmatpush1.msra.mxu0 0.0
        %3480 = vmatprep.subr.mxu0 0.0
        %3481 = vmatpush1.msra.mxu0 0.0
        %3482 = vmatprep.subr.mxu0 0.0
        %3483 = vmatpush1.msra.mxu0 0.0
        %3484 = vmatprep.subr.mxu0 0.0
        %3485 = vmatpush1.msra.mxu0 0.0
        %3486 = vmatprep.subr.mxu0 0.0
        %3487 = vmatpush1.msra.mxu0 0.0
        %3488 = vmatprep.subr.mxu0 0.0
        %3489 = vmatpush1.msra.mxu0 0.0
        %3490 = vmatprep.subr.mxu0 0.0
        %3491 = vmatpush1.msra.mxu0 0.0
        %3492 = vmatprep.subr.mxu0 0.0
        %3493 = vmatpush1.msra.mxu0 0.0
        %3494 = vmatprep.subr.mxu0 0.0
        %3495 = vmatpush1.msra.mxu0 0.0
        %3496 = vmatprep.subr.mxu0 0.0
        %3497 = vmatpush1.msra.mxu0 0.0
        %3498 = vmatprep.subr.mxu0 0.0
        %3499 = vmatpush1.msra.mxu0 0.0
        %3500 = vmatprep.subr.mxu0 0.0
        %3501 = vmatpush1.msra.mxu0 0.0
        %3502 = vmatprep.subr.mxu0 0.0
        %3503 = vmatpush1.msra.mxu0 0.0
        %3504 = vmatprep.subr.mxu0 0.0
        %3505 = vmatpush1.msra.mxu0 0.0
        %3506 = vmatprep.subr.mxu0 0.0
        %3507 = vmatpush1.msra.mxu0 0.0
        %3508 = vmatprep.subr.mxu0 0.0
        %3509 = vmatpush1.msra.mxu0 0.0
        %3510 = vmatprep.subr.mxu0 0.0
        %3511 = vmatpush1.msra.mxu0 0.0
        %3512 = vmatprep.subr.mxu0 0.0
        %3513 = vmatpush1.msra.mxu0 0.0
        %3514 = vmatprep.subr.mxu0 0.0
        %3515 = vmatpush1.msra.mxu0 0.0
        %3516 = vmatprep.subr.mxu0 0.0
        %3517 = vmatpush1.msra.mxu0 0.0
        %3518 = vmatprep.subr.mxu0 0.0
        %3519 = vmatpush1.msra.mxu0 0.0
        %3520 = vmatprep.subr.mxu0 0.0
        %3521 = vmatpush1.msra.mxu0 0.0
        %3522 = vmatprep.subr.mxu0 0.0
        %3523 = vmatpush1.msra.mxu0 0.0
        %3524 = vmatprep.subr.mxu0 0.0
        %3525 = vmatpush1.msra.mxu0 0.0
        %3526 = vmatprep.mubr.f32.mxu0 0.0
        %3527 = vmatmul.mubr.f32.gmra.mrb[0].mxu0 %v3460
        %v3528 = vpop.f32.mrb[0].mxu0
        %v3529 = vadd.f32 %v3452, %v3528
        %v3530 = vpop.f32.mrb[0].mxu0
        %v3531 = vadd.f32 %v3456, %v3530
        %3532 = vdwg.mxu0
        %v3533 = vmul.f32 %v3529, 0.5
        %v3534 = vmul.f32 %v3531, 0.5
        %v3535 = vmul.f32 %v3529, 0.044715
        %v3536 = vmul.f32 %v3531, 0.044715
        %v3537 = vmul.f32 %v3535, %v3529
        %v3538 = vmul.f32 %v3536, %v3531
        %v3539 = vmul.f32 %v3537, %v3529
        %v3540 = vmul.f32 %v3538, %v3531
        %v3541 = vadd.f32 %v3529, %v3539
        %v3542 = vadd.f32 %v3531, %v3540
        %v3543 = vmul.f32 %v3541, 0.7978846
        %v3544 = vmul.f32 %v3542, 0.7978846
        %v3545 = vtanh.pop %v3543
        %v3546 = vtanh.pop %v3544
        %v3547 = vadd.f32 %v3545, 1.0
        %v3548 = vadd.f32 %v3546, 1.0
        %v3549 = vmul.f32 %v3533, %v3547
        %v3550 = vmul.f32 %v3534, %v3548
        %v3551 = vld [vmem:[%s749] sm:$0xff]
        %v3552 = vld [vmem:[%s749 + $0x8] sm:$0xff]
        %v3553 = vld [vmem:[%s749 + $0x10] sm:$0xff]
        %v3554 = vld [vmem:[%s749 + $0x18] sm:$0xff]
        %v3555 = vld [vmem:[%s749 + $0x20] sm:$0xff]
        %v3556 = vld [vmem:[%s749 + $0x28] sm:$0xff]
        %v3557 = vld [vmem:[%s749 + $0x30] sm:$0xff]
        %v3558 = vld [vmem:[%s749 + $0x38] sm:$0xff]
        %v3559 = vld [vmem:[%s749 + $0x40] sm:$0xff]
        %v3560 = vld [vmem:[%s749 + $0x48] sm:$0xff]
        %v3561 = vld [vmem:[%s749 + $0x50] sm:$0xff]
        %v3562 = vld [vmem:[%s749 + $0x58] sm:$0xff]
        %v3563 = vld [vmem:[%s749 + $0x60] sm:$0xff]
        %v3564 = vld [vmem:[%s749 + $0x68] sm:$0xff]
        %v3565 = vld [vmem:[%s749 + $0x70] sm:$0xff]
        %v3566 = vld [vmem:[%s749 + $0x78] sm:$0xff]
        %v3567 = vld [vmem:[%s749 + $0x80] sm:$0xff]
        %v3568 = vld [vmem:[%s749 + $0x88] sm:$0xff]
        %v3569 = vld [vmem:[%s749 + $0x90] sm:$0xff]
        %v3570 = vld [vmem:[%s749 + $0x98] sm:$0xff]
        %v3571 = vld [vmem:[%s749 + $0xa0] sm:$0xff]
        %v3572 = vld [vmem:[%s749 + $0xa8] sm:$0xff]
        %v3573 = vld [vmem:[%s749 + $0xb0] sm:$0xff]
        %v3574 = vld [vmem:[%s749 + $0xb8] sm:$0xff]
        %v3575 = vld [vmem:[%s749 + $0xc0] sm:$0xff]
        %v3576 = vld [vmem:[%s749 + $0xc8] sm:$0xff]
        %v3577 = vld [vmem:[%s749 + $0xd0] sm:$0xff]
        %v3578 = vld [vmem:[%s749 + $0xd8] sm:$0xff]
        %v3579 = vld [vmem:[%s749 + $0xe0] sm:$0xff]
        %v3580 = vld [vmem:[%s749 + $0xe8] sm:$0xff]
        %v3581 = vld [vmem:[%s749 + $0xf0] sm:$0xff]
        %v3582 = vld [vmem:[%s749 + $0xf8] sm:$0xff]
        %3583 = vmatprep.subr.mxu0 0.0
        %3584 = vmatpush1.msra.mxu0 %v3551
        %3585 = vmatprep.subr.mxu0 0.0
        %3586 = vmatpush1.msra.mxu0 %v3552
        %3587 = vmatprep.subr.mxu0 0.0
        %3588 = vmatpush1.msra.mxu0 %v3553
        %3589 = vmatprep.subr.mxu0 0.0
        %3590 = vmatpush1.msra.mxu0 %v3554
        %3591 = vmatprep.subr.mxu0 0.0
        %3592 = vmatpush1.msra.mxu0 %v3555
        %3593 = vmatprep.subr.mxu0 0.0
        %3594 = vmatpush1.msra.mxu0 %v3556
        %3595 = vmatprep.subr.mxu0 0.0
        %3596 = vmatpush1.msra.mxu0 %v3557
        %3597 = vmatprep.subr.mxu0 0.0
        %3598 = vmatpush1.msra.mxu0 %v3558
        %3599 = vmatprep.subr.mxu0 0.0
        %3600 = vmatpush1.msra.mxu0 %v3559
        %3601 = vmatprep.subr.mxu0 0.0
        %3602 = vmatpush1.msra.mxu0 %v3560
        %3603 = vmatprep.subr.mxu0 0.0
        %3604 = vmatpush1.msra.mxu0 %v3561
        %3605 = vmatprep.subr.mxu0 0.0
        %3606 = vmatpush1.msra.mxu0 %v3562
        %3607 = vmatprep.subr.mxu0 0.0
        %3608 = vmatpush1.msra.mxu0 %v3563
        %3609 = vmatprep.subr.mxu0 0.0
        %3610 = vmatpush1.msra.mxu0 %v3564
        %3611 = vmatprep.subr.mxu0 0.0
        %3612 = vmatpush1.msra.mxu0 %v3565
        %3613 = vmatprep.subr.mxu0 0.0
        %3614 = vmatpush1.msra.mxu0 %v3566
        %3615 = vmatprep.subr.mxu0 0.0
        %3616 = vmatpush1.msra.mxu0 %v3567
        %3617 = vmatprep.subr.mxu0 0.0
        %3618 = vmatpush1.msra.mxu0 %v3568
        %3619 = vmatprep.subr.mxu0 0.0
        %3620 = vmatpush1.msra.mxu0 %v3569
        %3621 = vmatprep.subr.mxu0 0.0
        %3622 = vmatpush1.msra.mxu0 %v3570
        %3623 = vmatprep.subr.mxu0 0.0
        %3624 = vmatpush1.msra.mxu0 %v3571
        %3625 = vmatprep.subr.mxu0 0.0
        %3626 = vmatpush1.msra.mxu0 %v3572
        %3627 = vmatprep.subr.mxu0 0.0
        %3628 = vmatpush1.msra.mxu0 %v3573
        %3629 = vmatprep.subr.mxu0 0.0
        %3630 = vmatpush1.msra.mxu0 %v3574
        %3631 = vmatprep.subr.mxu0 0.0
        %3632 = vmatpush1.msra.mxu0 %v3575
        %3633 = vmatprep.subr.mxu0 0.0
        %3634 = vmatpush1.msra.mxu0 %v3576
        %3635 = vmatprep.subr.mxu0 0.0
        %3636 = vmatpush1.msra.mxu0 %v3577
        %3637 = vmatprep.subr.mxu0 0.0
        %3638 = vmatpush1.msra.mxu0 %v3578
        %3639 = vmatprep.subr.mxu0 0.0
        %3640 = vmatpush1.msra.mxu0 %v3579
        %3641 = vmatprep.subr.mxu0 0.0
        %3642 = vmatpush1.msra.mxu0 %v3580
        %3643 = vmatprep.subr.mxu0 0.0
        %3644 = vmatpush1.msra.mxu0 %v3581
        %3645 = vmatprep.subr.mxu0 0.0
        %3646 = vmatpush1.msra.mxu0 %v3582
        %3647 = vmatprep.mubr.f32.mxu0 %v3550
        %3648 = vmatmul.mubr.f32.gmra.mrb[0].mxu0 %v3549
        %v3649 = vpop.f32.mrb[0].mxu0
        %v3650 = vadd.f32 0.0, %v3649
        %v3651 = vpop.f32.mrb[0].mxu0
        %3652 = vdwg.mxu0
        %v3653 = vadd.f32 %v3401, %v3650
        %v3654 = vld [vmem:[%s752] sm:$0x1]
        %v3656 = vlaneseq
        %v3657 = vshrl.u32 %v3656, 7
        %v3658 = vsub.s32 0, %v3657
        %v3659 = vrot.slane %v3654, %v3658
        %v3661 = vadd.f32 %v3653, %v3659
        %3662 = vst.msk [vmem:[#allocation2] sm:$0xff] %vm763, %v3661
        %p3663 = scmp.eq.s32.totalorder %s39, 1
        // Predicated region
        $region93: #{tpu_custom_call.1} parent=75 // pred_check
          %p3664 = pneg %p3663
        $region94: #{tpu_custom_call.1} parent=75 // pred_check_branch
          %3666 = sbr.rel (%p3664) target = $region96
        $region95: #{tpu_custom_call.1} parent=75 // pred_region
          %3667 = vst.msk [vmem:[%s706] sm:$0xff] %vm763, %v3661
        $region96: #{tpu_custom_call.1} parent=75 // pred_fallthru
          _
        %s3668 = sand.u32 %s418, 1
        %s3669 = scalar_lea.sflag [#allocation5], %s3668
        %s3670 = sand.u32 %s418, 1
        %s3671 = smul.addr %s3670, 8
        %s3672 = scalar_lea.vmem [#allocation9], %s3671
        // Predicated region
        $region97: #{tpu_custom_call.1} parent=75 // pred_check
          %p3673 = pneg %p428
        $region98: #{tpu_custom_call.1} parent=75 // pred_check_branch
          %3675 = sbr.rel (%p3673) target = $region100
        $region99: #{tpu_custom_call.1} parent=75 // pred_region
          %s3677 = ssub.s32 128, 128
          %3678 = vsyncadd %s3669, %s3677
          %s3679 = smul.addr %s38, 128
          %s3680 = scalar_lea.hbm %s14, %s3679
          %s3682 = sshll.u32 %s3672, 4
          %s3683 = int_to_ptr.vmem [resolvable:$true] %s3682
          %3685 = dma.vmem_to_hbm [thread:$0]  %s3683, 128, %s3680, %s3669
        $region100: #{tpu_custom_call.1} parent=75 // pred_fallthru
          _
      $region76: #{tpu_custom_call.1} parent=5 // pred_fallthru
        _
      %p3686 = scmp.le.s32.totalorder 2, %s29
      // Predicated region
      $region101: #{tpu_custom_call.1} parent=5 // pred_check
        %p3687 = pneg %p3686
      $region102: #{tpu_custom_call.1} parent=5 // pred_check_branch
        %3689 = sbr.rel (%p3687) target = $region104
      $region103: #{tpu_custom_call.1} parent=5 // pred_region
        %s3690 = ssub.s32 %s29, 2
        // Predicated region
        $region105: #{tpu_custom_call.1} parent=103 // pred_check
          %p3691 = pneg %p434
        $region106: #{tpu_custom_call.1} parent=103 // pred_check_branch
          %3693 = sbr.rel (%p3691) target = $region108
        $region107: #{tpu_custom_call.1} parent=103 // pred_region
          %s3694 = sand.u32 %s419, 1
          %s3695 = scalar_lea.sflag [#allocation5], %s3694
          %s3696 = sand.u32 %s419, 1
          %s3697 = smul.addr %s3696, 8
          %s3698 = scalar_lea.vmem [#allocation9], %s3697
          %3699 = dma.done %s3695, 128
        $region108: #{tpu_custom_call.1} parent=103 // pred_fallthru
          _
      $region104: #{tpu_custom_call.1} parent=5 // pred_fallthru
        _
    $region6: #{tpu_custom_call.1} parent=1 // loop_footer
      %s33 = sadd.s32 1, %s29
    $region7: #{tpu_custom_call.1} parent=1 // loop_footer_branch
      %28 = sbr.rel target = $region3
    $region8: #{tpu_custom_call.1} parent=1 // loop_exit
      _
    %3700 = vsyncpa [#allocation4], 1
    %s3701 = scalar_lea.sflag [#allocation4], 1
    %3702 = vsyncpa %s3701, 1
    %3703 = vsyncpa [#allocation7], 1
    %s3704 = scalar_lea.sflag [#allocation7], 1
    %3705 = vsyncpa %s3704, 1
    %3706 = vsyncpa [#allocation5], 1
    %s3707 = scalar_lea.sflag [#allocation5], 1
    %3708 = vsyncpa %s3707, 1

</llo_original>
